<compile_context>
chip_gen: v7x
topology: tpu7x:2x2x1
jax: 0.10.0
libtpu: 0.0.40
codegen_flags: <defaults>
</compile_context>

<pallas_src>
import functools

import jax
import jax.numpy as jnp
from jax.experimental import pallas as pl
from jax.experimental.pallas import tpu as pltpu


def policy_kernel(x_ref, len_ref, w_ih_ref, w_hh_ref, b_ref,
                  w1_ref, b1_ref, w2_ref, b2_ref, out_ref, gx_ref):
    # x_ref:   (B_TILE, T, D) f32  batch tile of flattened frames
    # len_ref: (B_TILE, 1)   int32 valid sequence lengths
    # w_ih: (D, 4H) bf16   w_hh: (H, 4H) bf16   b: (1, 4H) f32  (gate order i,f,g,o)
    # w1: (H, HID) bf16  b1: (1, HID) f32   w2: (HID, A_PAD) bf16  b2: (1, A_PAD) f32
    # gx_ref: (T, B_TILE, 4H) f32 scratch -- time-major hoisted input projection
    Bt, T, D = x_ref.shape
    H = w_hh_ref.shape[0]
    lens = len_ref[...]                                    # (Bt, 1) int32

    # ---- Hoisted input projection: one bf16 MXU matmul per batch tile. ----
    # Rearrange the x tile to time-major first (static slices + concat, done
    # once, on f32 x which is 4x smaller than gx), so the matmul result is
    # already time-major and every per-step gate slice below is a contiguous
    # sublane block (no stride-T sublane gather on the serial path).
    xv = x_ref[...]                                        # (Bt, T, D) f32
    x_tm = jnp.concatenate([xv[:, t, :] for t in range(T)], axis=0)   # (T*Bt, D)
    gx = jnp.dot(x_tm.astype(jnp.bfloat16), w_ih_ref[...],
                 preferred_element_type=jnp.float32) + b_ref[...]     # (T*Bt, 4H) f32
    gx_ref[...] = gx.reshape(T, Bt, 4 * H)                 # free split: Bt == sublane tile

    # ---- Precompute per-step activity masks (packed-sequence freeze). ----
    masks = [jnp.broadcast_to(t < lens, (Bt, H)) for t in range(T)]

    w_hh = w_hh_ref[...]                                   # (H, 4H) bf16, load once
    h = jnp.zeros((Bt, H), jnp.float32)
    c = jnp.zeros((Bt, H), jnp.float32)

    # ---- Recurrence: T is small & static -> fully unrolled; only the
    #      recurrent h @ W_hh dot + f32 gate math stay on the serial chain. ----
    # TODO(synk): if T grows (>=32), switch to lax.fori_loop(..., unroll=2-4)
    #             to bound vreg live ranges.
    # TODO(synk): hold W_hh in MXU weight registers across the steps
    #             (pltpu.matmul_push_rhs / matmul_acc_lhs / matmul_pop) if the
    #             Mosaic dump shows the (H,4H) RHS being re-pushed every step.
    for t in range(T):
        gates = gx_ref[t] + jnp.dot(h.astype(jnp.bfloat16), w_hh,
                                    preferred_element_type=jnp.float32)   # (Bt, 4H)
        # H is a multiple of 128, so these gate slices stay lane-tile aligned.
        i_g = jax.nn.sigmoid(gates[:, 0 * H:1 * H])
        f_g = jax.nn.sigmoid(gates[:, 1 * H:2 * H])
        g_g = jnp.tanh(gates[:, 2 * H:3 * H])
        o_g = jax.nn.sigmoid(gates[:, 3 * H:4 * H])
        c_new = f_g * c + i_g * g_g
        h_new = o_g * jnp.tanh(c_new)
        h = jnp.where(masks[t], h_new, h)
        c = jnp.where(masks[t], c_new, c)

    # ---- fc_net: Linear -> ReLU -> Linear (bf16 operands, f32 accumulate) ----
    z = jnp.maximum(
        jnp.dot(h.astype(jnp.bfloat16), w1_ref[...],
                preferred_element_type=jnp.float32) + b1_ref[...], 0.0)
    out_ref[...] = (jnp.dot(z.astype(jnp.bfloat16), w2_ref[...],
                            preferred_element_type=jnp.float32) + b2_ref[...])


def make_params(key, input_dim, action_dim, hidden_dim=128, lstm_hidden_dim=256,
                a_pad=128):
    """Deterministic f32 init matching PyTorch default uniform(-1/sqrt(fan), +...)."""
    ks = jax.random.split(key, 10)
    k_lstm = 1.0 / jnp.sqrt(lstm_hidden_dim)
    u = lambda k, shape, b: jax.random.uniform(k, shape, jnp.float32, -b, b)

    w_ih = u(ks[0], (input_dim, 4 * lstm_hidden_dim), k_lstm)
    w_hh = u(ks[1], (lstm_hidden_dim, 4 * lstm_hidden_dim), k_lstm)
    b_lstm = (u(ks[2], (1, 4 * lstm_hidden_dim), k_lstm)
              + u(ks[3], (1, 4 * lstm_hidden_dim), k_lstm))   # b_ih + b_hh

    k1 = 1.0 / jnp.sqrt(lstm_hidden_dim)
    w1 = u(ks[4], (lstm_hidden_dim, hidden_dim), k1)
    b1 = u(ks[5], (1, hidden_dim), k1)

    k2 = 1.0 / jnp.sqrt(hidden_dim)
    w2 = u(ks[6], (hidden_dim, action_dim), k2)
    b2 = u(ks[7], (1, action_dim), k2)
    # Pad the action dimension to a lane-friendly width for the TPU store path.
    w2p = jnp.zeros((hidden_dim, a_pad), jnp.float32).at[:, :action_dim].set(w2)
    b2p = jnp.zeros((1, a_pad), jnp.float32).at[:, :action_dim].set(b2)

    return dict(w_ih=w_ih, w_hh=w_hh, b_lstm=b_lstm,
                w1=w1, b1=b1, w2p=w2p, b2p=b2p,
                action_dim=action_dim, a_pad=a_pad)


@functools.partial(jax.jit, static_argnames=("action_dim", "b_tile"))
def policy_forward(x, seq_lengths, w_ih, w_hh, b_lstm, w1, b1, w2p, b2p,
                   *, action_dim, b_tile=8):
    B, T, C, Hh, W = x.shape
    D = C * Hh * W
    H = w_hh.shape[0]
    HID = w1.shape[1]
    A_PAD = w2p.shape[1]

    # Pure batch-major reshape (same flatten as torch .view); x stays f32 and
    # is cast to bf16 inside the kernel (no standalone convert round trip).
    x_flat = x.reshape(B, T, D)
    lens = seq_lengths.astype(jnp.int32)

    # Pad the batch to a multiple of the sublane-friendly tile.  Padding rows
    # get length 0 (h stays 0) and are sliced off below.
    Bp = ((B + b_tile - 1) // b_tile) * b_tile
    if Bp != B:
        x_flat = jnp.pad(x_flat, ((0, Bp - B), (0, 0), (0, 0)))
        lens = jnp.pad(lens, (0, Bp - B))
    lens = lens.reshape(Bp, 1)
    n_tiles = Bp // b_tile

    # VMEM budget from the actual buffer sizes (double-buffered tiles, resident
    # weights, time-major gx scratch) plus compiler-internal margin.
    f32b, bf16b = 4, 2
    vmem_bytes = (
        2 * (b_tile * T * D * f32b)                   # x tile
        + 2 * (b_tile * 128 * f32b)                   # lens tile (lane-padded)
        + 2 * (D * 4 * H * bf16b)                     # W_ih
        + 2 * (H * 4 * H * bf16b)                     # W_hh
        + 2 * (8 * 4 * H * f32b)                      # b_lstm (sublane-padded)
        + 2 * (H * HID * bf16b + 8 * HID * f32b)      # W1, b1
        + 2 * (HID * A_PAD * bf16b + 8 * A_PAD * f32b)  # W2, b2
        + 2 * (b_tile * A_PAD * f32b)                 # out tile
        + T * b_tile * 4 * H * f32b                   # gx scratch
        + 4 * 1024 * 1024                             # margin / internal scratch
    )

    grid_spec = pltpu.PrefetchScalarGridSpec(
        num_scalar_prefetch=0,
        grid=(n_tiles,),
        in_specs=[
            pl.BlockSpec((b_tile, T, D), lambda i: (i, 0, 0)),      # x tile
            pl.BlockSpec((b_tile, 1), lambda i: (i, 0)),            # lens tile
            pl.BlockSpec((D, 4 * H), lambda i: (0, 0)),             # W_ih (resident)
            pl.BlockSpec((H, 4 * H), lambda i: (0, 0)),             # W_hh (resident)
            pl.BlockSpec((1, 4 * H), lambda i: (0, 0)),             # b_lstm
            pl.BlockSpec((H, HID), lambda i: (0, 0)),               # W1
            pl.BlockSpec((1, HID), lambda i: (0, 0)),               # b1
            pl.BlockSpec((HID, A_PAD), lambda i: (0, 0)),           # W2 (padded)
            pl.BlockSpec((1, A_PAD), lambda i: (0, 0)),             # b2 (padded)
        ],
        out_specs=pl.BlockSpec((b_tile, A_PAD), lambda i: (i, 0)),
        scratch_shapes=[pltpu.VMEM((T, b_tile, 4 * H), jnp.float32)],
    )

    out_pad = pl.pallas_call(
        policy_kernel,
        out_shape=jax.ShapeDtypeStruct((Bp, A_PAD), jnp.float32),
        grid_spec=grid_spec,
        compiler_params=pltpu.CompilerParams(
            dimension_semantics=("parallel",),        # v7x: 2 TCs split the batch tiles
            vmem_limit_bytes=int(vmem_bytes)),
    )(x_flat, lens, w_ih, w_hh, b_lstm, w1, b1, w2p, b2p)
    return out_pad[:B, :action_dim]


def policy_forward_ref(x, seq_lengths, p):
    """Pure-JAX f32 reference with identical masking semantics (for validation)."""
    B, T, C, Hh, W = x.shape
    D = C * Hh * W
    xf = x.reshape(B, T, D).astype(jnp.float32)
    H = p["w_hh"].shape[0]
    h = jnp.zeros((B, H), jnp.float32)
    c = jnp.zeros((B, H), jnp.float32)
    lens = seq_lengths.reshape(B, 1)
    for t in range(T):
        gates = xf[:, t, :] @ p["w_ih"] + h @ p["w_hh"] + p["b_lstm"]
        i_g = jax.nn.sigmoid(gates[:, 0 * H:1 * H])
        f_g = jax.nn.sigmoid(gates[:, 1 * H:2 * H])
        g_g = jnp.tanh(gates[:, 2 * H:3 * H])
        o_g = jax.nn.sigmoid(gates[:, 3 * H:4 * H])
        c_new = f_g * c + i_g * g_g
        h_new = o_g * jnp.tanh(c_new)
        act = t < lens
        h = jnp.where(act, h_new, h)
        c = jnp.where(act, c_new, c)
    z = jnp.maximum(h @ p["w1"] + p["b1"], 0.0)
    return (z @ p["w2p"] + p["b2p"])[:, :p["action_dim"]]


if __name__ == "__main__":
    # Small shapes: batch=2, seq=8, channels=4, spatial=8x8 -> input_dim=256.
    B, T, C, Hh, W = 2, 8, 4, 8, 8
    ACTION_DIM = 7          # minigrid action space
    HIDDEN_DIM = 128        # module default
    LSTM_HIDDEN = 256       # module default

    key = jax.random.PRNGKey(0)
    k_x, k_p = jax.random.split(key)
    x = jax.random.normal(k_x, (B, T, C, Hh, W), jnp.float32)
    seq_lengths = jnp.array([5, 8], jnp.int32)

    params = make_params(k_p, input_dim=C * Hh * W, action_dim=ACTION_DIM,
                         hidden_dim=HIDDEN_DIM, lstm_hidden_dim=LSTM_HIDDEN)

    # One-time bf16 cast of the matmul weights (MXU path); biases stay f32 and
    # x stays f32 (cast to bf16 inside the kernel).
    bf = jnp.bfloat16
    logits = policy_forward(
        x, seq_lengths,
        params["w_ih"].astype(bf), params["w_hh"].astype(bf), params["b_lstm"],
        params["w1"].astype(bf), params["b1"],
        params["w2p"].astype(bf), params["b2p"],
        action_dim=params["action_dim"])
    logits = jax.block_until_ready(logits)

    ref = jax.block_until_ready(policy_forward_ref(x, seq_lengths, params))
    assert logits.shape == (B, ACTION_DIM)
    # bf16 matmul operands (f32 accumulation, f32 state) vs. pure-f32 reference.
    assert jnp.allclose(logits, ref, atol=5e-2, rtol=5e-2), "mismatch vs reference"

    print("KERNEL_OK")
</pallas_src>

<mosaic_0001>
module attributes {stable_mosaic.version = 11 : i64} {
  func.func @policy_kernel(%arg0: i32, %arg1: memref<8x8x256xf32, #tpu.memory_space<vmem>>, %arg2: memref<8x1xi32, #tpu.memory_space<vmem>>, %arg3: memref<256x1024xbf16, #tpu.memory_space<vmem>>, %arg4: memref<256x1024xbf16, #tpu.memory_space<vmem>>, %arg5: memref<1x1024xf32, #tpu.memory_space<vmem>>, %arg6: memref<256x128xbf16, #tpu.memory_space<vmem>>, %arg7: memref<1x128xf32, #tpu.memory_space<vmem>>, %arg8: memref<128x128xbf16, #tpu.memory_space<vmem>>, %arg9: memref<1x128xf32, #tpu.memory_space<vmem>>, %arg10: memref<8x128xf32, #tpu.memory_space<vmem>>, %arg11: memref<8x8x1024xf32, #tpu.memory_space<vmem>>) attributes {dimension_semantics = [#tpu.dimension_semantics<parallel>], iteration_bounds = array<i64: 1>, scalar_prefetch = 0 : i64, scratch_operands = 1 : i64, tpu.core_type = #tpu.core_type<tc>, window_params = [{transform_indices = @transform_0, window_bounds = array<i64: 8, 8, 256>}, {transform_indices = @transform_1, window_bounds = array<i64: 8, 1>}, {pipeline_mode = #tpu.pipeline_mode<synchronous>, transform_indices = @transform_2, window_bounds = array<i64: 256, 1024>}, {pipeline_mode = #tpu.pipeline_mode<synchronous>, transform_indices = @transform_3, window_bounds = array<i64: 256, 1024>}, {pipeline_mode = #tpu.pipeline_mode<synchronous>, transform_indices = @transform_4, window_bounds = array<i64: 1, 1024>}, {pipeline_mode = #tpu.pipeline_mode<synchronous>, transform_indices = @transform_5, window_bounds = array<i64: 256, 128>}, {pipeline_mode = #tpu.pipeline_mode<synchronous>, transform_indices = @transform_6, window_bounds = array<i64: 1, 128>}, {pipeline_mode = #tpu.pipeline_mode<synchronous>, transform_indices = @transform_7, window_bounds = array<i64: 128, 128>}, {pipeline_mode = #tpu.pipeline_mode<synchronous>, transform_indices = @transform_8, window_bounds = array<i64: 1, 128>}, {transform_indices = @transform_9, window_bounds = array<i64: 8, 128>}]} {
    %c0 = arith.constant 0 : index
    %c0_0 = arith.constant 0 : index
    %0 = vector.load %arg2[%c0, %c0_0] : memref<8x1xi32, #tpu.memory_space<vmem>>, vector<8x1xi32>
    %c0_1 = arith.constant 0 : index
    %c0_2 = arith.constant 0 : index
    %c0_3 = arith.constant 0 : index
    %1 = vector.load %arg1[%c0_1, %c0_2, %c0_3] : memref<8x8x256xf32, #tpu.memory_space<vmem>>, vector<8x8x256xf32>
    %2 = vector.extract_strided_slice %1 {offsets = [0, 0, 0], sizes = [8, 1, 256], strides = [1, 1, 1]} : vector<8x8x256xf32> to vector<8x1x256xf32>
    %3 = vector.shape_cast %2 : vector<8x1x256xf32> to vector<8x256xf32>
    %4 = vector.extract_strided_slice %1 {offsets = [0, 1, 0], sizes = [8, 1, 256], strides = [1, 1, 1]} : vector<8x8x256xf32> to vector<8x1x256xf32>
    %5 = vector.shape_cast %4 : vector<8x1x256xf32> to vector<8x256xf32>
    %6 = vector.extract_strided_slice %1 {offsets = [0, 2, 0], sizes = [8, 1, 256], strides = [1, 1, 1]} : vector<8x8x256xf32> to vector<8x1x256xf32>
    %7 = vector.shape_cast %6 : vector<8x1x256xf32> to vector<8x256xf32>
    %8 = vector.extract_strided_slice %1 {offsets = [0, 3, 0], sizes = [8, 1, 256], strides = [1, 1, 1]} : vector<8x8x256xf32> to vector<8x1x256xf32>
    %9 = vector.shape_cast %8 : vector<8x1x256xf32> to vector<8x256xf32>
    %10 = vector.extract_strided_slice %1 {offsets = [0, 4, 0], sizes = [8, 1, 256], strides = [1, 1, 1]} : vector<8x8x256xf32> to vector<8x1x256xf32>
    %11 = vector.shape_cast %10 : vector<8x1x256xf32> to vector<8x256xf32>
    %12 = vector.extract_strided_slice %1 {offsets = [0, 5, 0], sizes = [8, 1, 256], strides = [1, 1, 1]} : vector<8x8x256xf32> to vector<8x1x256xf32>
    %13 = vector.shape_cast %12 : vector<8x1x256xf32> to vector<8x256xf32>
    %14 = vector.extract_strided_slice %1 {offsets = [0, 6, 0], sizes = [8, 1, 256], strides = [1, 1, 1]} : vector<8x8x256xf32> to vector<8x1x256xf32>
    %15 = vector.shape_cast %14 : vector<8x1x256xf32> to vector<8x256xf32>
    %16 = vector.extract_strided_slice %1 {offsets = [0, 7, 0], sizes = [8, 1, 256], strides = [1, 1, 1]} : vector<8x8x256xf32> to vector<8x1x256xf32>
    %17 = vector.shape_cast %16 : vector<8x1x256xf32> to vector<8x256xf32>
    %18 = tpu.concatenate %3, %5, %7, %9, %11, %13, %15, %17 in 0 : vector<8x256xf32>, vector<8x256xf32>, vector<8x256xf32>, vector<8x256xf32>, vector<8x256xf32>, vector<8x256xf32>, vector<8x256xf32>, vector<8x256xf32> -> vector<64x256xf32>
    %19 = arith.truncf %18 : vector<64x256xf32> to vector<64x256xbf16>
    %c0_4 = arith.constant 0 : index
    %c0_5 = arith.constant 0 : index
    %20 = vector.load %arg3[%c0_4, %c0_5] : memref<256x1024xbf16, #tpu.memory_space<vmem>>, vector<256x1024xbf16>
    %cst = arith.constant dense<0.000000e+00> : vector<64x1024xf32>
    %21 = tpu.matmul %19, %20, %cst {dimension_numbers = #tpu.dot_dimension_numbers<[1], [0], [0], [1], [0, 0, 1, 1], [], []>} : vector<64x256xbf16>, vector<256x1024xbf16>, vector<64x1024xf32> -> vector<64x1024xf32>
    %c0_6 = arith.constant 0 : index
    %c0_7 = arith.constant 0 : index
    %22 = vector.load %arg5[%c0_6, %c0_7] : memref<1x1024xf32, #tpu.memory_space<vmem>>, vector<1x1024xf32>
    %23 = vector.broadcast %22 : vector<1x1024xf32> to vector<64x1024xf32>
    %24 = arith.addf %21, %23 : vector<64x1024xf32>
    %25 = vector.shape_cast %24 : vector<64x1024xf32> to vector<8x8x1024xf32>
    %c0_8 = arith.constant 0 : index
    %c0_9 = arith.constant 0 : index
    %c0_10 = arith.constant 0 : index
    %26 = vector.load %arg11[%c0_8, %c0_9, %c0_10] : memref<8x8x1024xf32, #tpu.memory_space<vmem>>, vector<8x8x1024xf32>
    tpu.vector_store %arg11[%c0_8, %c0_9, %c0_10], %25 {strides = array<i32>} : memref<8x8x1024xf32, #tpu.memory_space<vmem>>, vector<8x8x1024xf32>,
    %c0_i32 = arith.constant 0 : i32
    %27 = vector.broadcast %c0_i32 : i32 to vector<8x1xi32>
    %28 = arith.cmpi sgt, %0, %27 : vector<8x1xi32>
    %29 = vector.shape_cast %28 : vector<8x1xi1> to vector<8x1xi1>
    %30 = vector.broadcast %29 : vector<8x1xi1> to vector<8x256xi1>
    %c1_i32 = arith.constant 1 : i32
    %31 = vector.broadcast %c1_i32 : i32 to vector<8x1xi32>
    %32 = arith.cmpi sgt, %0, %31 : vector<8x1xi32>
    %33 = vector.shape_cast %32 : vector<8x1xi1> to vector<8x1xi1>
    %34 = vector.broadcast %33 : vector<8x1xi1> to vector<8x256xi1>
    %c2_i32 = arith.constant 2 : i32
    %35 = vector.broadcast %c2_i32 : i32 to vector<8x1xi32>
    %36 = arith.cmpi sgt, %0, %35 : vector<8x1xi32>
    %37 = vector.shape_cast %36 : vector<8x1xi1> to vector<8x1xi1>
    %38 = vector.broadcast %37 : vector<8x1xi1> to vector<8x256xi1>
    %c3_i32 = arith.constant 3 : i32
    %39 = vector.broadcast %c3_i32 : i32 to vector<8x1xi32>
    %40 = arith.cmpi sgt, %0, %39 : vector<8x1xi32>
    %41 = vector.shape_cast %40 : vector<8x1xi1> to vector<8x1xi1>
    %42 = vector.broadcast %41 : vector<8x1xi1> to vector<8x256xi1>
    %c4_i32 = arith.constant 4 : i32
    %43 = vector.broadcast %c4_i32 : i32 to vector<8x1xi32>
    %44 = arith.cmpi sgt, %0, %43 : vector<8x1xi32>
    %45 = vector.shape_cast %44 : vector<8x1xi1> to vector<8x1xi1>
    %46 = vector.broadcast %45 : vector<8x1xi1> to vector<8x256xi1>
    %c5_i32 = arith.constant 5 : i32
    %47 = vector.broadcast %c5_i32 : i32 to vector<8x1xi32>
    %48 = arith.cmpi sgt, %0, %47 : vector<8x1xi32>
    %49 = vector.shape_cast %48 : vector<8x1xi1> to vector<8x1xi1>
    %50 = vector.broadcast %49 : vector<8x1xi1> to vector<8x256xi1>
    %c6_i32 = arith.constant 6 : i32
    %51 = vector.broadcast %c6_i32 : i32 to vector<8x1xi32>
    %52 = arith.cmpi sgt, %0, %51 : vector<8x1xi32>
    %53 = vector.shape_cast %52 : vector<8x1xi1> to vector<8x1xi1>
    %54 = vector.broadcast %53 : vector<8x1xi1> to vector<8x256xi1>
    %c7_i32 = arith.constant 7 : i32
    %55 = vector.broadcast %c7_i32 : i32 to vector<8x1xi32>
    %56 = arith.cmpi sgt, %0, %55 : vector<8x1xi32>
    %57 = vector.shape_cast %56 : vector<8x1xi1> to vector<8x1xi1>
    %58 = vector.broadcast %57 : vector<8x1xi1> to vector<8x256xi1>
    %c0_11 = arith.constant 0 : index
    %c0_12 = arith.constant 0 : index
    %59 = vector.load %arg4[%c0_11, %c0_12] : memref<256x1024xbf16, #tpu.memory_space<vmem>>, vector<256x1024xbf16>
    %cst_13 = arith.constant 0.000000e+00 : f32
    %60 = vector.broadcast %cst_13 : f32 to vector<8x256xf32>
    %cst_14 = arith.constant 0.000000e+00 : f32
    %61 = vector.broadcast %cst_14 : f32 to vector<8x256xf32>
    %c0_15 = arith.constant 0 : index
    %c0_16 = arith.constant 0 : index
    %c0_17 = arith.constant 0 : index
    %62 = vector.load %arg11[%c0_15, %c0_16, %c0_17] : memref<8x8x1024xf32, #tpu.memory_space<vmem>>, vector<1x8x1024xf32>
    %63 = vector.shape_cast %62 : vector<1x8x1024xf32> to vector<8x1024xf32>
    %64 = arith.truncf %60 : vector<8x256xf32> to vector<8x256xbf16>
    %cst_18 = arith.constant dense<0.000000e+00> : vector<8x1024xf32>
    %65 = tpu.matmul %64, %59, %cst_18 {dimension_numbers = #tpu.dot_dimension_numbers<[1], [0], [0], [1], [0, 0, 1, 1], [], []>} : vector<8x256xbf16>, vector<256x1024xbf16>, vector<8x1024xf32> -> vector<8x1024xf32>
    %66 = arith.addf %63, %65 : vector<8x1024xf32>
    %67 = vector.extract_strided_slice %66 {offsets = [0, 0], sizes = [8, 256], strides = [1, 1]} : vector<8x1024xf32> to vector<8x256xf32>
    %68 = arith.negf %67 : vector<8x256xf32>
    %69 = math.exp %68 : vector<8x256xf32>
    %cst_19 = arith.constant 1.000000e+00 : f32
    %70 = vector.broadcast %cst_19 : f32 to vector<8x256xf32>
    %71 = arith.addf %70, %69 : vector<8x256xf32>
    %72 = arith.divf %70, %71 : vector<8x256xf32>
    %73 = vector.extract_strided_slice %66 {offsets = [0, 256], sizes = [8, 256], strides = [1, 1]} : vector<8x1024xf32> to vector<8x256xf32>
    %74 = arith.negf %73 : vector<8x256xf32>
    %75 = math.exp %74 : vector<8x256xf32>
    %cst_20 = arith.constant 1.000000e+00 : f32
    %76 = vector.broadcast %cst_20 : f32 to vector<8x256xf32>
    %77 = arith.addf %76, %75 : vector<8x256xf32>
    %78 = arith.divf %76, %77 : vector<8x256xf32>
    %79 = vector.extract_strided_slice %66 {offsets = [0, 512], sizes = [8, 256], strides = [1, 1]} : vector<8x1024xf32> to vector<8x256xf32>
    %80 = math.tanh %79 : vector<8x256xf32>
    %81 = vector.extract_strided_slice %66 {offsets = [0, 768], sizes = [8, 256], strides = [1, 1]} : vector<8x1024xf32> to vector<8x256xf32>
    %82 = arith.negf %81 : vector<8x256xf32>
    %83 = math.exp %82 : vector<8x256xf32>
    %cst_21 = arith.constant 1.000000e+00 : f32
    %84 = vector.broadcast %cst_21 : f32 to vector<8x256xf32>
    %85 = arith.addf %84, %83 : vector<8x256xf32>
    %86 = arith.divf %84, %85 : vector<8x256xf32>
    %87 = arith.mulf %78, %61 : vector<8x256xf32>
    %88 = arith.mulf %72, %80 : vector<8x256xf32>
    %89 = arith.addf %87, %88 : vector<8x256xf32>
    %90 = math.tanh %89 : vector<8x256xf32>
    %91 = arith.mulf %86, %90 : vector<8x256xf32>
    %92 = arith.select %30, %91, %60 : vector<8x256xi1>, vector<8x256xf32>
    %93 = arith.select %30, %89, %61 : vector<8x256xi1>, vector<8x256xf32>
    %c1 = arith.constant 1 : index
    %c0_22 = arith.constant 0 : index
    %c0_23 = arith.constant 0 : index
    %94 = vector.load %arg11[%c1, %c0_22, %c0_23] : memref<8x8x1024xf32, #tpu.memory_space<vmem>>, vector<1x8x1024xf32>
    %95 = vector.shape_cast %94 : vector<1x8x1024xf32> to vector<8x1024xf32>
    %96 = arith.truncf %92 : vector<8x256xf32> to vector<8x256xbf16>
    %cst_24 = arith.constant dense<0.000000e+00> : vector<8x1024xf32>
    %97 = tpu.matmul %96, %59, %cst_24 {dimension_numbers = #tpu.dot_dimension_numbers<[1], [0], [0], [1], [0, 0, 1, 1], [], []>} : vector<8x256xbf16>, vector<256x1024xbf16>, vector<8x1024xf32> -> vector<8x1024xf32>
    %98 = arith.addf %95, %97 : vector<8x1024xf32>
    %99 = vector.extract_strided_slice %98 {offsets = [0, 0], sizes = [8, 256], strides = [1, 1]} : vector<8x1024xf32> to vector<8x256xf32>
    %100 = arith.negf %99 : vector<8x256xf32>
    %101 = math.exp %100 : vector<8x256xf32>
    %cst_25 = arith.constant 1.000000e+00 : f32
    %102 = vector.broadcast %cst_25 : f32 to vector<8x256xf32>
    %103 = arith.addf %102, %101 : vector<8x256xf32>
    %104 = arith.divf %102, %103 : vector<8x256xf32>
    %105 = vector.extract_strided_slice %98 {offsets = [0, 256], sizes = [8, 256], strides = [1, 1]} : vector<8x1024xf32> to vector<8x256xf32>
    %106 = arith.negf %105 : vector<8x256xf32>
    %107 = math.exp %106 : vector<8x256xf32>
    %cst_26 = arith.constant 1.000000e+00 : f32
    %108 = vector.broadcast %cst_26 : f32 to vector<8x256xf32>
    %109 = arith.addf %108, %107 : vector<8x256xf32>
    %110 = arith.divf %108, %109 : vector<8x256xf32>
    %111 = vector.extract_strided_slice %98 {offsets = [0, 512], sizes = [8, 256], strides = [1, 1]} : vector<8x1024xf32> to vector<8x256xf32>
    %112 = math.tanh %111 : vector<8x256xf32>
    %113 = vector.extract_strided_slice %98 {offsets = [0, 768], sizes = [8, 256], strides = [1, 1]} : vector<8x1024xf32> to vector<8x256xf32>
    %114 = arith.negf %113 : vector<8x256xf32>
    %115 = math.exp %114 : vector<8x256xf32>
    %cst_27 = arith.constant 1.000000e+00 : f32
    %116 = vector.broadcast %cst_27 : f32 to vector<8x256xf32>
    %117 = arith.addf %116, %115 : vector<8x256xf32>
    %118 = arith.divf %116, %117 : vector<8x256xf32>
    %119 = arith.mulf %110, %93 : vector<8x256xf32>
    %120 = arith.mulf %104, %112 : vector<8x256xf32>
    %121 = arith.addf %119, %120 : vector<8x256xf32>
    %122 = math.tanh %121 : vector<8x256xf32>
    %123 = arith.mulf %118, %122 : vector<8x256xf32>
    %124 = arith.select %34, %123, %92 : vector<8x256xi1>, vector<8x256xf32>
    %125 = arith.select %34, %121, %93 : vector<8x256xi1>, vector<8x256xf32>
    %c2 = arith.constant 2 : index
    %c0_28 = arith.constant 0 : index
    %c0_29 = arith.constant 0 : index
    %126 = vector.load %arg11[%c2, %c0_28, %c0_29] : memref<8x8x1024xf32, #tpu.memory_space<vmem>>, vector<1x8x1024xf32>
    %127 = vector.shape_cast %126 : vector<1x8x1024xf32> to vector<8x1024xf32>
    %128 = arith.truncf %124 : vector<8x256xf32> to vector<8x256xbf16>
    %cst_30 = arith.constant dense<0.000000e+00> : vector<8x1024xf32>
    %129 = tpu.matmul %128, %59, %cst_30 {dimension_numbers = #tpu.dot_dimension_numbers<[1], [0], [0], [1], [0, 0, 1, 1], [], []>} : vector<8x256xbf16>, vector<256x1024xbf16>, vector<8x1024xf32> -> vector<8x1024xf32>
    %130 = arith.addf %127, %129 : vector<8x1024xf32>
    %131 = vector.extract_strided_slice %130 {offsets = [0, 0], sizes = [8, 256], strides = [1, 1]} : vector<8x1024xf32> to vector<8x256xf32>
    %132 = arith.negf %131 : vector<8x256xf32>
    %133 = math.exp %132 : vector<8x256xf32>
    %cst_31 = arith.constant 1.000000e+00 : f32
    %134 = vector.broadcast %cst_31 : f32 to vector<8x256xf32>
    %135 = arith.addf %134, %133 : vector<8x256xf32>
    %136 = arith.divf %134, %135 : vector<8x256xf32>
    %137 = vector.extract_strided_slice %130 {offsets = [0, 256], sizes = [8, 256], strides = [1, 1]} : vector<8x1024xf32> to vector<8x256xf32>
    %138 = arith.negf %137 : vector<8x256xf32>
    %139 = math.exp %138 : vector<8x256xf32>
    %cst_32 = arith.constant 1.000000e+00 : f32
    %140 = vector.broadcast %cst_32 : f32 to vector<8x256xf32>
    %141 = arith.addf %140, %139 : vector<8x256xf32>
    %142 = arith.divf %140, %141 : vector<8x256xf32>
    %143 = vector.extract_strided_slice %130 {offsets = [0, 512], sizes = [8, 256], strides = [1, 1]} : vector<8x1024xf32> to vector<8x256xf32>
    %144 = math.tanh %143 : vector<8x256xf32>
    %145 = vector.extract_strided_slice %130 {offsets = [0, 768], sizes = [8, 256], strides = [1, 1]} : vector<8x1024xf32> to vector<8x256xf32>
    %146 = arith.negf %145 : vector<8x256xf32>
    %147 = math.exp %146 : vector<8x256xf32>
    %cst_33 = arith.constant 1.000000e+00 : f32
    %148 = vector.broadcast %cst_33 : f32 to vector<8x256xf32>
    %149 = arith.addf %148, %147 : vector<8x256xf32>
    %150 = arith.divf %148, %149 : vector<8x256xf32>
    %151 = arith.mulf %142, %125 : vector<8x256xf32>
    %152 = arith.mulf %136, %144 : vector<8x256xf32>
    %153 = arith.addf %151, %152 : vector<8x256xf32>
    %154 = math.tanh %153 : vector<8x256xf32>
    %155 = arith.mulf %150, %154 : vector<8x256xf32>
    %156 = arith.select %38, %155, %124 : vector<8x256xi1>, vector<8x256xf32>
    %157 = arith.select %38, %153, %125 : vector<8x256xi1>, vector<8x256xf32>
    %c3 = arith.constant 3 : index
    %c0_34 = arith.constant 0 : index
    %c0_35 = arith.constant 0 : index
    %158 = vector.load %arg11[%c3, %c0_34, %c0_35] : memref<8x8x1024xf32, #tpu.memory_space<vmem>>, vector<1x8x1024xf32>
    %159 = vector.shape_cast %158 : vector<1x8x1024xf32> to vector<8x1024xf32>
    %160 = arith.truncf %156 : vector<8x256xf32> to vector<8x256xbf16>
    %cst_36 = arith.constant dense<0.000000e+00> : vector<8x1024xf32>
    %161 = tpu.matmul %160, %59, %cst_36 {dimension_numbers = #tpu.dot_dimension_numbers<[1], [0], [0], [1], [0, 0, 1, 1], [], []>} : vector<8x256xbf16>, vector<256x1024xbf16>, vector<8x1024xf32> -> vector<8x1024xf32>
    %162 = arith.addf %159, %161 : vector<8x1024xf32>
    %163 = vector.extract_strided_slice %162 {offsets = [0, 0], sizes = [8, 256], strides = [1, 1]} : vector<8x1024xf32> to vector<8x256xf32>
    %164 = arith.negf %163 : vector<8x256xf32>
    %165 = math.exp %164 : vector<8x256xf32>
    %cst_37 = arith.constant 1.000000e+00 : f32
    %166 = vector.broadcast %cst_37 : f32 to vector<8x256xf32>
    %167 = arith.addf %166, %165 : vector<8x256xf32>
    %168 = arith.divf %166, %167 : vector<8x256xf32>
    %169 = vector.extract_strided_slice %162 {offsets = [0, 256], sizes = [8, 256], strides = [1, 1]} : vector<8x1024xf32> to vector<8x256xf32>
    %170 = arith.negf %169 : vector<8x256xf32>
    %171 = math.exp %170 : vector<8x256xf32>
    %cst_38 = arith.constant 1.000000e+00 : f32
    %172 = vector.broadcast %cst_38 : f32 to vector<8x256xf32>
    %173 = arith.addf %172, %171 : vector<8x256xf32>
    %174 = arith.divf %172, %173 : vector<8x256xf32>
    %175 = vector.extract_strided_slice %162 {offsets = [0, 512], sizes = [8, 256], strides = [1, 1]} : vector<8x1024xf32> to vector<8x256xf32>
    %176 = math.tanh %175 : vector<8x256xf32>
    %177 = vector.extract_strided_slice %162 {offsets = [0, 768], sizes = [8, 256], strides = [1, 1]} : vector<8x1024xf32> to vector<8x256xf32>
    %178 = arith.negf %177 : vector<8x256xf32>
    %179 = math.exp %178 : vector<8x256xf32>
    %cst_39 = arith.constant 1.000000e+00 : f32
    %180 = vector.broadcast %cst_39 : f32 to vector<8x256xf32>
    %181 = arith.addf %180, %179 : vector<8x256xf32>
    %182 = arith.divf %180, %181 : vector<8x256xf32>
    %183 = arith.mulf %174, %157 : vector<8x256xf32>
    %184 = arith.mulf %168, %176 : vector<8x256xf32>
    %185 = arith.addf %183, %184 : vector<8x256xf32>
    %186 = math.tanh %185 : vector<8x256xf32>
    %187 = arith.mulf %182, %186 : vector<8x256xf32>
    %188 = arith.select %42, %187, %156 : vector<8x256xi1>, vector<8x256xf32>
    %189 = arith.select %42, %185, %157 : vector<8x256xi1>, vector<8x256xf32>
    %c4 = arith.constant 4 : index
    %c0_40 = arith.constant 0 : index
    %c0_41 = arith.constant 0 : index
    %190 = vector.load %arg11[%c4, %c0_40, %c0_41] : memref<8x8x1024xf32, #tpu.memory_space<vmem>>, vector<1x8x1024xf32>
    %191 = vector.shape_cast %190 : vector<1x8x1024xf32> to vector<8x1024xf32>
    %192 = arith.truncf %188 : vector<8x256xf32> to vector<8x256xbf16>
    %cst_42 = arith.constant dense<0.000000e+00> : vector<8x1024xf32>
    %193 = tpu.matmul %192, %59, %cst_42 {dimension_numbers = #tpu.dot_dimension_numbers<[1], [0], [0], [1], [0, 0, 1, 1], [], []>} : vector<8x256xbf16>, vector<256x1024xbf16>, vector<8x1024xf32> -> vector<8x1024xf32>
    %194 = arith.addf %191, %193 : vector<8x1024xf32>
    %195 = vector.extract_strided_slice %194 {offsets = [0, 0], sizes = [8, 256], strides = [1, 1]} : vector<8x1024xf32> to vector<8x256xf32>
    %196 = arith.negf %195 : vector<8x256xf32>
    %197 = math.exp %196 : vector<8x256xf32>
    %cst_43 = arith.constant 1.000000e+00 : f32
    %198 = vector.broadcast %cst_43 : f32 to vector<8x256xf32>
    %199 = arith.addf %198, %197 : vector<8x256xf32>
    %200 = arith.divf %198, %199 : vector<8x256xf32>
    %201 = vector.extract_strided_slice %194 {offsets = [0, 256], sizes = [8, 256], strides = [1, 1]} : vector<8x1024xf32> to vector<8x256xf32>
    %202 = arith.negf %201 : vector<8x256xf32>
    %203 = math.exp %202 : vector<8x256xf32>
    %cst_44 = arith.constant 1.000000e+00 : f32
    %204 = vector.broadcast %cst_44 : f32 to vector<8x256xf32>
    %205 = arith.addf %204, %203 : vector<8x256xf32>
    %206 = arith.divf %204, %205 : vector<8x256xf32>
    %207 = vector.extract_strided_slice %194 {offsets = [0, 512], sizes = [8, 256], strides = [1, 1]} : vector<8x1024xf32> to vector<8x256xf32>
    %208 = math.tanh %207 : vector<8x256xf32>
    %209 = vector.extract_strided_slice %194 {offsets = [0, 768], sizes = [8, 256], strides = [1, 1]} : vector<8x1024xf32> to vector<8x256xf32>
    %210 = arith.negf %209 : vector<8x256xf32>
    %211 = math.exp %210 : vector<8x256xf32>
    %cst_45 = arith.constant 1.000000e+00 : f32
    %212 = vector.broadcast %cst_45 : f32 to vector<8x256xf32>
    %213 = arith.addf %212, %211 : vector<8x256xf32>
    %214 = arith.divf %212, %213 : vector<8x256xf32>
    %215 = arith.mulf %206, %189 : vector<8x256xf32>
    %216 = arith.mulf %200, %208 : vector<8x256xf32>
    %217 = arith.addf %215, %216 : vector<8x256xf32>
    %218 = math.tanh %217 : vector<8x256xf32>
    %219 = arith.mulf %214, %218 : vector<8x256xf32>
    %220 = arith.select %46, %219, %188 : vector<8x256xi1>, vector<8x256xf32>
    %221 = arith.select %46, %217, %189 : vector<8x256xi1>, vector<8x256xf32>
    %c5 = arith.constant 5 : index
    %c0_46 = arith.constant 0 : index
    %c0_47 = arith.constant 0 : index
    %222 = vector.load %arg11[%c5, %c0_46, %c0_47] : memref<8x8x1024xf32, #tpu.memory_space<vmem>>, vector<1x8x1024xf32>
    %223 = vector.shape_cast %222 : vector<1x8x1024xf32> to vector<8x1024xf32>
    %224 = arith.truncf %220 : vector<8x256xf32> to vector<8x256xbf16>
    %cst_48 = arith.constant dense<0.000000e+00> : vector<8x1024xf32>
    %225 = tpu.matmul %224, %59, %cst_48 {dimension_numbers = #tpu.dot_dimension_numbers<[1], [0], [0], [1], [0, 0, 1, 1], [], []>} : vector<8x256xbf16>, vector<256x1024xbf16>, vector<8x1024xf32> -> vector<8x1024xf32>
    %226 = arith.addf %223, %225 : vector<8x1024xf32>
    %227 = vector.extract_strided_slice %226 {offsets = [0, 0], sizes = [8, 256], strides = [1, 1]} : vector<8x1024xf32> to vector<8x256xf32>
    %228 = arith.negf %227 : vector<8x256xf32>
    %229 = math.exp %228 : vector<8x256xf32>
    %cst_49 = arith.constant 1.000000e+00 : f32
    %230 = vector.broadcast %cst_49 : f32 to vector<8x256xf32>
    %231 = arith.addf %230, %229 : vector<8x256xf32>
    %232 = arith.divf %230, %231 : vector<8x256xf32>
    %233 = vector.extract_strided_slice %226 {offsets = [0, 256], sizes = [8, 256], strides = [1, 1]} : vector<8x1024xf32> to vector<8x256xf32>
    %234 = arith.negf %233 : vector<8x256xf32>
    %235 = math.exp %234 : vector<8x256xf32>
    %cst_50 = arith.constant 1.000000e+00 : f32
    %236 = vector.broadcast %cst_50 : f32 to vector<8x256xf32>
    %237 = arith.addf %236, %235 : vector<8x256xf32>
    %238 = arith.divf %236, %237 : vector<8x256xf32>
    %239 = vector.extract_strided_slice %226 {offsets = [0, 512], sizes = [8, 256], strides = [1, 1]} : vector<8x1024xf32> to vector<8x256xf32>
    %240 = math.tanh %239 : vector<8x256xf32>
    %241 = vector.extract_strided_slice %226 {offsets = [0, 768], sizes = [8, 256], strides = [1, 1]} : vector<8x1024xf32> to vector<8x256xf32>
    %242 = arith.negf %241 : vector<8x256xf32>
    %243 = math.exp %242 : vector<8x256xf32>
    %cst_51 = arith.constant 1.000000e+00 : f32
    %244 = vector.broadcast %cst_51 : f32 to vector<8x256xf32>
    %245 = arith.addf %244, %243 : vector<8x256xf32>
    %246 = arith.divf %244, %245 : vector<8x256xf32>
    %247 = arith.mulf %238, %221 : vector<8x256xf32>
    %248 = arith.mulf %232, %240 : vector<8x256xf32>
    %249 = arith.addf %247, %248 : vector<8x256xf32>
    %250 = math.tanh %249 : vector<8x256xf32>
    %251 = arith.mulf %246, %250 : vector<8x256xf32>
    %252 = arith.select %50, %251, %220 : vector<8x256xi1>, vector<8x256xf32>
    %253 = arith.select %50, %249, %221 : vector<8x256xi1>, vector<8x256xf32>
    %c6 = arith.constant 6 : index
    %c0_52 = arith.constant 0 : index
    %c0_53 = arith.constant 0 : index
    %254 = vector.load %arg11[%c6, %c0_52, %c0_53] : memref<8x8x1024xf32, #tpu.memory_space<vmem>>, vector<1x8x1024xf32>
    %255 = vector.shape_cast %254 : vector<1x8x1024xf32> to vector<8x1024xf32>
    %256 = arith.truncf %252 : vector<8x256xf32> to vector<8x256xbf16>
    %cst_54 = arith.constant dense<0.000000e+00> : vector<8x1024xf32>
    %257 = tpu.matmul %256, %59, %cst_54 {dimension_numbers = #tpu.dot_dimension_numbers<[1], [0], [0], [1], [0, 0, 1, 1], [], []>} : vector<8x256xbf16>, vector<256x1024xbf16>, vector<8x1024xf32> -> vector<8x1024xf32>
    %258 = arith.addf %255, %257 : vector<8x1024xf32>
    %259 = vector.extract_strided_slice %258 {offsets = [0, 0], sizes = [8, 256], strides = [1, 1]} : vector<8x1024xf32> to vector<8x256xf32>
    %260 = arith.negf %259 : vector<8x256xf32>
    %261 = math.exp %260 : vector<8x256xf32>
    %cst_55 = arith.constant 1.000000e+00 : f32
    %262 = vector.broadcast %cst_55 : f32 to vector<8x256xf32>
    %263 = arith.addf %262, %261 : vector<8x256xf32>
    %264 = arith.divf %262, %263 : vector<8x256xf32>
    %265 = vector.extract_strided_slice %258 {offsets = [0, 256], sizes = [8, 256], strides = [1, 1]} : vector<8x1024xf32> to vector<8x256xf32>
    %266 = arith.negf %265 : vector<8x256xf32>
    %267 = math.exp %266 : vector<8x256xf32>
    %cst_56 = arith.constant 1.000000e+00 : f32
    %268 = vector.broadcast %cst_56 : f32 to vector<8x256xf32>
    %269 = arith.addf %268, %267 : vector<8x256xf32>
    %270 = arith.divf %268, %269 : vector<8x256xf32>
    %271 = vector.extract_strided_slice %258 {offsets = [0, 512], sizes = [8, 256], strides = [1, 1]} : vector<8x1024xf32> to vector<8x256xf32>
    %272 = math.tanh %271 : vector<8x256xf32>
    %273 = vector.extract_strided_slice %258 {offsets = [0, 768], sizes = [8, 256], strides = [1, 1]} : vector<8x1024xf32> to vector<8x256xf32>
    %274 = arith.negf %273 : vector<8x256xf32>
    %275 = math.exp %274 : vector<8x256xf32>
    %cst_57 = arith.constant 1.000000e+00 : f32
    %276 = vector.broadcast %cst_57 : f32 to vector<8x256xf32>
    %277 = arith.addf %276, %275 : vector<8x256xf32>
    %278 = arith.divf %276, %277 : vector<8x256xf32>
    %279 = arith.mulf %270, %253 : vector<8x256xf32>
    %280 = arith.mulf %264, %272 : vector<8x256xf32>
    %281 = arith.addf %279, %280 : vector<8x256xf32>
    %282 = math.tanh %281 : vector<8x256xf32>
    %283 = arith.mulf %278, %282 : vector<8x256xf32>
    %284 = arith.select %54, %283, %252 : vector<8x256xi1>, vector<8x256xf32>
    %285 = arith.select %54, %281, %253 : vector<8x256xi1>, vector<8x256xf32>
    %c7 = arith.constant 7 : index
    %c0_58 = arith.constant 0 : index
    %c0_59 = arith.constant 0 : index
    %286 = vector.load %arg11[%c7, %c0_58, %c0_59] : memref<8x8x1024xf32, #tpu.memory_space<vmem>>, vector<1x8x1024xf32>
    %287 = vector.shape_cast %286 : vector<1x8x1024xf32> to vector<8x1024xf32>
    %288 = arith.truncf %284 : vector<8x256xf32> to vector<8x256xbf16>
    %cst_60 = arith.constant dense<0.000000e+00> : vector<8x1024xf32>
    %289 = tpu.matmul %288, %59, %cst_60 {dimension_numbers = #tpu.dot_dimension_numbers<[1], [0], [0], [1], [0, 0, 1, 1], [], []>} : vector<8x256xbf16>, vector<256x1024xbf16>, vector<8x1024xf32> -> vector<8x1024xf32>
    %290 = arith.addf %287, %289 : vector<8x1024xf32>
    %291 = vector.extract_strided_slice %290 {offsets = [0, 0], sizes = [8, 256], strides = [1, 1]} : vector<8x1024xf32> to vector<8x256xf32>
    %292 = arith.negf %291 : vector<8x256xf32>
    %293 = math.exp %292 : vector<8x256xf32>
    %cst_61 = arith.constant 1.000000e+00 : f32
    %294 = vector.broadcast %cst_61 : f32 to vector<8x256xf32>
    %295 = arith.addf %294, %293 : vector<8x256xf32>
    %296 = arith.divf %294, %295 : vector<8x256xf32>
    %297 = vector.extract_strided_slice %290 {offsets = [0, 256], sizes = [8, 256], strides = [1, 1]} : vector<8x1024xf32> to vector<8x256xf32>
    %298 = arith.negf %297 : vector<8x256xf32>
    %299 = math.exp %298 : vector<8x256xf32>
    %cst_62 = arith.constant 1.000000e+00 : f32
    %300 = vector.broadcast %cst_62 : f32 to vector<8x256xf32>
    %301 = arith.addf %300, %299 : vector<8x256xf32>
    %302 = arith.divf %300, %301 : vector<8x256xf32>
    %303 = vector.extract_strided_slice %290 {offsets = [0, 512], sizes = [8, 256], strides = [1, 1]} : vector<8x1024xf32> to vector<8x256xf32>
    %304 = math.tanh %303 : vector<8x256xf32>
    %305 = vector.extract_strided_slice %290 {offsets = [0, 768], sizes = [8, 256], strides = [1, 1]} : vector<8x1024xf32> to vector<8x256xf32>
    %306 = arith.negf %305 : vector<8x256xf32>
    %307 = math.exp %306 : vector<8x256xf32>
    %cst_63 = arith.constant 1.000000e+00 : f32
    %308 = vector.broadcast %cst_63 : f32 to vector<8x256xf32>
    %309 = arith.addf %308, %307 : vector<8x256xf32>
    %310 = arith.divf %308, %309 : vector<8x256xf32>
    %311 = arith.mulf %302, %285 : vector<8x256xf32>
    %312 = arith.mulf %296, %304 : vector<8x256xf32>
    %313 = arith.addf %311, %312 : vector<8x256xf32>
    %314 = math.tanh %313 : vector<8x256xf32>
    %315 = arith.mulf %310, %314 : vector<8x256xf32>
    %316 = arith.select %58, %315, %284 : vector<8x256xi1>, vector<8x256xf32>
    %317 = arith.truncf %316 : vector<8x256xf32> to vector<8x256xbf16>
    %c0_64 = arith.constant 0 : index
    %c0_65 = arith.constant 0 : index
    %318 = vector.load %arg6[%c0_64, %c0_65] : memref<256x128xbf16, #tpu.memory_space<vmem>>, vector<256x128xbf16>
    %cst_66 = arith.constant dense<0.000000e+00> : vector<8x128xf32>
    %319 = tpu.matmul %317, %318, %cst_66 {dimension_numbers = #tpu.dot_dimension_numbers<[1], [0], [0], [1], [0, 0, 1, 1], [], []>} : vector<8x256xbf16>, vector<256x128xbf16>, vector<8x128xf32> -> vector<8x128xf32>
    %c0_67 = arith.constant 0 : index
    %c0_68 = arith.constant 0 : index
    %320 = vector.load %arg7[%c0_67, %c0_68] : memref<1x128xf32, #tpu.memory_space<vmem>>, vector<1x128xf32>
    %321 = vector.broadcast %320 : vector<1x128xf32> to vector<8x128xf32>
    %322 = arith.addf %319, %321 : vector<8x128xf32>
    %cst_69 = arith.constant 0.000000e+00 : f32
    %323 = vector.broadcast %cst_69 : f32 to vector<8x128xf32>
    %324 = arith.maximumf %322, %323 : vector<8x128xf32>
    %325 = arith.truncf %324 : vector<8x128xf32> to vector<8x128xbf16>
    %c0_70 = arith.constant 0 : index
    %c0_71 = arith.constant 0 : index
    %326 = vector.load %arg8[%c0_70, %c0_71] : memref<128x128xbf16, #tpu.memory_space<vmem>>, vector<128x128xbf16>
    %cst_72 = arith.constant dense<0.000000e+00> : vector<8x128xf32>
    %327 = tpu.matmul %325, %326, %cst_72 {dimension_numbers = #tpu.dot_dimension_numbers<[1], [0], [0], [1], [0, 0, 1, 1], [], []>} : vector<8x128xbf16>, vector<128x128xbf16>, vector<8x128xf32> -> vector<8x128xf32>
    %c0_73 = arith.constant 0 : index
    %c0_74 = arith.constant 0 : index
    %328 = vector.load %arg9[%c0_73, %c0_74] : memref<1x128xf32, #tpu.memory_space<vmem>>, vector<1x128xf32>
    %329 = vector.broadcast %328 : vector<1x128xf32> to vector<8x128xf32>
    %330 = arith.addf %327, %329 : vector<8x128xf32>
    %c0_75 = arith.constant 0 : index
    %c0_76 = arith.constant 0 : index
    %331 = vector.load %arg10[%c0_75, %c0_76] : memref<8x128xf32, #tpu.memory_space<vmem>>, vector<8x128xf32>
    tpu.vector_store %arg10[%c0_75, %c0_76], %330 {strides = array<i32>} : memref<8x128xf32, #tpu.memory_space<vmem>>, vector<8x128xf32>,
    return
  }
  func.func @transform_0(%arg0: i32) -> (i32, i32, i32) {
    %c0_i32 = arith.constant 0 : i32
    %c0_i32_0 = arith.constant 0 : i32
    %c0_i32_1 = arith.constant 0 : i32
    return %arg0, %c0_i32, %c0_i32_0 : i32, i32, i32
  }
  func.func @transform_1(%arg0: i32) -> (i32, i32) {
    %c0_i32 = arith.constant 0 : i32
    %c0_i32_0 = arith.constant 0 : i32
    return %arg0, %c0_i32 : i32, i32
  }
  func.func @transform_2(%arg0: i32) -> (i32, i32) {
    %c0_i32 = arith.constant 0 : i32
    %c0_i32_0 = arith.constant 0 : i32
    %c0_i32_1 = arith.constant 0 : i32
    return %c0_i32, %c0_i32_0 : i32, i32
  }
  func.func @transform_3(%arg0: i32) -> (i32, i32) {
    %c0_i32 = arith.constant 0 : i32
    %c0_i32_0 = arith.constant 0 : i32
    %c0_i32_1 = arith.constant 0 : i32
    return %c0_i32, %c0_i32_0 : i32, i32
  }
  func.func @transform_4(%arg0: i32) -> (i32, i32) {
    %c0_i32 = arith.constant 0 : i32
    %c0_i32_0 = arith.constant 0 : i32
    %c0_i32_1 = arith.constant 0 : i32
    return %c0_i32, %c0_i32_0 : i32, i32
  }
  func.func @transform_5(%arg0: i32) -> (i32, i32) {
    %c0_i32 = arith.constant 0 : i32
    %c0_i32_0 = arith.constant 0 : i32
    %c0_i32_1 = arith.constant 0 : i32
    return %c0_i32, %c0_i32_0 : i32, i32
  }
  func.func @transform_6(%arg0: i32) -> (i32, i32) {
    %c0_i32 = arith.constant 0 : i32
    %c0_i32_0 = arith.constant 0 : i32
    %c0_i32_1 = arith.constant 0 : i32
    return %c0_i32, %c0_i32_0 : i32, i32
  }
  func.func @transform_7(%arg0: i32) -> (i32, i32) {
    %c0_i32 = arith.constant 0 : i32
    %c0_i32_0 = arith.constant 0 : i32
    %c0_i32_1 = arith.constant 0 : i32
    return %c0_i32, %c0_i32_0 : i32, i32
  }
  func.func @transform_8(%arg0: i32) -> (i32, i32) {
    %c0_i32 = arith.constant 0 : i32
    %c0_i32_0 = arith.constant 0 : i32
    %c0_i32_1 = arith.constant 0 : i32
    return %c0_i32, %c0_i32_0 : i32, i32
  }
  func.func @transform_9(%arg0: i32) -> (i32, i32) {
    %c0_i32 = arith.constant 0 : i32
    %c0_i32_0 = arith.constant 0 : i32
    return %arg0, %c0_i32 : i32, i32
  }
}

</mosaic_0001>

<llo_original>
// kernel: policy_forward.1
$region0: #{policy_forward.1}
  #allocation0 [shape = 'u32[]', space=smem, size = 0x4, offset = 0x4, fixed_abs, tag = 'smem constant byte address 0x4 - core index']
  #allocation1 [shape = 'u32[144,128]{1,0:T(1,128)}', space=vmem, size = 0x12000, scoped, tag = 'internal scratch']
  #allocation2 [shape = 'f32[8,8,1024]{2,1,0:T(8,128)}', space=vmem, size = 0x40000, scoped, tag = 'scratch operand']
  %s0 = inlined_call_operand.vmem [shape: f32[8,8,256], index: 0, kind: input, shape index: {}]
  %s1 = inlined_call_operand.vmem [shape: s32[8,1], index: 1, kind: input, shape index: {}]
  %s2 = inlined_call_operand.hbm [shape: bf16[256,1024], index: 2, kind: input, shape index: {}]
  %s3 = inlined_call_operand.hbm [shape: bf16[256,1024], index: 3, kind: input, shape index: {}]
  %s4 = inlined_call_operand.vmem [shape: f32[1,1024], index: 4, kind: input, shape index: {}]
  %s5 = inlined_call_operand.vmem [shape: bf16[256,128], index: 5, kind: input, shape index: {}]
  %s6 = inlined_call_operand.vmem [shape: f32[1,128], index: 6, kind: input, shape index: {}]
  %s7 = inlined_call_operand.vmem [shape: bf16[128,128], index: 7, kind: input, shape index: {}]
  %s8 = inlined_call_operand.vmem [shape: f32[1,128], index: 8, kind: input, shape index: {}]
  %s9 = inlined_call_operand.vmem [shape: f32[8,128], index: 9, kind: output, shape index: {}]
  %s10 = sld [smem:[#allocation0]]
  $region54: #{policy_forward.1} parent=0
    _
  %s12 = ssub.s32 1, %s10
  %s13 = scalar_select 0, %s12, %s10
  $region1: #{policy_forward.1} parent=0
    #allocation3 [shape = 'u8[524288]{0}', space=vmem, size = 0x80000, scoped, tag = 'input window, operand 2, single buffered']
    #allocation4 [shape = 's32[1]{0}', space=sflag, size = 0x4, scoped, tag = 'scoped memory for policy_forward.1']
    #allocation5 [shape = 'u8[524288]{0}', space=vmem, size = 0x80000, scoped, tag = 'input window, operand 3, single buffered']
    #allocation6 [shape = 's32[1]{0}', space=sflag, size = 0x4, scoped, tag = 'scoped memory for policy_forward.1']
    %14 = vsyncpa [#allocation4], 0
    %15 = vsyncpa [#allocation6], 0
    // Predicated region
    $region2: #{policy_forward.1} parent=1 // pred_check
      _
    $region3: #{policy_forward.1} parent=1 // pred_check_branch
      %17 = sbr.rel (0) target = $region5
    $region4: #{policy_forward.1} parent=1 // pred_region
      _
    $region5: #{policy_forward.1} parent=1 // pred_fallthru
      _
    // Predicated region
    $region6: #{policy_forward.1} parent=1 // pred_check
      _
    $region7: #{policy_forward.1} parent=1 // pred_check_branch
      %19 = sbr.rel (0) target = $region9
    $region8: #{policy_forward.1} parent=1 // pred_region
      _
    $region9: #{policy_forward.1} parent=1 // pred_fallthru
      _
    // Predicated region
    $region10: #{policy_forward.1} parent=1 // pred_check
      _
    $region11: #{policy_forward.1} parent=1 // pred_check_branch
      %21 = sbr.rel (0) target = $region13
    $region12: #{policy_forward.1} parent=1 // pred_region
      %s23 = ssub.s32 16384, 16384
      %24 = vsyncadd [#allocation4], %s23
      %s25 = sshll.u32 [#allocation3], 4
      %s26 = int_to_ptr.vmem [resolvable:$true] %s25
      %31 = dma.hbm_to_vmem [thread:$0]  %s2, 16384, %s26, [#allocation4], 512, 512, 32
    $region13: #{policy_forward.1} parent=1 // pred_fallthru
      _
    // Predicated region
    $region14: #{policy_forward.1} parent=1 // pred_check
      _
    $region15: #{policy_forward.1} parent=1 // pred_check_branch
      %33 = sbr.rel (0) target = $region17
    $region16: #{policy_forward.1} parent=1 // pred_region
      %s35 = ssub.s32 16384, 16384
      %36 = vsyncadd [#allocation6], %s35
      %s37 = sshll.u32 [#allocation5], 4
      %s38 = int_to_ptr.vmem [resolvable:$true] %s37
      %43 = dma.hbm_to_vmem [thread:$0]  %s3, 16384, %s38, [#allocation6], 512, 512, 32
    $region17: #{policy_forward.1} parent=1 // pred_fallthru
      _
    // Predicated region
    $region18: #{policy_forward.1} parent=1 // pred_check
      _
    $region19: #{policy_forward.1} parent=1 // pred_check_branch
      %45 = sbr.rel (0) target = $region21
    $region20: #{policy_forward.1} parent=1 // pred_region
      _
    $region21: #{policy_forward.1} parent=1 // pred_fallthru
      _
    // Predicated region
    $region22: #{policy_forward.1} parent=1 // pred_check
      _
    $region23: #{policy_forward.1} parent=1 // pred_check_branch
      %47 = sbr.rel (0) target = $region25
    $region24: #{policy_forward.1} parent=1 // pred_region
      _
    $region25: #{policy_forward.1} parent=1 // pred_fallthru
      _
    // Predicated region
    $region26: #{policy_forward.1} parent=1 // pred_check
      _
    $region27: #{policy_forward.1} parent=1 // pred_check_branch
      %49 = sbr.rel (0) target = $region29
    $region28: #{policy_forward.1} parent=1 // pred_region
      _
    $region29: #{policy_forward.1} parent=1 // pred_fallthru
      _
    // Predicated region
    $region30: #{policy_forward.1} parent=1 // pred_check
      _
    $region31: #{policy_forward.1} parent=1 // pred_check_branch
      %51 = sbr.rel (0) target = $region33
    $region32: #{policy_forward.1} parent=1 // pred_region
      _
    $region33: #{policy_forward.1} parent=1 // pred_fallthru
      _
    // Predicated region
    $region34: #{policy_forward.1} parent=1 // pred_check
      _
    $region35: #{policy_forward.1} parent=1 // pred_check_branch
      %53 = sbr.rel (0) target = $region37
    $region36: #{policy_forward.1} parent=1 // pred_region
      _
    $region37: #{policy_forward.1} parent=1 // pred_fallthru
      _
    // Predicated region
    $region38: #{policy_forward.1} parent=1 // pred_check
      _
    $region39: #{policy_forward.1} parent=1 // pred_check_branch
      %55 = sbr.rel (0) target = $region41
    $region40: #{policy_forward.1} parent=1 // pred_region
      %56 = dma.done [#allocation4], 16384
    $region41: #{policy_forward.1} parent=1 // pred_fallthru
      _
    // Predicated region
    $region42: #{policy_forward.1} parent=1 // pred_check
      _
    $region43: #{policy_forward.1} parent=1 // pred_check_branch
      %58 = sbr.rel (0) target = $region45
    $region44: #{policy_forward.1} parent=1 // pred_region
      %59 = dma.done [#allocation6], 16384
    $region45: #{policy_forward.1} parent=1 // pred_fallthru
      _
    %v61 = vld [vmem:[%s1] sm:$0xff]
    %v62 = vld [vmem:[%s0] sm:$0xff]
    %v63 = vld [vmem:[%s0 + $0x8] sm:$0xff]
    %v64 = vld [vmem:[%s0 + $0x10] sm:$0xff]
    %v65 = vld [vmem:[%s0 + $0x18] sm:$0xff]
    %v66 = vld [vmem:[%s0 + $0x20] sm:$0xff]
    %v67 = vld [vmem:[%s0 + $0x28] sm:$0xff]
    %v68 = vld [vmem:[%s0 + $0x30] sm:$0xff]
    %v69 = vld [vmem:[%s0 + $0x38] sm:$0xff]
    %v70 = vld [vmem:[%s0 + $0x40] sm:$0xff]
    %v71 = vld [vmem:[%s0 + $0x48] sm:$0xff]
    %v72 = vld [vmem:[%s0 + $0x50] sm:$0xff]
    %v73 = vld [vmem:[%s0 + $0x58] sm:$0xff]
    %v74 = vld [vmem:[%s0 + $0x60] sm:$0xff]
    %v75 = vld [vmem:[%s0 + $0x68] sm:$0xff]
    %v76 = vld [vmem:[%s0 + $0x70] sm:$0xff]
    %v77 = vld [vmem:[%s0 + $0x78] sm:$0xff]
    %v94 = vrot.slane %v64, 7
    %vm95 = vcmask 1041409
    %v96 = vsel %vm95, %v94, %v62
    %v97 = vrot.slane %v66, 6
    %vm98 = vcmask 1042434
    %v99 = vsel %vm98, %v97, %v96
    %v100 = vrot.slane %v68, 5
    %vm101 = vcmask 1043459
    %v102 = vsel %vm101, %v100, %v99
    %v103 = vrot.slane %v70, 4
    %vm104 = vcmask 1044484
    %v105 = vsel %vm104, %v103, %v102
    %v106 = vrot.slane %v72, 3
    %vm107 = vcmask 1045509
    %v108 = vsel %vm107, %v106, %v105
    %v109 = vrot.slane %v74, 2
    %vm110 = vcmask 1046534
    %v111 = vsel %vm110, %v109, %v108
    %v112 = vrot.slane %v76, 1
    %vm113 = vcmask 1047559
    %v114 = vsel %vm113, %v112, %v111
    %v115 = vrot.slane %v65, 7
    %v116 = vsel %vm95, %v115, %v63
    %v117 = vrot.slane %v67, 6
    %v118 = vsel %vm98, %v117, %v116
    %v119 = vrot.slane %v69, 5
    %v120 = vsel %vm101, %v119, %v118
    %v121 = vrot.slane %v71, 4
    %v122 = vsel %vm104, %v121, %v120
    %v123 = vrot.slane %v73, 3
    %v124 = vsel %vm107, %v123, %v122
    %v125 = vrot.slane %v75, 2
    %v126 = vsel %vm110, %v125, %v124
    %v127 = vrot.slane %v77, 1
    %v128 = vsel %vm113, %v127, %v126
    %v131 = vrot.slane %v62, 1
    %v132 = vsel %vm95, %v64, %v131
    %v133 = vrot.slane %v66, 7
    %v134 = vsel %vm98, %v133, %v132
    %v135 = vrot.slane %v68, 6
    %v136 = vsel %vm101, %v135, %v134
    %v137 = vrot.slane %v70, 5
    %v138 = vsel %vm104, %v137, %v136
    %v139 = vrot.slane %v72, 4
    %v140 = vsel %vm107, %v139, %v138
    %v141 = vrot.slane %v74, 3
    %v142 = vsel %vm110, %v141, %v140
    %v143 = vrot.slane %v76, 2
    %v144 = vsel %vm113, %v143, %v142
    %v145 = vrot.slane %v63, 1
    %v146 = vsel %vm95, %v65, %v145
    %v147 = vrot.slane %v67, 7
    %v148 = vsel %vm98, %v147, %v146
    %v149 = vrot.slane %v69, 6
    %v150 = vsel %vm101, %v149, %v148
    %v151 = vrot.slane %v71, 5
    %v152 = vsel %vm104, %v151, %v150
    %v153 = vrot.slane %v73, 4
    %v154 = vsel %vm107, %v153, %v152
    %v155 = vrot.slane %v75, 3
    %v156 = vsel %vm110, %v155, %v154
    %v157 = vrot.slane %v77, 2
    %v158 = vsel %vm113, %v157, %v156
    %v161 = vrot.slane %v62, 2
    %v162 = vrot.slane %v64, 1
    %v163 = vsel %vm95, %v162, %v161
    %v164 = vsel %vm98, %v66, %v163
    %v165 = vrot.slane %v68, 7
    %v166 = vsel %vm101, %v165, %v164
    %v167 = vrot.slane %v70, 6
    %v168 = vsel %vm104, %v167, %v166
    %v169 = vrot.slane %v72, 5
    %v170 = vsel %vm107, %v169, %v168
    %v171 = vrot.slane %v74, 4
    %v172 = vsel %vm110, %v171, %v170
    %v173 = vrot.slane %v76, 3
    %v174 = vsel %vm113, %v173, %v172
    %v175 = vrot.slane %v63, 2
    %v176 = vrot.slane %v65, 1
    %v177 = vsel %vm95, %v176, %v175
    %v178 = vsel %vm98, %v67, %v177
    %v179 = vrot.slane %v69, 7
    %v180 = vsel %vm101, %v179, %v178
    %v181 = vrot.slane %v71, 6
    %v182 = vsel %vm104, %v181, %v180
    %v183 = vrot.slane %v73, 5
    %v184 = vsel %vm107, %v183, %v182
    %v185 = vrot.slane %v75, 4
    %v186 = vsel %vm110, %v185, %v184
    %v187 = vrot.slane %v77, 3
    %v188 = vsel %vm113, %v187, %v186
    %v191 = vrot.slane %v62, 3
    %v192 = vrot.slane %v64, 2
    %v193 = vsel %vm95, %v192, %v191
    %v194 = vrot.slane %v66, 1
    %v195 = vsel %vm98, %v194, %v193
    %v196 = vsel %vm101, %v68, %v195
    %v197 = vrot.slane %v70, 7
    %v198 = vsel %vm104, %v197, %v196
    %v199 = vrot.slane %v72, 6
    %v200 = vsel %vm107, %v199, %v198
    %v201 = vrot.slane %v74, 5
    %v202 = vsel %vm110, %v201, %v200
    %v203 = vrot.slane %v76, 4
    %v204 = vsel %vm113, %v203, %v202
    %v205 = vrot.slane %v63, 3
    %v206 = vrot.slane %v65, 2
    %v207 = vsel %vm95, %v206, %v205
    %v208 = vrot.slane %v67, 1
    %v209 = vsel %vm98, %v208, %v207
    %v210 = vsel %vm101, %v69, %v209
    %v211 = vrot.slane %v71, 7
    %v212 = vsel %vm104, %v211, %v210
    %v213 = vrot.slane %v73, 6
    %v214 = vsel %vm107, %v213, %v212
    %v215 = vrot.slane %v75, 5
    %v216 = vsel %vm110, %v215, %v214
    %v217 = vrot.slane %v77, 4
    %v218 = vsel %vm113, %v217, %v216
    %v221 = vrot.slane %v62, 4
    %v222 = vrot.slane %v64, 3
    %v223 = vsel %vm95, %v222, %v221
    %v224 = vrot.slane %v66, 2
    %v225 = vsel %vm98, %v224, %v223
    %v226 = vrot.slane %v68, 1
    %v227 = vsel %vm101, %v226, %v225
    %v228 = vsel %vm104, %v70, %v227
    %v229 = vrot.slane %v72, 7
    %v230 = vsel %vm107, %v229, %v228
    %v231 = vrot.slane %v74, 6
    %v232 = vsel %vm110, %v231, %v230
    %v233 = vrot.slane %v76, 5
    %v234 = vsel %vm113, %v233, %v232
    %v235 = vrot.slane %v63, 4
    %v236 = vrot.slane %v65, 3
    %v237 = vsel %vm95, %v236, %v235
    %v238 = vrot.slane %v67, 2
    %v239 = vsel %vm98, %v238, %v237
    %v240 = vrot.slane %v69, 1
    %v241 = vsel %vm101, %v240, %v239
    %v242 = vsel %vm104, %v71, %v241
    %v243 = vrot.slane %v73, 7
    %v244 = vsel %vm107, %v243, %v242
    %v245 = vrot.slane %v75, 6
    %v246 = vsel %vm110, %v245, %v244
    %v247 = vrot.slane %v77, 5
    %v248 = vsel %vm113, %v247, %v246
    %v251 = vrot.slane %v62, 5
    %v252 = vrot.slane %v64, 4
    %v253 = vsel %vm95, %v252, %v251
    %v254 = vrot.slane %v66, 3
    %v255 = vsel %vm98, %v254, %v253
    %v256 = vrot.slane %v68, 2
    %v257 = vsel %vm101, %v256, %v255
    %v258 = vrot.slane %v70, 1
    %v259 = vsel %vm104, %v258, %v257
    %v260 = vsel %vm107, %v72, %v259
    %v261 = vrot.slane %v74, 7
    %v262 = vsel %vm110, %v261, %v260
    %v263 = vrot.slane %v76, 6
    %v264 = vsel %vm113, %v263, %v262
    %v265 = vrot.slane %v63, 5
    %v266 = vrot.slane %v65, 4
    %v267 = vsel %vm95, %v266, %v265
    %v268 = vrot.slane %v67, 3
    %v269 = vsel %vm98, %v268, %v267
    %v270 = vrot.slane %v69, 2
    %v271 = vsel %vm101, %v270, %v269
    %v272 = vrot.slane %v71, 1
    %v273 = vsel %vm104, %v272, %v271
    %v274 = vsel %vm107, %v73, %v273
    %v275 = vrot.slane %v75, 7
    %v276 = vsel %vm110, %v275, %v274
    %v277 = vrot.slane %v77, 6
    %v278 = vsel %vm113, %v277, %v276
    %v281 = vrot.slane %v62, 6
    %v282 = vrot.slane %v64, 5
    %v283 = vsel %vm95, %v282, %v281
    %v284 = vrot.slane %v66, 4
    %v285 = vsel %vm98, %v284, %v283
    %v286 = vrot.slane %v68, 3
    %v287 = vsel %vm101, %v286, %v285
    %v288 = vrot.slane %v70, 2
    %v289 = vsel %vm104, %v288, %v287
    %v290 = vrot.slane %v72, 1
    %v291 = vsel %vm107, %v290, %v289
    %v292 = vsel %vm110, %v74, %v291
    %v293 = vrot.slane %v76, 7
    %v294 = vsel %vm113, %v293, %v292
    %v295 = vrot.slane %v63, 6
    %v296 = vrot.slane %v65, 5
    %v297 = vsel %vm95, %v296, %v295
    %v298 = vrot.slane %v67, 4
    %v299 = vsel %vm98, %v298, %v297
    %v300 = vrot.slane %v69, 3
    %v301 = vsel %vm101, %v300, %v299
    %v302 = vrot.slane %v71, 2
    %v303 = vsel %vm104, %v302, %v301
    %v304 = vrot.slane %v73, 1
    %v305 = vsel %vm107, %v304, %v303
    %v306 = vsel %vm110, %v75, %v305
    %v307 = vrot.slane %v77, 7
    %v308 = vsel %vm113, %v307, %v306
    %v311 = vrot.slane %v62, 7
    %v312 = vrot.slane %v64, 6
    %v313 = vsel %vm95, %v312, %v311
    %v314 = vrot.slane %v66, 5
    %v315 = vsel %vm98, %v314, %v313
    %v316 = vrot.slane %v68, 4
    %v317 = vsel %vm101, %v316, %v315
    %v318 = vrot.slane %v70, 3
    %v319 = vsel %vm104, %v318, %v317
    %v320 = vrot.slane %v72, 2
    %v321 = vsel %vm107, %v320, %v319
    %v322 = vrot.slane %v74, 1
    %v323 = vsel %vm110, %v322, %v321
    %v324 = vsel %vm113, %v76, %v323
    %v325 = vrot.slane %v63, 7
    %v326 = vrot.slane %v65, 6
    %v327 = vsel %vm95, %v326, %v325
    %v328 = vrot.slane %v67, 5
    %v329 = vsel %vm98, %v328, %v327
    %v330 = vrot.slane %v69, 4
    %v331 = vsel %vm101, %v330, %v329
    %v332 = vrot.slane %v71, 3
    %v333 = vsel %vm104, %v332, %v331
    %v334 = vrot.slane %v73, 2
    %v335 = vsel %vm107, %v334, %v333
    %v336 = vrot.slane %v75, 1
    %v337 = vsel %vm110, %v336, %v335
    %v338 = vsel %vm113, %v77, %v337
    %v341 = vpack.c.bf16 %v144, %v114
    %v342 = vpack.c.bf16 %v158, %v128
    %v343 = vpack.c.bf16 %v204, %v174
    %v344 = vpack.c.bf16 %v218, %v188
    %v345 = vpack.c.bf16 %v264, %v234
    %v346 = vpack.c.bf16 %v278, %v248
    %v347 = vpack.c.bf16 %v324, %v294
    %v348 = vpack.c.bf16 %v338, %v308
    %v349 = vld [vmem:[#allocation3] sm:$0xff]
    %v350 = vld [vmem:[#allocation3 + $0x8] sm:$0xff]
    %v351 = vld [vmem:[#allocation3 + $0x10] sm:$0xff]
    %v352 = vld [vmem:[#allocation3 + $0x18] sm:$0xff]
    %v353 = vld [vmem:[#allocation3 + $0x20] sm:$0xff]
    %v354 = vld [vmem:[#allocation3 + $0x28] sm:$0xff]
    %v355 = vld [vmem:[#allocation3 + $0x30] sm:$0xff]
    %v356 = vld [vmem:[#allocation3 + $0x38] sm:$0xff]
    %v357 = vld [vmem:[#allocation3 + $0x40] sm:$0xff]
    %v358 = vld [vmem:[#allocation3 + $0x48] sm:$0xff]
    %v359 = vld [vmem:[#allocation3 + $0x50] sm:$0xff]
    %v360 = vld [vmem:[#allocation3 + $0x58] sm:$0xff]
    %v361 = vld [vmem:[#allocation3 + $0x60] sm:$0xff]
    %v362 = vld [vmem:[#allocation3 + $0x68] sm:$0xff]
    %v363 = vld [vmem:[#allocation3 + $0x70] sm:$0xff]
    %v364 = vld [vmem:[#allocation3 + $0x78] sm:$0xff]
    %v365 = vld [vmem:[#allocation3 + $0x80] sm:$0xff]
    %v366 = vld [vmem:[#allocation3 + $0x88] sm:$0xff]
    %v367 = vld [vmem:[#allocation3 + $0x90] sm:$0xff]
    %v368 = vld [vmem:[#allocation3 + $0x98] sm:$0xff]
    %v369 = vld [vmem:[#allocation3 + $0xa0] sm:$0xff]
    %v370 = vld [vmem:[#allocation3 + $0xa8] sm:$0xff]
    %v371 = vld [vmem:[#allocation3 + $0xb0] sm:$0xff]
    %v372 = vld [vmem:[#allocation3 + $0xb8] sm:$0xff]
    %v373 = vld [vmem:[#allocation3 + $0xc0] sm:$0xff]
    %v374 = vld [vmem:[#allocation3 + $0xc8] sm:$0xff]
    %v375 = vld [vmem:[#allocation3 + $0xd0] sm:$0xff]
    %v376 = vld [vmem:[#allocation3 + $0xd8] sm:$0xff]
    %v377 = vld [vmem:[#allocation3 + $0xe0] sm:$0xff]
    %v378 = vld [vmem:[#allocation3 + $0xe8] sm:$0xff]
    %v379 = vld [vmem:[#allocation3 + $0xf0] sm:$0xff]
    %v380 = vld [vmem:[#allocation3 + $0xf8] sm:$0xff]
    %v381 = vld [vmem:[#allocation3 + $0x100] sm:$0xff]
    %v382 = vld [vmem:[#allocation3 + $0x108] sm:$0xff]
    %v383 = vld [vmem:[#allocation3 + $0x110] sm:$0xff]
    %v384 = vld [vmem:[#allocation3 + $0x118] sm:$0xff]
    %v385 = vld [vmem:[#allocation3 + $0x120] sm:$0xff]
    %v386 = vld [vmem:[#allocation3 + $0x128] sm:$0xff]
    %v387 = vld [vmem:[#allocation3 + $0x130] sm:$0xff]
    %v388 = vld [vmem:[#allocation3 + $0x138] sm:$0xff]
    %v389 = vld [vmem:[#allocation3 + $0x140] sm:$0xff]
    %v390 = vld [vmem:[#allocation3 + $0x148] sm:$0xff]
    %v391 = vld [vmem:[#allocation3 + $0x150] sm:$0xff]
    %v392 = vld [vmem:[#allocation3 + $0x158] sm:$0xff]
    %v393 = vld [vmem:[#allocation3 + $0x160] sm:$0xff]
    %v394 = vld [vmem:[#allocation3 + $0x168] sm:$0xff]
    %v395 = vld [vmem:[#allocation3 + $0x170] sm:$0xff]
    %v396 = vld [vmem:[#allocation3 + $0x178] sm:$0xff]
    %v397 = vld [vmem:[#allocation3 + $0x180] sm:$0xff]
    %v398 = vld [vmem:[#allocation3 + $0x188] sm:$0xff]
    %v399 = vld [vmem:[#allocation3 + $0x190] sm:$0xff]
    %v400 = vld [vmem:[#allocation3 + $0x198] sm:$0xff]
    %v401 = vld [vmem:[#allocation3 + $0x1a0] sm:$0xff]
    %v402 = vld [vmem:[#allocation3 + $0x1a8] sm:$0xff]
    %v403 = vld [vmem:[#allocation3 + $0x1b0] sm:$0xff]
    %v404 = vld [vmem:[#allocation3 + $0x1b8] sm:$0xff]
    %v405 = vld [vmem:[#allocation3 + $0x1c0] sm:$0xff]
    %v406 = vld [vmem:[#allocation3 + $0x1c8] sm:$0xff]
    %v407 = vld [vmem:[#allocation3 + $0x1d0] sm:$0xff]
    %v408 = vld [vmem:[#allocation3 + $0x1d8] sm:$0xff]
    %v409 = vld [vmem:[#allocation3 + $0x1e0] sm:$0xff]
    %v410 = vld [vmem:[#allocation3 + $0x1e8] sm:$0xff]
    %v411 = vld [vmem:[#allocation3 + $0x1f0] sm:$0xff]
    %v412 = vld [vmem:[#allocation3 + $0x1f8] sm:$0xff]
    %v413 = vld [vmem:[#allocation3 + $0x200] sm:$0xff]
    %v414 = vld [vmem:[#allocation3 + $0x208] sm:$0xff]
    %v415 = vld [vmem:[#allocation3 + $0x210] sm:$0xff]
    %v416 = vld [vmem:[#allocation3 + $0x218] sm:$0xff]
    %v417 = vld [vmem:[#allocation3 + $0x220] sm:$0xff]
    %v418 = vld [vmem:[#allocation3 + $0x228] sm:$0xff]
    %v419 = vld [vmem:[#allocation3 + $0x230] sm:$0xff]
    %v420 = vld [vmem:[#allocation3 + $0x238] sm:$0xff]
    %v421 = vld [vmem:[#allocation3 + $0x240] sm:$0xff]
    %v422 = vld [vmem:[#allocation3 + $0x248] sm:$0xff]
    %v423 = vld [vmem:[#allocation3 + $0x250] sm:$0xff]
    %v424 = vld [vmem:[#allocation3 + $0x258] sm:$0xff]
    %v425 = vld [vmem:[#allocation3 + $0x260] sm:$0xff]
    %v426 = vld [vmem:[#allocation3 + $0x268] sm:$0xff]
    %v427 = vld [vmem:[#allocation3 + $0x270] sm:$0xff]
    %v428 = vld [vmem:[#allocation3 + $0x278] sm:$0xff]
    %v429 = vld [vmem:[#allocation3 + $0x280] sm:$0xff]
    %v430 = vld [vmem:[#allocation3 + $0x288] sm:$0xff]
    %v431 = vld [vmem:[#allocation3 + $0x290] sm:$0xff]
    %v432 = vld [vmem:[#allocation3 + $0x298] sm:$0xff]
    %v433 = vld [vmem:[#allocation3 + $0x2a0] sm:$0xff]
    %v434 = vld [vmem:[#allocation3 + $0x2a8] sm:$0xff]
    %v435 = vld [vmem:[#allocation3 + $0x2b0] sm:$0xff]
    %v436 = vld [vmem:[#allocation3 + $0x2b8] sm:$0xff]
    %v437 = vld [vmem:[#allocation3 + $0x2c0] sm:$0xff]
    %v438 = vld [vmem:[#allocation3 + $0x2c8] sm:$0xff]
    %v439 = vld [vmem:[#allocation3 + $0x2d0] sm:$0xff]
    %v440 = vld [vmem:[#allocation3 + $0x2d8] sm:$0xff]
    %v441 = vld [vmem:[#allocation3 + $0x2e0] sm:$0xff]
    %v442 = vld [vmem:[#allocation3 + $0x2e8] sm:$0xff]
    %v443 = vld [vmem:[#allocation3 + $0x2f0] sm:$0xff]
    %v444 = vld [vmem:[#allocation3 + $0x2f8] sm:$0xff]
    %v445 = vld [vmem:[#allocation3 + $0x300] sm:$0xff]
    %v446 = vld [vmem:[#allocation3 + $0x308] sm:$0xff]
    %v447 = vld [vmem:[#allocation3 + $0x310] sm:$0xff]
    %v448 = vld [vmem:[#allocation3 + $0x318] sm:$0xff]
    %v449 = vld [vmem:[#allocation3 + $0x320] sm:$0xff]
    %v450 = vld [vmem:[#allocation3 + $0x328] sm:$0xff]
    %v451 = vld [vmem:[#allocation3 + $0x330] sm:$0xff]
    %v452 = vld [vmem:[#allocation3 + $0x338] sm:$0xff]
    %v453 = vld [vmem:[#allocation3 + $0x340] sm:$0xff]
    %v454 = vld [vmem:[#allocation3 + $0x348] sm:$0xff]
    %v455 = vld [vmem:[#allocation3 + $0x350] sm:$0xff]
    %v456 = vld [vmem:[#allocation3 + $0x358] sm:$0xff]
    %v457 = vld [vmem:[#allocation3 + $0x360] sm:$0xff]
    %v458 = vld [vmem:[#allocation3 + $0x368] sm:$0xff]
    %v459 = vld [vmem:[#allocation3 + $0x370] sm:$0xff]
    %v460 = vld [vmem:[#allocation3 + $0x378] sm:$0xff]
    %v461 = vld [vmem:[#allocation3 + $0x380] sm:$0xff]
    %v462 = vld [vmem:[#allocation3 + $0x388] sm:$0xff]
    %v463 = vld [vmem:[#allocation3 + $0x390] sm:$0xff]
    %v464 = vld [vmem:[#allocation3 + $0x398] sm:$0xff]
    %v465 = vld [vmem:[#allocation3 + $0x3a0] sm:$0xff]
    %v466 = vld [vmem:[#allocation3 + $0x3a8] sm:$0xff]
    %v467 = vld [vmem:[#allocation3 + $0x3b0] sm:$0xff]
    %v468 = vld [vmem:[#allocation3 + $0x3b8] sm:$0xff]
    %v469 = vld [vmem:[#allocation3 + $0x3c0] sm:$0xff]
    %v470 = vld [vmem:[#allocation3 + $0x3c8] sm:$0xff]
    %v471 = vld [vmem:[#allocation3 + $0x3d0] sm:$0xff]
    %v472 = vld [vmem:[#allocation3 + $0x3d8] sm:$0xff]
    %v473 = vld [vmem:[#allocation3 + $0x3e0] sm:$0xff]
    %v474 = vld [vmem:[#allocation3 + $0x3e8] sm:$0xff]
    %v475 = vld [vmem:[#allocation3 + $0x3f0] sm:$0xff]
    %v476 = vld [vmem:[#allocation3 + $0x3f8] sm:$0xff]
    %v477 = vld [vmem:[%s4] sm:$0xff]
    %v479 = vlaneseq
    %v480 = vshrl.u32 %v479, 7
    %v481 = vsub.s32 0, %v480
    %v482 = vrot.slane %v477, %v481
    %v483 = vlaneseq
    %v484 = vshrl.u32 %v483, 7
    %v485 = vsub.s32 1, %v484
    %v486 = vrot.slane %v477, %v485
    %v487 = vlaneseq
    %v488 = vshrl.u32 %v487, 7
    %v489 = vsub.s32 2, %v488
    %v490 = vrot.slane %v477, %v489
    %v491 = vlaneseq
    %v492 = vshrl.u32 %v491, 7
    %v493 = vsub.s32 3, %v492
    %v494 = vrot.slane %v477, %v493
    %v495 = vlaneseq
    %v496 = vshrl.u32 %v495, 7
    %v497 = vsub.s32 4, %v496
    %v498 = vrot.slane %v477, %v497
    %v499 = vlaneseq
    %v500 = vshrl.u32 %v499, 7
    %v501 = vsub.s32 5, %v500
    %v502 = vrot.slane %v477, %v501
    %v503 = vlaneseq
    %v504 = vshrl.u32 %v503, 7
    %v505 = vsub.s32 6, %v504
    %v506 = vrot.slane %v477, %v505
    %v507 = vlaneseq
    %v508 = vshrl.u32 %v507, 7
    %v509 = vsub.s32 7, %v508
    %v510 = vrot.slane %v477, %v509
    %v647 = vunpack.c.l.b16 %v349
    %v648 = vunpack.c.h.b16 %v349
    %v649 = vunpack.c.l.b16 %v350
    %v650 = vunpack.c.h.b16 %v350
    %v651 = vunpack.c.l.b16 %v351
    %v652 = vunpack.c.h.b16 %v351
    %v653 = vunpack.c.l.b16 %v352
    %v654 = vunpack.c.h.b16 %v352
    %v655 = vunpack.c.l.b16 %v353
    %v656 = vunpack.c.h.b16 %v353
    %v657 = vunpack.c.l.b16 %v354
    %v658 = vunpack.c.h.b16 %v354
    %v659 = vunpack.c.l.b16 %v355
    %v660 = vunpack.c.h.b16 %v355
    %v661 = vunpack.c.l.b16 %v356
    %v662 = vunpack.c.h.b16 %v356
    %v663 = vunpack.c.l.b16 %v357
    %v664 = vunpack.c.h.b16 %v357
    %v665 = vunpack.c.l.b16 %v358
    %v666 = vunpack.c.h.b16 %v358
    %v667 = vunpack.c.l.b16 %v359
    %v668 = vunpack.c.h.b16 %v359
    %v669 = vunpack.c.l.b16 %v360
    %v670 = vunpack.c.h.b16 %v360
    %v671 = vunpack.c.l.b16 %v361
    %v672 = vunpack.c.h.b16 %v361
    %v673 = vunpack.c.l.b16 %v362
    %v674 = vunpack.c.h.b16 %v362
    %v675 = vunpack.c.l.b16 %v363
    %v676 = vunpack.c.h.b16 %v363
    %v677 = vunpack.c.l.b16 %v364
    %v678 = vunpack.c.h.b16 %v364
    %v679 = vunpack.c.l.b16 %v365
    %v680 = vunpack.c.h.b16 %v365
    %v681 = vunpack.c.l.b16 %v366
    %v682 = vunpack.c.h.b16 %v366
    %v683 = vunpack.c.l.b16 %v367
    %v684 = vunpack.c.h.b16 %v367
    %v685 = vunpack.c.l.b16 %v368
    %v686 = vunpack.c.h.b16 %v368
    %v687 = vunpack.c.l.b16 %v369
    %v688 = vunpack.c.h.b16 %v369
    %v689 = vunpack.c.l.b16 %v370
    %v690 = vunpack.c.h.b16 %v370
    %v691 = vunpack.c.l.b16 %v371
    %v692 = vunpack.c.h.b16 %v371
    %v693 = vunpack.c.l.b16 %v372
    %v694 = vunpack.c.h.b16 %v372
    %v695 = vunpack.c.l.b16 %v373
    %v696 = vunpack.c.h.b16 %v373
    %v697 = vunpack.c.l.b16 %v374
    %v698 = vunpack.c.h.b16 %v374
    %v699 = vunpack.c.l.b16 %v375
    %v700 = vunpack.c.h.b16 %v375
    %v701 = vunpack.c.l.b16 %v376
    %v702 = vunpack.c.h.b16 %v376
    %v703 = vunpack.c.l.b16 %v377
    %v704 = vunpack.c.h.b16 %v377
    %v705 = vunpack.c.l.b16 %v378
    %v706 = vunpack.c.h.b16 %v378
    %v707 = vunpack.c.l.b16 %v379
    %v708 = vunpack.c.h.b16 %v379
    %v709 = vunpack.c.l.b16 %v380
    %v710 = vunpack.c.h.b16 %v380
    %v711 = vunpack.c.l.b16 %v381
    %v712 = vunpack.c.h.b16 %v381
    %v713 = vunpack.c.l.b16 %v382
    %v714 = vunpack.c.h.b16 %v382
    %v715 = vunpack.c.l.b16 %v383
    %v716 = vunpack.c.h.b16 %v383
    %v717 = vunpack.c.l.b16 %v384
    %v718 = vunpack.c.h.b16 %v384
    %v719 = vunpack.c.l.b16 %v385
    %v720 = vunpack.c.h.b16 %v385
    %v721 = vunpack.c.l.b16 %v386
    %v722 = vunpack.c.h.b16 %v386
    %v723 = vunpack.c.l.b16 %v387
    %v724 = vunpack.c.h.b16 %v387
    %v725 = vunpack.c.l.b16 %v388
    %v726 = vunpack.c.h.b16 %v388
    %v727 = vunpack.c.l.b16 %v389
    %v728 = vunpack.c.h.b16 %v389
    %v729 = vunpack.c.l.b16 %v390
    %v730 = vunpack.c.h.b16 %v390
    %v731 = vunpack.c.l.b16 %v391
    %v732 = vunpack.c.h.b16 %v391
    %v733 = vunpack.c.l.b16 %v392
    %v734 = vunpack.c.h.b16 %v392
    %v735 = vunpack.c.l.b16 %v393
    %v736 = vunpack.c.h.b16 %v393
    %v737 = vunpack.c.l.b16 %v394
    %v738 = vunpack.c.h.b16 %v394
    %v739 = vunpack.c.l.b16 %v395
    %v740 = vunpack.c.h.b16 %v395
    %v741 = vunpack.c.l.b16 %v396
    %v742 = vunpack.c.h.b16 %v396
    %v743 = vunpack.c.l.b16 %v397
    %v744 = vunpack.c.h.b16 %v397
    %v745 = vunpack.c.l.b16 %v398
    %v746 = vunpack.c.h.b16 %v398
    %v747 = vunpack.c.l.b16 %v399
    %v748 = vunpack.c.h.b16 %v399
    %v749 = vunpack.c.l.b16 %v400
    %v750 = vunpack.c.h.b16 %v400
    %v751 = vunpack.c.l.b16 %v401
    %v752 = vunpack.c.h.b16 %v401
    %v753 = vunpack.c.l.b16 %v402
    %v754 = vunpack.c.h.b16 %v402
    %v755 = vunpack.c.l.b16 %v403
    %v756 = vunpack.c.h.b16 %v403
    %v757 = vunpack.c.l.b16 %v404
    %v758 = vunpack.c.h.b16 %v404
    %v759 = vunpack.c.l.b16 %v405
    %v760 = vunpack.c.h.b16 %v405
    %v761 = vunpack.c.l.b16 %v406
    %v762 = vunpack.c.h.b16 %v406
    %v763 = vunpack.c.l.b16 %v407
    %v764 = vunpack.c.h.b16 %v407
    %v765 = vunpack.c.l.b16 %v408
    %v766 = vunpack.c.h.b16 %v408
    %v767 = vunpack.c.l.b16 %v409
    %v768 = vunpack.c.h.b16 %v409
    %v769 = vunpack.c.l.b16 %v410
    %v770 = vunpack.c.h.b16 %v410
    %v771 = vunpack.c.l.b16 %v411
    %v772 = vunpack.c.h.b16 %v411
    %v773 = vunpack.c.l.b16 %v412
    %v774 = vunpack.c.h.b16 %v412
    %v775 = vunpack.c.l.b16 %v413
    %v776 = vunpack.c.h.b16 %v413
    %v777 = vunpack.c.l.b16 %v414
    %v778 = vunpack.c.h.b16 %v414
    %v779 = vunpack.c.l.b16 %v415
    %v780 = vunpack.c.h.b16 %v415
    %v781 = vunpack.c.l.b16 %v416
    %v782 = vunpack.c.h.b16 %v416
    %v783 = vunpack.c.l.b16 %v417
    %v784 = vunpack.c.h.b16 %v417
    %v785 = vunpack.c.l.b16 %v418
    %v786 = vunpack.c.h.b16 %v418
    %v787 = vunpack.c.l.b16 %v419
    %v788 = vunpack.c.h.b16 %v419
    %v789 = vunpack.c.l.b16 %v420
    %v790 = vunpack.c.h.b16 %v420
    %v791 = vunpack.c.l.b16 %v421
    %v792 = vunpack.c.h.b16 %v421
    %v793 = vunpack.c.l.b16 %v422
    %v794 = vunpack.c.h.b16 %v422
    %v795 = vunpack.c.l.b16 %v423
    %v796 = vunpack.c.h.b16 %v423
    %v797 = vunpack.c.l.b16 %v424
    %v798 = vunpack.c.h.b16 %v424
    %v799 = vunpack.c.l.b16 %v425
    %v800 = vunpack.c.h.b16 %v425
    %v801 = vunpack.c.l.b16 %v426
    %v802 = vunpack.c.h.b16 %v426
    %v803 = vunpack.c.l.b16 %v427
    %v804 = vunpack.c.h.b16 %v427
    %v805 = vunpack.c.l.b16 %v428
    %v806 = vunpack.c.h.b16 %v428
    %v807 = vunpack.c.l.b16 %v429
    %v808 = vunpack.c.h.b16 %v429
    %v809 = vunpack.c.l.b16 %v430
    %v810 = vunpack.c.h.b16 %v430
    %v811 = vunpack.c.l.b16 %v431
    %v812 = vunpack.c.h.b16 %v431
    %v813 = vunpack.c.l.b16 %v432
    %v814 = vunpack.c.h.b16 %v432
    %v815 = vunpack.c.l.b16 %v433
    %v816 = vunpack.c.h.b16 %v433
    %v817 = vunpack.c.l.b16 %v434
    %v818 = vunpack.c.h.b16 %v434
    %v819 = vunpack.c.l.b16 %v435
    %v820 = vunpack.c.h.b16 %v435
    %v821 = vunpack.c.l.b16 %v436
    %v822 = vunpack.c.h.b16 %v436
    %v823 = vunpack.c.l.b16 %v437
    %v824 = vunpack.c.h.b16 %v437
    %v825 = vunpack.c.l.b16 %v438
    %v826 = vunpack.c.h.b16 %v438
    %v827 = vunpack.c.l.b16 %v439
    %v828 = vunpack.c.h.b16 %v439
    %v829 = vunpack.c.l.b16 %v440
    %v830 = vunpack.c.h.b16 %v440
    %v831 = vunpack.c.l.b16 %v441
    %v832 = vunpack.c.h.b16 %v441
    %v833 = vunpack.c.l.b16 %v442
    %v834 = vunpack.c.h.b16 %v442
    %v835 = vunpack.c.l.b16 %v443
    %v836 = vunpack.c.h.b16 %v443
    %v837 = vunpack.c.l.b16 %v444
    %v838 = vunpack.c.h.b16 %v444
    %v839 = vunpack.c.l.b16 %v445
    %v840 = vunpack.c.h.b16 %v445
    %v841 = vunpack.c.l.b16 %v446
    %v842 = vunpack.c.h.b16 %v446
    %v843 = vunpack.c.l.b16 %v447
    %v844 = vunpack.c.h.b16 %v447
    %v845 = vunpack.c.l.b16 %v448
    %v846 = vunpack.c.h.b16 %v448
    %v847 = vunpack.c.l.b16 %v449
    %v848 = vunpack.c.h.b16 %v449
    %v849 = vunpack.c.l.b16 %v450
    %v850 = vunpack.c.h.b16 %v450
    %v851 = vunpack.c.l.b16 %v451
    %v852 = vunpack.c.h.b16 %v451
    %v853 = vunpack.c.l.b16 %v452
    %v854 = vunpack.c.h.b16 %v452
    %v855 = vunpack.c.l.b16 %v453
    %v856 = vunpack.c.h.b16 %v453
    %v857 = vunpack.c.l.b16 %v454
    %v858 = vunpack.c.h.b16 %v454
    %v859 = vunpack.c.l.b16 %v455
    %v860 = vunpack.c.h.b16 %v455
    %v861 = vunpack.c.l.b16 %v456
    %v862 = vunpack.c.h.b16 %v456
    %v863 = vunpack.c.l.b16 %v457
    %v864 = vunpack.c.h.b16 %v457
    %v865 = vunpack.c.l.b16 %v458
    %v866 = vunpack.c.h.b16 %v458
    %v867 = vunpack.c.l.b16 %v459
    %v868 = vunpack.c.h.b16 %v459
    %v869 = vunpack.c.l.b16 %v460
    %v870 = vunpack.c.h.b16 %v460
    %v871 = vunpack.c.l.b16 %v461
    %v872 = vunpack.c.h.b16 %v461
    %v873 = vunpack.c.l.b16 %v462
    %v874 = vunpack.c.h.b16 %v462
    %v875 = vunpack.c.l.b16 %v463
    %v876 = vunpack.c.h.b16 %v463
    %v877 = vunpack.c.l.b16 %v464
    %v878 = vunpack.c.h.b16 %v464
    %v879 = vunpack.c.l.b16 %v465
    %v880 = vunpack.c.h.b16 %v465
    %v881 = vunpack.c.l.b16 %v466
    %v882 = vunpack.c.h.b16 %v466
    %v883 = vunpack.c.l.b16 %v467
    %v884 = vunpack.c.h.b16 %v467
    %v885 = vunpack.c.l.b16 %v468
    %v886 = vunpack.c.h.b16 %v468
    %v887 = vunpack.c.l.b16 %v469
    %v888 = vunpack.c.h.b16 %v469
    %v889 = vunpack.c.l.b16 %v470
    %v890 = vunpack.c.h.b16 %v470
    %v891 = vunpack.c.l.b16 %v471
    %v892 = vunpack.c.h.b16 %v471
    %v893 = vunpack.c.l.b16 %v472
    %v894 = vunpack.c.h.b16 %v472
    %v895 = vunpack.c.l.b16 %v473
    %v896 = vunpack.c.h.b16 %v473
    %v897 = vunpack.c.l.b16 %v474
    %v898 = vunpack.c.h.b16 %v474
    %v899 = vunpack.c.l.b16 %v475
    %v900 = vunpack.c.h.b16 %v475
    %v901 = vunpack.c.l.b16 %v476
    %v902 = vunpack.c.h.b16 %v476
    %v903 = vpack.c.b16 %v655, %v647
    %v904 = vpack.c.b16 %v656, %v648
    %v905 = vpack.c.b16 %v657, %v649
    %v906 = vpack.c.b16 %v658, %v650
    %v907 = vpack.c.b16 %v659, %v651
    %v908 = vpack.c.b16 %v660, %v652
    %v909 = vpack.c.b16 %v661, %v653
    %v910 = vpack.c.b16 %v662, %v654
    %v911 = vpack.c.b16 %v671, %v663
    %v912 = vpack.c.b16 %v672, %v664
    %v913 = vpack.c.b16 %v673, %v665
    %v914 = vpack.c.b16 %v674, %v666
    %v915 = vpack.c.b16 %v675, %v667
    %v916 = vpack.c.b16 %v676, %v668
    %v917 = vpack.c.b16 %v677, %v669
    %v918 = vpack.c.b16 %v678, %v670
    %v919 = vpack.c.b16 %v687, %v679
    %v920 = vpack.c.b16 %v688, %v680
    %v921 = vpack.c.b16 %v689, %v681
    %v922 = vpack.c.b16 %v690, %v682
    %v923 = vpack.c.b16 %v691, %v683
    %v924 = vpack.c.b16 %v692, %v684
    %v925 = vpack.c.b16 %v693, %v685
    %v926 = vpack.c.b16 %v694, %v686
    %v927 = vpack.c.b16 %v703, %v695
    %v928 = vpack.c.b16 %v704, %v696
    %v929 = vpack.c.b16 %v705, %v697
    %v930 = vpack.c.b16 %v706, %v698
    %v931 = vpack.c.b16 %v707, %v699
    %v932 = vpack.c.b16 %v708, %v700
    %v933 = vpack.c.b16 %v709, %v701
    %v934 = vpack.c.b16 %v710, %v702
    %v935 = vpack.c.b16 %v719, %v711
    %v936 = vpack.c.b16 %v720, %v712
    %v937 = vpack.c.b16 %v721, %v713
    %v938 = vpack.c.b16 %v722, %v714
    %v939 = vpack.c.b16 %v723, %v715
    %v940 = vpack.c.b16 %v724, %v716
    %v941 = vpack.c.b16 %v725, %v717
    %v942 = vpack.c.b16 %v726, %v718
    %v943 = vpack.c.b16 %v735, %v727
    %v944 = vpack.c.b16 %v736, %v728
    %v945 = vpack.c.b16 %v737, %v729
    %v946 = vpack.c.b16 %v738, %v730
    %v947 = vpack.c.b16 %v739, %v731
    %v948 = vpack.c.b16 %v740, %v732
    %v949 = vpack.c.b16 %v741, %v733
    %v950 = vpack.c.b16 %v742, %v734
    %v951 = vpack.c.b16 %v751, %v743
    %v952 = vpack.c.b16 %v752, %v744
    %v953 = vpack.c.b16 %v753, %v745
    %v954 = vpack.c.b16 %v754, %v746
    %v955 = vpack.c.b16 %v755, %v747
    %v956 = vpack.c.b16 %v756, %v748
    %v957 = vpack.c.b16 %v757, %v749
    %v958 = vpack.c.b16 %v758, %v750
    %v959 = vpack.c.b16 %v767, %v759
    %v960 = vpack.c.b16 %v768, %v760
    %v961 = vpack.c.b16 %v769, %v761
    %v962 = vpack.c.b16 %v770, %v762
    %v963 = vpack.c.b16 %v771, %v763
    %v964 = vpack.c.b16 %v772, %v764
    %v965 = vpack.c.b16 %v773, %v765
    %v966 = vpack.c.b16 %v774, %v766
    %v967 = vpack.c.b16 %v783, %v775
    %v968 = vpack.c.b16 %v784, %v776
    %v969 = vpack.c.b16 %v785, %v777
    %v970 = vpack.c.b16 %v786, %v778
    %v971 = vpack.c.b16 %v787, %v779
    %v972 = vpack.c.b16 %v788, %v780
    %v973 = vpack.c.b16 %v789, %v781
    %v974 = vpack.c.b16 %v790, %v782
    %v975 = vpack.c.b16 %v799, %v791
    %v976 = vpack.c.b16 %v800, %v792
    %v977 = vpack.c.b16 %v801, %v793
    %v978 = vpack.c.b16 %v802, %v794
    %v979 = vpack.c.b16 %v803, %v795
    %v980 = vpack.c.b16 %v804, %v796
    %v981 = vpack.c.b16 %v805, %v797
    %v982 = vpack.c.b16 %v806, %v798
    %v983 = vpack.c.b16 %v815, %v807
    %v984 = vpack.c.b16 %v816, %v808
    %v985 = vpack.c.b16 %v817, %v809
    %v986 = vpack.c.b16 %v818, %v810
    %v987 = vpack.c.b16 %v819, %v811
    %v988 = vpack.c.b16 %v820, %v812
    %v989 = vpack.c.b16 %v821, %v813
    %v990 = vpack.c.b16 %v822, %v814
    %v991 = vpack.c.b16 %v831, %v823
    %v992 = vpack.c.b16 %v832, %v824
    %v993 = vpack.c.b16 %v833, %v825
    %v994 = vpack.c.b16 %v834, %v826
    %v995 = vpack.c.b16 %v835, %v827
    %v996 = vpack.c.b16 %v836, %v828
    %v997 = vpack.c.b16 %v837, %v829
    %v998 = vpack.c.b16 %v838, %v830
    %v999 = vpack.c.b16 %v847, %v839
    %v1000 = vpack.c.b16 %v848, %v840
    %v1001 = vpack.c.b16 %v849, %v841
    %v1002 = vpack.c.b16 %v850, %v842
    %v1003 = vpack.c.b16 %v851, %v843
    %v1004 = vpack.c.b16 %v852, %v844
    %v1005 = vpack.c.b16 %v853, %v845
    %v1006 = vpack.c.b16 %v854, %v846
    %v1007 = vpack.c.b16 %v863, %v855
    %v1008 = vpack.c.b16 %v864, %v856
    %v1009 = vpack.c.b16 %v865, %v857
    %v1010 = vpack.c.b16 %v866, %v858
    %v1011 = vpack.c.b16 %v867, %v859
    %v1012 = vpack.c.b16 %v868, %v860
    %v1013 = vpack.c.b16 %v869, %v861
    %v1014 = vpack.c.b16 %v870, %v862
    %v1015 = vpack.c.b16 %v879, %v871
    %v1016 = vpack.c.b16 %v880, %v872
    %v1017 = vpack.c.b16 %v881, %v873
    %v1018 = vpack.c.b16 %v882, %v874
    %v1019 = vpack.c.b16 %v883, %v875
    %v1020 = vpack.c.b16 %v884, %v876
    %v1021 = vpack.c.b16 %v885, %v877
    %v1022 = vpack.c.b16 %v886, %v878
    %v1023 = vpack.c.b16 %v895, %v887
    %v1024 = vpack.c.b16 %v896, %v888
    %v1025 = vpack.c.b16 %v897, %v889
    %v1026 = vpack.c.b16 %v898, %v890
    %v1027 = vpack.c.b16 %v899, %v891
    %v1028 = vpack.c.b16 %v900, %v892
    %v1029 = vpack.c.b16 %v901, %v893
    %v1030 = vpack.c.b16 %v902, %v894
    %1159 = vmatprep.subr.bf16.mxu0 %v904
    %1160 = vmatpush1.bf16.msra.mxu0 %v903
    %1161 = vmatprep.subr.bf16.mxu0 %v912
    %1162 = vmatpush1.bf16.msra.mxu0 %v911
    %1163 = vmatprep.subr.bf16.mxu0 %v920
    %1164 = vmatpush1.bf16.msra.mxu0 %v919
    %1165 = vmatprep.subr.bf16.mxu0 %v928
    %1166 = vmatpush1.bf16.msra.mxu0 %v927
    %1167 = vmatprep.subr.bf16.mxu0 %v936
    %1168 = vmatpush1.bf16.msra.mxu0 %v935
    %1169 = vmatprep.subr.bf16.mxu0 %v944
    %1170 = vmatpush1.bf16.msra.mxu0 %v943
    %1171 = vmatprep.subr.bf16.mxu0 %v952
    %1172 = vmatpush1.bf16.msra.mxu0 %v951
    %1173 = vmatprep.subr.bf16.mxu0 %v960
    %1174 = vmatpush1.bf16.msra.mxu0 %v959
    %1175 = vmatprep.subr.bf16.mxu0 %v968
    %1176 = vmatpush1.bf16.msra.mxu0 %v967
    %1177 = vmatprep.subr.bf16.mxu0 %v976
    %1178 = vmatpush1.bf16.msra.mxu0 %v975
    %1179 = vmatprep.subr.bf16.mxu0 %v984
    %1180 = vmatpush1.bf16.msra.mxu0 %v983
    %1181 = vmatprep.subr.bf16.mxu0 %v992
    %1182 = vmatpush1.bf16.msra.mxu0 %v991
    %1183 = vmatprep.subr.bf16.mxu0 %v1000
    %1184 = vmatpush1.bf16.msra.mxu0 %v999
    %1185 = vmatprep.subr.bf16.mxu0 %v1008
    %1186 = vmatpush1.bf16.msra.mxu0 %v1007
    %1187 = vmatprep.subr.bf16.mxu0 %v1016
    %1188 = vmatpush1.bf16.msra.mxu0 %v1015
    %1189 = vmatprep.subr.bf16.mxu0 %v1024
    %1190 = vmatpush1.bf16.msra.mxu0 %v1023
    %1191 = vmatprep.mubr.bf16.mxu0 %v342
    %1192 = vmatmul.mubr.bf16.gmra.mrb[0].mxu0 %v341
    %v1193 = vpop.f32.mrb[0].mxu0
    %v1194 = vadd.f32 %v482, %v1193
    %v1195 = vpop.f32.mrb[0].mxu0
    %v1196 = vadd.f32 %v486, %v1195
    %v1197 = vpop.f32.mrb[0].mxu0
    %v1198 = vadd.f32 %v482, %v1197
    %v1199 = vpop.f32.mrb[0].mxu0
    %v1200 = vadd.f32 %v486, %v1199
    %1201 = vmatprep.mubr.bf16.mxu0 %v344
    %1202 = vmatmul.mubr.bf16.gmra.mrb[0].mxu0 %v343
    %v1203 = vpop.f32.mrb[0].mxu0
    %v1204 = vadd.f32 %v482, %v1203
    %v1205 = vpop.f32.mrb[0].mxu0
    %v1206 = vadd.f32 %v486, %v1205
    %v1207 = vpop.f32.mrb[0].mxu0
    %v1208 = vadd.f32 %v482, %v1207
    %v1209 = vpop.f32.mrb[0].mxu0
    %v1210 = vadd.f32 %v486, %v1209
    %1211 = vmatprep.mubr.bf16.mxu0 %v346
    %1212 = vmatmul.mubr.bf16.gmra.mrb[0].mxu0 %v345
    %v1213 = vpop.f32.mrb[0].mxu0
    %v1214 = vadd.f32 %v482, %v1213
    %v1215 = vpop.f32.mrb[0].mxu0
    %v1216 = vadd.f32 %v486, %v1215
    %v1217 = vpop.f32.mrb[0].mxu0
    %v1218 = vadd.f32 %v482, %v1217
    %v1219 = vpop.f32.mrb[0].mxu0
    %v1220 = vadd.f32 %v486, %v1219
    %1221 = vmatprep.mubr.bf16.mxu0 %v348
    %1222 = vmatmul.mubr.bf16.gmra.mrb[0].mxu0 %v347
    %v1223 = vpop.f32.mrb[0].mxu0
    %v1224 = vadd.f32 %v482, %v1223
    %v1225 = vpop.f32.mrb[0].mxu0
    %v1226 = vadd.f32 %v486, %v1225
    %v1227 = vpop.f32.mrb[0].mxu0
    %v1228 = vadd.f32 %v482, %v1227
    %v1229 = vpop.f32.mrb[0].mxu0
    %v1230 = vadd.f32 %v486, %v1229
    %1231 = vdwg.mxu0
    %1232 = vmatprep.subr.bf16.mxu0 %v906
    %1233 = vmatpush1.bf16.msra.mxu0 %v905
    %1234 = vmatprep.subr.bf16.mxu0 %v914
    %1235 = vmatpush1.bf16.msra.mxu0 %v913
    %1236 = vmatprep.subr.bf16.mxu0 %v922
    %1237 = vmatpush1.bf16.msra.mxu0 %v921
    %1238 = vmatprep.subr.bf16.mxu0 %v930
    %1239 = vmatpush1.bf16.msra.mxu0 %v929
    %1240 = vmatprep.subr.bf16.mxu0 %v938
    %1241 = vmatpush1.bf16.msra.mxu0 %v937
    %1242 = vmatprep.subr.bf16.mxu0 %v946
    %1243 = vmatpush1.bf16.msra.mxu0 %v945
    %1244 = vmatprep.subr.bf16.mxu0 %v954
    %1245 = vmatpush1.bf16.msra.mxu0 %v953
    %1246 = vmatprep.subr.bf16.mxu0 %v962
    %1247 = vmatpush1.bf16.msra.mxu0 %v961
    %1248 = vmatprep.subr.bf16.mxu0 %v970
    %1249 = vmatpush1.bf16.msra.mxu0 %v969
    %1250 = vmatprep.subr.bf16.mxu0 %v978
    %1251 = vmatpush1.bf16.msra.mxu0 %v977
    %1252 = vmatprep.subr.bf16.mxu0 %v986
    %1253 = vmatpush1.bf16.msra.mxu0 %v985
    %1254 = vmatprep.subr.bf16.mxu0 %v994
    %1255 = vmatpush1.bf16.msra.mxu0 %v993
    %1256 = vmatprep.subr.bf16.mxu0 %v1002
    %1257 = vmatpush1.bf16.msra.mxu0 %v1001
    %1258 = vmatprep.subr.bf16.mxu0 %v1010
    %1259 = vmatpush1.bf16.msra.mxu0 %v1009
    %1260 = vmatprep.subr.bf16.mxu0 %v1018
    %1261 = vmatpush1.bf16.msra.mxu0 %v1017
    %1262 = vmatprep.subr.bf16.mxu0 %v1026
    %1263 = vmatpush1.bf16.msra.mxu0 %v1025
    %1264 = vmatprep.mubr.bf16.mxu0 %v342
    %1265 = vmatmul.mubr.bf16.gmra.mrb[0].mxu0 %v341
    %v1266 = vpop.f32.mrb[0].mxu0
    %v1267 = vadd.f32 %v490, %v1266
    %v1268 = vpop.f32.mrb[0].mxu0
    %v1269 = vadd.f32 %v494, %v1268
    %v1270 = vpop.f32.mrb[0].mxu0
    %v1271 = vadd.f32 %v490, %v1270
    %v1272 = vpop.f32.mrb[0].mxu0
    %v1273 = vadd.f32 %v494, %v1272
    %1274 = vmatprep.mubr.bf16.mxu0 %v344
    %1275 = vmatmul.mubr.bf16.gmra.mrb[0].mxu0 %v343
    %v1276 = vpop.f32.mrb[0].mxu0
    %v1277 = vadd.f32 %v490, %v1276
    %v1278 = vpop.f32.mrb[0].mxu0
    %v1279 = vadd.f32 %v494, %v1278
    %v1280 = vpop.f32.mrb[0].mxu0
    %v1281 = vadd.f32 %v490, %v1280
    %v1282 = vpop.f32.mrb[0].mxu0
    %v1283 = vadd.f32 %v494, %v1282
    %1284 = vmatprep.mubr.bf16.mxu0 %v346
    %1285 = vmatmul.mubr.bf16.gmra.mrb[0].mxu0 %v345
    %v1286 = vpop.f32.mrb[0].mxu0
    %v1287 = vadd.f32 %v490, %v1286
    %v1288 = vpop.f32.mrb[0].mxu0
    %v1289 = vadd.f32 %v494, %v1288
    %v1290 = vpop.f32.mrb[0].mxu0
    %v1291 = vadd.f32 %v490, %v1290
    %v1292 = vpop.f32.mrb[0].mxu0
    %v1293 = vadd.f32 %v494, %v1292
    %1294 = vmatprep.mubr.bf16.mxu0 %v348
    %1295 = vmatmul.mubr.bf16.gmra.mrb[0].mxu0 %v347
    %v1296 = vpop.f32.mrb[0].mxu0
    %v1297 = vadd.f32 %v490, %v1296
    %v1298 = vpop.f32.mrb[0].mxu0
    %v1299 = vadd.f32 %v494, %v1298
    %v1300 = vpop.f32.mrb[0].mxu0
    %v1301 = vadd.f32 %v490, %v1300
    %v1302 = vpop.f32.mrb[0].mxu0
    %v1303 = vadd.f32 %v494, %v1302
    %1304 = vdwg.mxu0
    %1305 = vmatprep.subr.bf16.mxu0 %v908
    %1306 = vmatpush1.bf16.msra.mxu0 %v907
    %1307 = vmatprep.subr.bf16.mxu0 %v916
    %1308 = vmatpush1.bf16.msra.mxu0 %v915
    %1309 = vmatprep.subr.bf16.mxu0 %v924
    %1310 = vmatpush1.bf16.msra.mxu0 %v923
    %1311 = vmatprep.subr.bf16.mxu0 %v932
    %1312 = vmatpush1.bf16.msra.mxu0 %v931
    %1313 = vmatprep.subr.bf16.mxu0 %v940
    %1314 = vmatpush1.bf16.msra.mxu0 %v939
    %1315 = vmatprep.subr.bf16.mxu0 %v948
    %1316 = vmatpush1.bf16.msra.mxu0 %v947
    %1317 = vmatprep.subr.bf16.mxu0 %v956
    %1318 = vmatpush1.bf16.msra.mxu0 %v955
    %1319 = vmatprep.subr.bf16.mxu0 %v964
    %1320 = vmatpush1.bf16.msra.mxu0 %v963
    %1321 = vmatprep.subr.bf16.mxu0 %v972
    %1322 = vmatpush1.bf16.msra.mxu0 %v971
    %1323 = vmatprep.subr.bf16.mxu0 %v980
    %1324 = vmatpush1.bf16.msra.mxu0 %v979
    %1325 = vmatprep.subr.bf16.mxu0 %v988
    %1326 = vmatpush1.bf16.msra.mxu0 %v987
    %1327 = vmatprep.subr.bf16.mxu0 %v996
    %1328 = vmatpush1.bf16.msra.mxu0 %v995
    %1329 = vmatprep.subr.bf16.mxu0 %v1004
    %1330 = vmatpush1.bf16.msra.mxu0 %v1003
    %1331 = vmatprep.subr.bf16.mxu0 %v1012
    %1332 = vmatpush1.bf16.msra.mxu0 %v1011
    %1333 = vmatprep.subr.bf16.mxu0 %v1020
    %1334 = vmatpush1.bf16.msra.mxu0 %v1019
    %1335 = vmatprep.subr.bf16.mxu0 %v1028
    %1336 = vmatpush1.bf16.msra.mxu0 %v1027
    %1337 = vmatprep.mubr.bf16.mxu0 %v342
    %1338 = vmatmul.mubr.bf16.gmra.mrb[0].mxu0 %v341
    %v1339 = vpop.f32.mrb[0].mxu0
    %v1340 = vadd.f32 %v498, %v1339
    %v1341 = vpop.f32.mrb[0].mxu0
    %v1342 = vadd.f32 %v502, %v1341
    %v1343 = vpop.f32.mrb[0].mxu0
    %v1344 = vadd.f32 %v498, %v1343
    %v1345 = vpop.f32.mrb[0].mxu0
    %v1346 = vadd.f32 %v502, %v1345
    %1347 = vmatprep.mubr.bf16.mxu0 %v344
    %1348 = vmatmul.mubr.bf16.gmra.mrb[0].mxu0 %v343
    %v1349 = vpop.f32.mrb[0].mxu0
    %v1350 = vadd.f32 %v498, %v1349
    %v1351 = vpop.f32.mrb[0].mxu0
    %v1352 = vadd.f32 %v502, %v1351
    %v1353 = vpop.f32.mrb[0].mxu0
    %v1354 = vadd.f32 %v498, %v1353
    %v1355 = vpop.f32.mrb[0].mxu0
    %v1356 = vadd.f32 %v502, %v1355
    %1357 = vmatprep.mubr.bf16.mxu0 %v346
    %1358 = vmatmul.mubr.bf16.gmra.mrb[0].mxu0 %v345
    %v1359 = vpop.f32.mrb[0].mxu0
    %v1360 = vadd.f32 %v498, %v1359
    %v1361 = vpop.f32.mrb[0].mxu0
    %v1362 = vadd.f32 %v502, %v1361
    %v1363 = vpop.f32.mrb[0].mxu0
    %v1364 = vadd.f32 %v498, %v1363
    %v1365 = vpop.f32.mrb[0].mxu0
    %v1366 = vadd.f32 %v502, %v1365
    %1367 = vmatprep.mubr.bf16.mxu0 %v348
    %1368 = vmatmul.mubr.bf16.gmra.mrb[0].mxu0 %v347
    %v1369 = vpop.f32.mrb[0].mxu0
    %v1370 = vadd.f32 %v498, %v1369
    %v1371 = vpop.f32.mrb[0].mxu0
    %v1372 = vadd.f32 %v502, %v1371
    %v1373 = vpop.f32.mrb[0].mxu0
    %v1374 = vadd.f32 %v498, %v1373
    %v1375 = vpop.f32.mrb[0].mxu0
    %v1376 = vadd.f32 %v502, %v1375
    %1377 = vdwg.mxu0
    %1378 = vmatprep.subr.bf16.mxu0 %v910
    %1379 = vmatpush1.bf16.msra.mxu0 %v909
    %1380 = vmatprep.subr.bf16.mxu0 %v918
    %1381 = vmatpush1.bf16.msra.mxu0 %v917
    %1382 = vmatprep.subr.bf16.mxu0 %v926
    %1383 = vmatpush1.bf16.msra.mxu0 %v925
    %1384 = vmatprep.subr.bf16.mxu0 %v934
    %1385 = vmatpush1.bf16.msra.mxu0 %v933
    %1386 = vmatprep.subr.bf16.mxu0 %v942
    %1387 = vmatpush1.bf16.msra.mxu0 %v941
    %1388 = vmatprep.subr.bf16.mxu0 %v950
    %1389 = vmatpush1.bf16.msra.mxu0 %v949
    %1390 = vmatprep.subr.bf16.mxu0 %v958
    %1391 = vmatpush1.bf16.msra.mxu0 %v957
    %1392 = vmatprep.subr.bf16.mxu0 %v966
    %1393 = vmatpush1.bf16.msra.mxu0 %v965
    %1394 = vmatprep.subr.bf16.mxu0 %v974
    %1395 = vmatpush1.bf16.msra.mxu0 %v973
    %1396 = vmatprep.subr.bf16.mxu0 %v982
    %1397 = vmatpush1.bf16.msra.mxu0 %v981
    %1398 = vmatprep.subr.bf16.mxu0 %v990
    %1399 = vmatpush1.bf16.msra.mxu0 %v989
    %1400 = vmatprep.subr.bf16.mxu0 %v998
    %1401 = vmatpush1.bf16.msra.mxu0 %v997
    %1402 = vmatprep.subr.bf16.mxu0 %v1006
    %1403 = vmatpush1.bf16.msra.mxu0 %v1005
    %1404 = vmatprep.subr.bf16.mxu0 %v1014
    %1405 = vmatpush1.bf16.msra.mxu0 %v1013
    %1406 = vmatprep.subr.bf16.mxu0 %v1022
    %1407 = vmatpush1.bf16.msra.mxu0 %v1021
    %1408 = vmatprep.subr.bf16.mxu0 %v1030
    %1409 = vmatpush1.bf16.msra.mxu0 %v1029
    %1410 = vmatprep.mubr.bf16.mxu0 %v342
    %1411 = vmatmul.mubr.bf16.gmra.mrb[0].mxu0 %v341
    %v1412 = vpop.f32.mrb[0].mxu0
    %v1413 = vadd.f32 %v506, %v1412
    %v1414 = vpop.f32.mrb[0].mxu0
    %v1415 = vadd.f32 %v510, %v1414
    %v1416 = vpop.f32.mrb[0].mxu0
    %v1417 = vadd.f32 %v506, %v1416
    %v1418 = vpop.f32.mrb[0].mxu0
    %v1419 = vadd.f32 %v510, %v1418
    %1420 = vmatprep.mubr.bf16.mxu0 %v344
    %1421 = vmatmul.mubr.bf16.gmra.mrb[0].mxu0 %v343
    %v1422 = vpop.f32.mrb[0].mxu0
    %v1423 = vadd.f32 %v506, %v1422
    %v1424 = vpop.f32.mrb[0].mxu0
    %v1425 = vadd.f32 %v510, %v1424
    %v1426 = vpop.f32.mrb[0].mxu0
    %v1427 = vadd.f32 %v506, %v1426
    %v1428 = vpop.f32.mrb[0].mxu0
    %v1429 = vadd.f32 %v510, %v1428
    %1430 = vmatprep.mubr.bf16.mxu0 %v346
    %1431 = vmatmul.mubr.bf16.gmra.mrb[0].mxu0 %v345
    %v1432 = vpop.f32.mrb[0].mxu0
    %v1433 = vadd.f32 %v506, %v1432
    %v1434 = vpop.f32.mrb[0].mxu0
    %v1435 = vadd.f32 %v510, %v1434
    %v1436 = vpop.f32.mrb[0].mxu0
    %v1437 = vadd.f32 %v506, %v1436
    %v1438 = vpop.f32.mrb[0].mxu0
    %v1439 = vadd.f32 %v510, %v1438
    %1440 = vmatprep.mubr.bf16.mxu0 %v348
    %1441 = vmatmul.mubr.bf16.gmra.mrb[0].mxu0 %v347
    %v1442 = vpop.f32.mrb[0].mxu0
    %v1443 = vadd.f32 %v506, %v1442
    %v1444 = vpop.f32.mrb[0].mxu0
    %v1445 = vadd.f32 %v510, %v1444
    %v1446 = vpop.f32.mrb[0].mxu0
    %v1447 = vadd.f32 %v506, %v1446
    %v1448 = vpop.f32.mrb[0].mxu0
    %v1449 = vadd.f32 %v510, %v1448
    %1450 = vdwg.mxu0
    %1451 = vst [vmem:[#allocation2] sm:$0xff] %v1194
    %1452 = vst [vmem:[#allocation2 + $0x8] sm:$0xff] %v1196
    %1453 = vst [vmem:[#allocation2 + $0x10] sm:$0xff] %v1267
    %1454 = vst [vmem:[#allocation2 + $0x18] sm:$0xff] %v1269
    %1455 = vst [vmem:[#allocation2 + $0x20] sm:$0xff] %v1340
    %1456 = vst [vmem:[#allocation2 + $0x28] sm:$0xff] %v1342
    %1457 = vst [vmem:[#allocation2 + $0x30] sm:$0xff] %v1413
    %1458 = vst [vmem:[#allocation2 + $0x38] sm:$0xff] %v1415
    %1459 = vst [vmem:[#allocation2 + $0x40] sm:$0xff] %v1198
    %1460 = vst [vmem:[#allocation2 + $0x48] sm:$0xff] %v1200
    %1461 = vst [vmem:[#allocation2 + $0x50] sm:$0xff] %v1271
    %1462 = vst [vmem:[#allocation2 + $0x58] sm:$0xff] %v1273
    %1463 = vst [vmem:[#allocation2 + $0x60] sm:$0xff] %v1344
    %1464 = vst [vmem:[#allocation2 + $0x68] sm:$0xff] %v1346
    %1465 = vst [vmem:[#allocation2 + $0x70] sm:$0xff] %v1417
    %1466 = vst [vmem:[#allocation2 + $0x78] sm:$0xff] %v1419
    %1467 = vst [vmem:[#allocation2 + $0x80] sm:$0xff] %v1204
    %1468 = vst [vmem:[#allocation2 + $0x88] sm:$0xff] %v1206
    %1469 = vst [vmem:[#allocation2 + $0x90] sm:$0xff] %v1277
    %1470 = vst [vmem:[#allocation2 + $0x98] sm:$0xff] %v1279
    %1471 = vst [vmem:[#allocation2 + $0xa0] sm:$0xff] %v1350
    %1472 = vst [vmem:[#allocation2 + $0xa8] sm:$0xff] %v1352
    %1473 = vst [vmem:[#allocation2 + $0xb0] sm:$0xff] %v1423
    %1474 = vst [vmem:[#allocation2 + $0xb8] sm:$0xff] %v1425
    %1475 = vst [vmem:[#allocation2 + $0xc0] sm:$0xff] %v1208
    %1476 = vst [vmem:[#allocation2 + $0xc8] sm:$0xff] %v1210
    %1477 = vst [vmem:[#allocation2 + $0xd0] sm:$0xff] %v1281
    %1478 = vst [vmem:[#allocation2 + $0xd8] sm:$0xff] %v1283
    %1479 = vst [vmem:[#allocation2 + $0xe0] sm:$0xff] %v1354
    %1480 = vst [vmem:[#allocation2 + $0xe8] sm:$0xff] %v1356
    %1481 = vst [vmem:[#allocation2 + $0xf0] sm:$0xff] %v1427
    %1482 = vst [vmem:[#allocation2 + $0xf8] sm:$0xff] %v1429
    %1483 = vst [vmem:[#allocation2 + $0x100] sm:$0xff] %v1214
    %1484 = vst [vmem:[#allocation2 + $0x108] sm:$0xff] %v1216
    %1485 = vst [vmem:[#allocation2 + $0x110] sm:$0xff] %v1287
    %1486 = vst [vmem:[#allocation2 + $0x118] sm:$0xff] %v1289
    %1487 = vst [vmem:[#allocation2 + $0x120] sm:$0xff] %v1360
    %1488 = vst [vmem:[#allocation2 + $0x128] sm:$0xff] %v1362
    %1489 = vst [vmem:[#allocation2 + $0x130] sm:$0xff] %v1433
    %1490 = vst [vmem:[#allocation2 + $0x138] sm:$0xff] %v1435
    %1491 = vst [vmem:[#allocation2 + $0x140] sm:$0xff] %v1218
    %1492 = vst [vmem:[#allocation2 + $0x148] sm:$0xff] %v1220
    %1493 = vst [vmem:[#allocation2 + $0x150] sm:$0xff] %v1291
    %1494 = vst [vmem:[#allocation2 + $0x158] sm:$0xff] %v1293
    %1495 = vst [vmem:[#allocation2 + $0x160] sm:$0xff] %v1364
    %1496 = vst [vmem:[#allocation2 + $0x168] sm:$0xff] %v1366
    %1497 = vst [vmem:[#allocation2 + $0x170] sm:$0xff] %v1437
    %1498 = vst [vmem:[#allocation2 + $0x178] sm:$0xff] %v1439
    %1499 = vst [vmem:[#allocation2 + $0x180] sm:$0xff] %v1224
    %1500 = vst [vmem:[#allocation2 + $0x188] sm:$0xff] %v1226
    %1501 = vst [vmem:[#allocation2 + $0x190] sm:$0xff] %v1297
    %1502 = vst [vmem:[#allocation2 + $0x198] sm:$0xff] %v1299
    %1503 = vst [vmem:[#allocation2 + $0x1a0] sm:$0xff] %v1370
    %1504 = vst [vmem:[#allocation2 + $0x1a8] sm:$0xff] %v1372
    %1505 = vst [vmem:[#allocation2 + $0x1b0] sm:$0xff] %v1443
    %1506 = vst [vmem:[#allocation2 + $0x1b8] sm:$0xff] %v1445
    %1507 = vst [vmem:[#allocation2 + $0x1c0] sm:$0xff] %v1228
    %1508 = vst [vmem:[#allocation2 + $0x1c8] sm:$0xff] %v1230
    %1509 = vst [vmem:[#allocation2 + $0x1d0] sm:$0xff] %v1301
    %1510 = vst [vmem:[#allocation2 + $0x1d8] sm:$0xff] %v1303
    %1511 = vst [vmem:[#allocation2 + $0x1e0] sm:$0xff] %v1374
    %1512 = vst [vmem:[#allocation2 + $0x1e8] sm:$0xff] %v1376
    %1513 = vst [vmem:[#allocation2 + $0x1f0] sm:$0xff] %v1447
    %1514 = vst [vmem:[#allocation2 + $0x1f8] sm:$0xff] %v1449
    %vm1515 = vcmp.gt.s32.totalorder %v61, 0
    %v1516 = vsel %vm1515, 1, 0
    %1517 = vset.pattern.permute.xlu0 0
    %1518 = vperm.xlu0 %1517, %v1516
    %v1519 = vpop.permute.xlu0 %1518
    %vm1520 = vcmp.eq.s32.totalorder %v1519, 1
    %vm1521 = vcmp.gt.s32.totalorder %v61, 1
    %v1522 = vsel %vm1521, 1, 0
    %1523 = vset.pattern.permute.xlu0 0
    %1524 = vperm.xlu0 %1523, %v1522
    %v1525 = vpop.permute.xlu0 %1524
    %vm1526 = vcmp.eq.s32.totalorder %v1525, 1
    %vm1527 = vcmp.gt.s32.totalorder %v61, 2
    %v1528 = vsel %vm1527, 1, 0
    %1529 = vset.pattern.permute.xlu0 0
    %1530 = vperm.xlu0 %1529, %v1528
    %v1531 = vpop.permute.xlu0 %1530
    %vm1532 = vcmp.eq.s32.totalorder %v1531, 1
    %vm1533 = vcmp.gt.s32.totalorder %v61, 3
    %v1534 = vsel %vm1533, 1, 0
    %1535 = vset.pattern.permute.xlu0 0
    %1536 = vperm.xlu0 %1535, %v1534
    %v1537 = vpop.permute.xlu0 %1536
    %vm1538 = vcmp.eq.s32.totalorder %v1537, 1
    %vm1539 = vcmp.gt.s32.totalorder %v61, 4
    %v1540 = vsel %vm1539, 1, 0
    %1541 = vset.pattern.permute.xlu0 0
    %1542 = vperm.xlu0 %1541, %v1540
    %v1543 = vpop.permute.xlu0 %1542
    %vm1544 = vcmp.eq.s32.totalorder %v1543, 1
    %vm1545 = vcmp.gt.s32.totalorder %v61, 5
    %v1546 = vsel %vm1545, 1, 0
    %1547 = vset.pattern.permute.xlu0 0
    %1548 = vperm.xlu0 %1547, %v1546
    %v1549 = vpop.permute.xlu0 %1548
    %vm1550 = vcmp.eq.s32.totalorder %v1549, 1
    %vm1551 = vcmp.gt.s32.totalorder %v61, 6
    %v1552 = vsel %vm1551, 1, 0
    %1553 = vset.pattern.permute.xlu0 0
    %1554 = vperm.xlu0 %1553, %v1552
    %v1555 = vpop.permute.xlu0 %1554
    %vm1556 = vcmp.eq.s32.totalorder %v1555, 1
    %vm1557 = vcmp.gt.s32.totalorder %v61, 7
    %v1558 = vsel %vm1557, 1, 0
    %1559 = vset.pattern.permute.xlu0 0
    %1560 = vperm.xlu0 %1559, %v1558
    %v1561 = vpop.permute.xlu0 %1560
    %vm1562 = vcmp.eq.s32.totalorder %v1561, 1
    %v1563 = vld [vmem:[#allocation5] sm:$0xff]
    %v1564 = vld [vmem:[#allocation5 + $0x8] sm:$0xff]
    %v1565 = vld [vmem:[#allocation5 + $0x10] sm:$0xff]
    %v1566 = vld [vmem:[#allocation5 + $0x18] sm:$0xff]
    %v1567 = vld [vmem:[#allocation5 + $0x20] sm:$0xff]
    %v1568 = vld [vmem:[#allocation5 + $0x28] sm:$0xff]
    %v1569 = vld [vmem:[#allocation5 + $0x30] sm:$0xff]
    %v1570 = vld [vmem:[#allocation5 + $0x38] sm:$0xff]
    %v1571 = vld [vmem:[#allocation5 + $0x40] sm:$0xff]
    %v1572 = vld [vmem:[#allocation5 + $0x48] sm:$0xff]
    %v1573 = vld [vmem:[#allocation5 + $0x50] sm:$0xff]
    %v1574 = vld [vmem:[#allocation5 + $0x58] sm:$0xff]
    %v1575 = vld [vmem:[#allocation5 + $0x60] sm:$0xff]
    %v1576 = vld [vmem:[#allocation5 + $0x68] sm:$0xff]
    %v1577 = vld [vmem:[#allocation5 + $0x70] sm:$0xff]
    %v1578 = vld [vmem:[#allocation5 + $0x78] sm:$0xff]
    %v1579 = vld [vmem:[#allocation5 + $0x80] sm:$0xff]
    %v1580 = vld [vmem:[#allocation5 + $0x88] sm:$0xff]
    %v1581 = vld [vmem:[#allocation5 + $0x90] sm:$0xff]
    %v1582 = vld [vmem:[#allocation5 + $0x98] sm:$0xff]
    %v1583 = vld [vmem:[#allocation5 + $0xa0] sm:$0xff]
    %v1584 = vld [vmem:[#allocation5 + $0xa8] sm:$0xff]
    %v1585 = vld [vmem:[#allocation5 + $0xb0] sm:$0xff]
    %v1586 = vld [vmem:[#allocation5 + $0xb8] sm:$0xff]
    %v1587 = vld [vmem:[#allocation5 + $0xc0] sm:$0xff]
    %v1588 = vld [vmem:[#allocation5 + $0xc8] sm:$0xff]
    %v1589 = vld [vmem:[#allocation5 + $0xd0] sm:$0xff]
    %v1590 = vld [vmem:[#allocation5 + $0xd8] sm:$0xff]
    %v1591 = vld [vmem:[#allocation5 + $0xe0] sm:$0xff]
    %v1592 = vld [vmem:[#allocation5 + $0xe8] sm:$0xff]
    %v1593 = vld [vmem:[#allocation5 + $0xf0] sm:$0xff]
    %v1594 = vld [vmem:[#allocation5 + $0xf8] sm:$0xff]
    %v1595 = vld [vmem:[#allocation5 + $0x100] sm:$0xff]
    %v1596 = vld [vmem:[#allocation5 + $0x108] sm:$0xff]
    %v1597 = vld [vmem:[#allocation5 + $0x110] sm:$0xff]
    %v1598 = vld [vmem:[#allocation5 + $0x118] sm:$0xff]
    %v1599 = vld [vmem:[#allocation5 + $0x120] sm:$0xff]
    %v1600 = vld [vmem:[#allocation5 + $0x128] sm:$0xff]
    %v1601 = vld [vmem:[#allocation5 + $0x130] sm:$0xff]
    %v1602 = vld [vmem:[#allocation5 + $0x138] sm:$0xff]
    %v1603 = vld [vmem:[#allocation5 + $0x140] sm:$0xff]
    %v1604 = vld [vmem:[#allocation5 + $0x148] sm:$0xff]
    %v1605 = vld [vmem:[#allocation5 + $0x150] sm:$0xff]
    %v1606 = vld [vmem:[#allocation5 + $0x158] sm:$0xff]
    %v1607 = vld [vmem:[#allocation5 + $0x160] sm:$0xff]
    %v1608 = vld [vmem:[#allocation5 + $0x168] sm:$0xff]
    %v1609 = vld [vmem:[#allocation5 + $0x170] sm:$0xff]
    %v1610 = vld [vmem:[#allocation5 + $0x178] sm:$0xff]
    %v1611 = vld [vmem:[#allocation5 + $0x180] sm:$0xff]
    %v1612 = vld [vmem:[#allocation5 + $0x188] sm:$0xff]
    %v1613 = vld [vmem:[#allocation5 + $0x190] sm:$0xff]
    %v1614 = vld [vmem:[#allocation5 + $0x198] sm:$0xff]
    %v1615 = vld [vmem:[#allocation5 + $0x1a0] sm:$0xff]
    %v1616 = vld [vmem:[#allocation5 + $0x1a8] sm:$0xff]
    %v1617 = vld [vmem:[#allocation5 + $0x1b0] sm:$0xff]
    %v1618 = vld [vmem:[#allocation5 + $0x1b8] sm:$0xff]
    %v1619 = vld [vmem:[#allocation5 + $0x1c0] sm:$0xff]
    %v1620 = vld [vmem:[#allocation5 + $0x1c8] sm:$0xff]
    %v1621 = vld [vmem:[#allocation5 + $0x1d0] sm:$0xff]
    %v1622 = vld [vmem:[#allocation5 + $0x1d8] sm:$0xff]
    %v1623 = vld [vmem:[#allocation5 + $0x1e0] sm:$0xff]
    %v1624 = vld [vmem:[#allocation5 + $0x1e8] sm:$0xff]
    %v1625 = vld [vmem:[#allocation5 + $0x1f0] sm:$0xff]
    %v1626 = vld [vmem:[#allocation5 + $0x1f8] sm:$0xff]
    %v1627 = vld [vmem:[#allocation5 + $0x200] sm:$0xff]
    %v1628 = vld [vmem:[#allocation5 + $0x208] sm:$0xff]
    %v1629 = vld [vmem:[#allocation5 + $0x210] sm:$0xff]
    %v1630 = vld [vmem:[#allocation5 + $0x218] sm:$0xff]
    %v1631 = vld [vmem:[#allocation5 + $0x220] sm:$0xff]
    %v1632 = vld [vmem:[#allocation5 + $0x228] sm:$0xff]
    %v1633 = vld [vmem:[#allocation5 + $0x230] sm:$0xff]
    %v1634 = vld [vmem:[#allocation5 + $0x238] sm:$0xff]
    %v1635 = vld [vmem:[#allocation5 + $0x240] sm:$0xff]
    %v1636 = vld [vmem:[#allocation5 + $0x248] sm:$0xff]
    %v1637 = vld [vmem:[#allocation5 + $0x250] sm:$0xff]
    %v1638 = vld [vmem:[#allocation5 + $0x258] sm:$0xff]
    %v1639 = vld [vmem:[#allocation5 + $0x260] sm:$0xff]
    %v1640 = vld [vmem:[#allocation5 + $0x268] sm:$0xff]
    %v1641 = vld [vmem:[#allocation5 + $0x270] sm:$0xff]
    %v1642 = vld [vmem:[#allocation5 + $0x278] sm:$0xff]
    %v1643 = vld [vmem:[#allocation5 + $0x280] sm:$0xff]
    %v1644 = vld [vmem:[#allocation5 + $0x288] sm:$0xff]
    %v1645 = vld [vmem:[#allocation5 + $0x290] sm:$0xff]
    %v1646 = vld [vmem:[#allocation5 + $0x298] sm:$0xff]
    %v1647 = vld [vmem:[#allocation5 + $0x2a0] sm:$0xff]
    %v1648 = vld [vmem:[#allocation5 + $0x2a8] sm:$0xff]
    %v1649 = vld [vmem:[#allocation5 + $0x2b0] sm:$0xff]
    %v1650 = vld [vmem:[#allocation5 + $0x2b8] sm:$0xff]
    %v1651 = vld [vmem:[#allocation5 + $0x2c0] sm:$0xff]
    %v1652 = vld [vmem:[#allocation5 + $0x2c8] sm:$0xff]
    %v1653 = vld [vmem:[#allocation5 + $0x2d0] sm:$0xff]
    %v1654 = vld [vmem:[#allocation5 + $0x2d8] sm:$0xff]
    %v1655 = vld [vmem:[#allocation5 + $0x2e0] sm:$0xff]
    %v1656 = vld [vmem:[#allocation5 + $0x2e8] sm:$0xff]
    %v1657 = vld [vmem:[#allocation5 + $0x2f0] sm:$0xff]
    %v1658 = vld [vmem:[#allocation5 + $0x2f8] sm:$0xff]
    %v1659 = vld [vmem:[#allocation5 + $0x300] sm:$0xff]
    %v1660 = vld [vmem:[#allocation5 + $0x308] sm:$0xff]
    %v1661 = vld [vmem:[#allocation5 + $0x310] sm:$0xff]
    %v1662 = vld [vmem:[#allocation5 + $0x318] sm:$0xff]
    %v1663 = vld [vmem:[#allocation5 + $0x320] sm:$0xff]
    %v1664 = vld [vmem:[#allocation5 + $0x328] sm:$0xff]
    %v1665 = vld [vmem:[#allocation5 + $0x330] sm:$0xff]
    %v1666 = vld [vmem:[#allocation5 + $0x338] sm:$0xff]
    %v1667 = vld [vmem:[#allocation5 + $0x340] sm:$0xff]
    %v1668 = vld [vmem:[#allocation5 + $0x348] sm:$0xff]
    %v1669 = vld [vmem:[#allocation5 + $0x350] sm:$0xff]
    %v1670 = vld [vmem:[#allocation5 + $0x358] sm:$0xff]
    %v1671 = vld [vmem:[#allocation5 + $0x360] sm:$0xff]
    %v1672 = vld [vmem:[#allocation5 + $0x368] sm:$0xff]
    %v1673 = vld [vmem:[#allocation5 + $0x370] sm:$0xff]
    %v1674 = vld [vmem:[#allocation5 + $0x378] sm:$0xff]
    %v1675 = vld [vmem:[#allocation5 + $0x380] sm:$0xff]
    %v1676 = vld [vmem:[#allocation5 + $0x388] sm:$0xff]
    %v1677 = vld [vmem:[#allocation5 + $0x390] sm:$0xff]
    %v1678 = vld [vmem:[#allocation5 + $0x398] sm:$0xff]
    %v1679 = vld [vmem:[#allocation5 + $0x3a0] sm:$0xff]
    %v1680 = vld [vmem:[#allocation5 + $0x3a8] sm:$0xff]
    %v1681 = vld [vmem:[#allocation5 + $0x3b0] sm:$0xff]
    %v1682 = vld [vmem:[#allocation5 + $0x3b8] sm:$0xff]
    %v1683 = vld [vmem:[#allocation5 + $0x3c0] sm:$0xff]
    %v1684 = vld [vmem:[#allocation5 + $0x3c8] sm:$0xff]
    %v1685 = vld [vmem:[#allocation5 + $0x3d0] sm:$0xff]
    %v1686 = vld [vmem:[#allocation5 + $0x3d8] sm:$0xff]
    %v1687 = vld [vmem:[#allocation5 + $0x3e0] sm:$0xff]
    %v1688 = vld [vmem:[#allocation5 + $0x3e8] sm:$0xff]
    %v1689 = vld [vmem:[#allocation5 + $0x3f0] sm:$0xff]
    %v1690 = vld [vmem:[#allocation5 + $0x3f8] sm:$0xff]
    %v1691 = vld [vmem:[#allocation2] sm:$0xff]
    %v1692 = vld [vmem:[#allocation2 + $0x8] sm:$0xff]
    %v1693 = vld [vmem:[#allocation2 + $0x10] sm:$0xff]
    %v1694 = vld [vmem:[#allocation2 + $0x18] sm:$0xff]
    %v1695 = vld [vmem:[#allocation2 + $0x20] sm:$0xff]
    %v1696 = vld [vmem:[#allocation2 + $0x28] sm:$0xff]
    %v1697 = vld [vmem:[#allocation2 + $0x30] sm:$0xff]
    %v1698 = vld [vmem:[#allocation2 + $0x38] sm:$0xff]
    %v1827 = vunpack.c.l.b16 %v1563
    %v1828 = vunpack.c.h.b16 %v1563
    %v1829 = vunpack.c.l.b16 %v1564
    %v1830 = vunpack.c.h.b16 %v1564
    %v1831 = vunpack.c.l.b16 %v1565
    %v1832 = vunpack.c.h.b16 %v1565
    %v1833 = vunpack.c.l.b16 %v1566
    %v1834 = vunpack.c.h.b16 %v1566
    %v1835 = vunpack.c.l.b16 %v1567
    %v1836 = vunpack.c.h.b16 %v1567
    %v1837 = vunpack.c.l.b16 %v1568
    %v1838 = vunpack.c.h.b16 %v1568
    %v1839 = vunpack.c.l.b16 %v1569
    %v1840 = vunpack.c.h.b16 %v1569
    %v1841 = vunpack.c.l.b16 %v1570
    %v1842 = vunpack.c.h.b16 %v1570
    %v1843 = vunpack.c.l.b16 %v1571
    %v1844 = vunpack.c.h.b16 %v1571
    %v1845 = vunpack.c.l.b16 %v1572
    %v1846 = vunpack.c.h.b16 %v1572
    %v1847 = vunpack.c.l.b16 %v1573
    %v1848 = vunpack.c.h.b16 %v1573
    %v1849 = vunpack.c.l.b16 %v1574
    %v1850 = vunpack.c.h.b16 %v1574
    %v1851 = vunpack.c.l.b16 %v1575
    %v1852 = vunpack.c.h.b16 %v1575
    %v1853 = vunpack.c.l.b16 %v1576
    %v1854 = vunpack.c.h.b16 %v1576
    %v1855 = vunpack.c.l.b16 %v1577
    %v1856 = vunpack.c.h.b16 %v1577
    %v1857 = vunpack.c.l.b16 %v1578
    %v1858 = vunpack.c.h.b16 %v1578
    %v1859 = vunpack.c.l.b16 %v1579
    %v1860 = vunpack.c.h.b16 %v1579
    %v1861 = vunpack.c.l.b16 %v1580
    %v1862 = vunpack.c.h.b16 %v1580
    %v1863 = vunpack.c.l.b16 %v1581
    %v1864 = vunpack.c.h.b16 %v1581
    %v1865 = vunpack.c.l.b16 %v1582
    %v1866 = vunpack.c.h.b16 %v1582
    %v1867 = vunpack.c.l.b16 %v1583
    %v1868 = vunpack.c.h.b16 %v1583
    %v1869 = vunpack.c.l.b16 %v1584
    %v1870 = vunpack.c.h.b16 %v1584
    %v1871 = vunpack.c.l.b16 %v1585
    %v1872 = vunpack.c.h.b16 %v1585
    %v1873 = vunpack.c.l.b16 %v1586
    %v1874 = vunpack.c.h.b16 %v1586
    %v1875 = vunpack.c.l.b16 %v1587
    %v1876 = vunpack.c.h.b16 %v1587
    %v1877 = vunpack.c.l.b16 %v1588
    %v1878 = vunpack.c.h.b16 %v1588
    %v1879 = vunpack.c.l.b16 %v1589
    %v1880 = vunpack.c.h.b16 %v1589
    %v1881 = vunpack.c.l.b16 %v1590
    %v1882 = vunpack.c.h.b16 %v1590
    %v1883 = vunpack.c.l.b16 %v1591
    %v1884 = vunpack.c.h.b16 %v1591
    %v1885 = vunpack.c.l.b16 %v1592
    %v1886 = vunpack.c.h.b16 %v1592
    %v1887 = vunpack.c.l.b16 %v1593
    %v1888 = vunpack.c.h.b16 %v1593
    %v1889 = vunpack.c.l.b16 %v1594
    %v1890 = vunpack.c.h.b16 %v1594
    %v1891 = vunpack.c.l.b16 %v1595
    %v1892 = vunpack.c.h.b16 %v1595
    %v1893 = vunpack.c.l.b16 %v1596
    %v1894 = vunpack.c.h.b16 %v1596
    %v1895 = vunpack.c.l.b16 %v1597
    %v1896 = vunpack.c.h.b16 %v1597
    %v1897 = vunpack.c.l.b16 %v1598
    %v1898 = vunpack.c.h.b16 %v1598
    %v1899 = vunpack.c.l.b16 %v1599
    %v1900 = vunpack.c.h.b16 %v1599
    %v1901 = vunpack.c.l.b16 %v1600
    %v1902 = vunpack.c.h.b16 %v1600
    %v1903 = vunpack.c.l.b16 %v1601
    %v1904 = vunpack.c.h.b16 %v1601
    %v1905 = vunpack.c.l.b16 %v1602
    %v1906 = vunpack.c.h.b16 %v1602
    %v1907 = vunpack.c.l.b16 %v1603
    %v1908 = vunpack.c.h.b16 %v1603
    %v1909 = vunpack.c.l.b16 %v1604
    %v1910 = vunpack.c.h.b16 %v1604
    %v1911 = vunpack.c.l.b16 %v1605
    %v1912 = vunpack.c.h.b16 %v1605
    %v1913 = vunpack.c.l.b16 %v1606
    %v1914 = vunpack.c.h.b16 %v1606
    %v1915 = vunpack.c.l.b16 %v1607
    %v1916 = vunpack.c.h.b16 %v1607
    %v1917 = vunpack.c.l.b16 %v1608
    %v1918 = vunpack.c.h.b16 %v1608
    %v1919 = vunpack.c.l.b16 %v1609
    %v1920 = vunpack.c.h.b16 %v1609
    %v1921 = vunpack.c.l.b16 %v1610
    %v1922 = vunpack.c.h.b16 %v1610
    %v1923 = vunpack.c.l.b16 %v1611
    %v1924 = vunpack.c.h.b16 %v1611
    %v1925 = vunpack.c.l.b16 %v1612
    %v1926 = vunpack.c.h.b16 %v1612
    %v1927 = vunpack.c.l.b16 %v1613
    %v1928 = vunpack.c.h.b16 %v1613
    %v1929 = vunpack.c.l.b16 %v1614
    %v1930 = vunpack.c.h.b16 %v1614
    %v1931 = vunpack.c.l.b16 %v1615
    %v1932 = vunpack.c.h.b16 %v1615
    %v1933 = vunpack.c.l.b16 %v1616
    %v1934 = vunpack.c.h.b16 %v1616
    %v1935 = vunpack.c.l.b16 %v1617
    %v1936 = vunpack.c.h.b16 %v1617
    %v1937 = vunpack.c.l.b16 %v1618
    %v1938 = vunpack.c.h.b16 %v1618
    %v1939 = vunpack.c.l.b16 %v1619
    %v1940 = vunpack.c.h.b16 %v1619
    %v1941 = vunpack.c.l.b16 %v1620
    %v1942 = vunpack.c.h.b16 %v1620
    %v1943 = vunpack.c.l.b16 %v1621
    %v1944 = vunpack.c.h.b16 %v1621
    %v1945 = vunpack.c.l.b16 %v1622
    %v1946 = vunpack.c.h.b16 %v1622
    %v1947 = vunpack.c.l.b16 %v1623
    %v1948 = vunpack.c.h.b16 %v1623
    %v1949 = vunpack.c.l.b16 %v1624
    %v1950 = vunpack.c.h.b16 %v1624
    %v1951 = vunpack.c.l.b16 %v1625
    %v1952 = vunpack.c.h.b16 %v1625
    %v1953 = vunpack.c.l.b16 %v1626
    %v1954 = vunpack.c.h.b16 %v1626
    %v1955 = vunpack.c.l.b16 %v1627
    %v1956 = vunpack.c.h.b16 %v1627
    %v1957 = vunpack.c.l.b16 %v1628
    %v1958 = vunpack.c.h.b16 %v1628
    %v1959 = vunpack.c.l.b16 %v1629
    %v1960 = vunpack.c.h.b16 %v1629
    %v1961 = vunpack.c.l.b16 %v1630
    %v1962 = vunpack.c.h.b16 %v1630
    %v1963 = vunpack.c.l.b16 %v1631
    %v1964 = vunpack.c.h.b16 %v1631
    %v1965 = vunpack.c.l.b16 %v1632
    %v1966 = vunpack.c.h.b16 %v1632
    %v1967 = vunpack.c.l.b16 %v1633
    %v1968 = vunpack.c.h.b16 %v1633
    %v1969 = vunpack.c.l.b16 %v1634
    %v1970 = vunpack.c.h.b16 %v1634
    %v1971 = vunpack.c.l.b16 %v1635
    %v1972 = vunpack.c.h.b16 %v1635
    %v1973 = vunpack.c.l.b16 %v1636
    %v1974 = vunpack.c.h.b16 %v1636
    %v1975 = vunpack.c.l.b16 %v1637
    %v1976 = vunpack.c.h.b16 %v1637
    %v1977 = vunpack.c.l.b16 %v1638
    %v1978 = vunpack.c.h.b16 %v1638
    %v1979 = vunpack.c.l.b16 %v1639
    %v1980 = vunpack.c.h.b16 %v1639
    %v1981 = vunpack.c.l.b16 %v1640
    %v1982 = vunpack.c.h.b16 %v1640
    %v1983 = vunpack.c.l.b16 %v1641
    %v1984 = vunpack.c.h.b16 %v1641
    %v1985 = vunpack.c.l.b16 %v1642
    %v1986 = vunpack.c.h.b16 %v1642
    %v1987 = vunpack.c.l.b16 %v1643
    %v1988 = vunpack.c.h.b16 %v1643
    %v1989 = vunpack.c.l.b16 %v1644
    %v1990 = vunpack.c.h.b16 %v1644
    %v1991 = vunpack.c.l.b16 %v1645
    %v1992 = vunpack.c.h.b16 %v1645
    %v1993 = vunpack.c.l.b16 %v1646
    %v1994 = vunpack.c.h.b16 %v1646
    %v1995 = vunpack.c.l.b16 %v1647
    %v1996 = vunpack.c.h.b16 %v1647
    %v1997 = vunpack.c.l.b16 %v1648
    %v1998 = vunpack.c.h.b16 %v1648
    %v1999 = vunpack.c.l.b16 %v1649
    %v2000 = vunpack.c.h.b16 %v1649
    %v2001 = vunpack.c.l.b16 %v1650
    %v2002 = vunpack.c.h.b16 %v1650
    %v2003 = vunpack.c.l.b16 %v1651
    %v2004 = vunpack.c.h.b16 %v1651
    %v2005 = vunpack.c.l.b16 %v1652
    %v2006 = vunpack.c.h.b16 %v1652
    %v2007 = vunpack.c.l.b16 %v1653
    %v2008 = vunpack.c.h.b16 %v1653
    %v2009 = vunpack.c.l.b16 %v1654
    %v2010 = vunpack.c.h.b16 %v1654
    %v2011 = vunpack.c.l.b16 %v1655
    %v2012 = vunpack.c.h.b16 %v1655
    %v2013 = vunpack.c.l.b16 %v1656
    %v2014 = vunpack.c.h.b16 %v1656
    %v2015 = vunpack.c.l.b16 %v1657
    %v2016 = vunpack.c.h.b16 %v1657
    %v2017 = vunpack.c.l.b16 %v1658
    %v2018 = vunpack.c.h.b16 %v1658
    %v2019 = vunpack.c.l.b16 %v1659
    %v2020 = vunpack.c.h.b16 %v1659
    %v2021 = vunpack.c.l.b16 %v1660
    %v2022 = vunpack.c.h.b16 %v1660
    %v2023 = vunpack.c.l.b16 %v1661
    %v2024 = vunpack.c.h.b16 %v1661
    %v2025 = vunpack.c.l.b16 %v1662
    %v2026 = vunpack.c.h.b16 %v1662
    %v2027 = vunpack.c.l.b16 %v1663
    %v2028 = vunpack.c.h.b16 %v1663
    %v2029 = vunpack.c.l.b16 %v1664
    %v2030 = vunpack.c.h.b16 %v1664
    %v2031 = vunpack.c.l.b16 %v1665
    %v2032 = vunpack.c.h.b16 %v1665
    %v2033 = vunpack.c.l.b16 %v1666
    %v2034 = vunpack.c.h.b16 %v1666
    %v2035 = vunpack.c.l.b16 %v1667
    %v2036 = vunpack.c.h.b16 %v1667
    %v2037 = vunpack.c.l.b16 %v1668
    %v2038 = vunpack.c.h.b16 %v1668
    %v2039 = vunpack.c.l.b16 %v1669
    %v2040 = vunpack.c.h.b16 %v1669
    %v2041 = vunpack.c.l.b16 %v1670
    %v2042 = vunpack.c.h.b16 %v1670
    %v2043 = vunpack.c.l.b16 %v1671
    %v2044 = vunpack.c.h.b16 %v1671
    %v2045 = vunpack.c.l.b16 %v1672
    %v2046 = vunpack.c.h.b16 %v1672
    %v2047 = vunpack.c.l.b16 %v1673
    %v2048 = vunpack.c.h.b16 %v1673
    %v2049 = vunpack.c.l.b16 %v1674
    %v2050 = vunpack.c.h.b16 %v1674
    %v2051 = vunpack.c.l.b16 %v1675
    %v2052 = vunpack.c.h.b16 %v1675
    %v2053 = vunpack.c.l.b16 %v1676
    %v2054 = vunpack.c.h.b16 %v1676
    %v2055 = vunpack.c.l.b16 %v1677
    %v2056 = vunpack.c.h.b16 %v1677
    %v2057 = vunpack.c.l.b16 %v1678
    %v2058 = vunpack.c.h.b16 %v1678
    %v2059 = vunpack.c.l.b16 %v1679
    %v2060 = vunpack.c.h.b16 %v1679
    %v2061 = vunpack.c.l.b16 %v1680
    %v2062 = vunpack.c.h.b16 %v1680
    %v2063 = vunpack.c.l.b16 %v1681
    %v2064 = vunpack.c.h.b16 %v1681
    %v2065 = vunpack.c.l.b16 %v1682
    %v2066 = vunpack.c.h.b16 %v1682
    %v2067 = vunpack.c.l.b16 %v1683
    %v2068 = vunpack.c.h.b16 %v1683
    %v2069 = vunpack.c.l.b16 %v1684
    %v2070 = vunpack.c.h.b16 %v1684
    %v2071 = vunpack.c.l.b16 %v1685
    %v2072 = vunpack.c.h.b16 %v1685
    %v2073 = vunpack.c.l.b16 %v1686
    %v2074 = vunpack.c.h.b16 %v1686
    %v2075 = vunpack.c.l.b16 %v1687
    %v2076 = vunpack.c.h.b16 %v1687
    %v2077 = vunpack.c.l.b16 %v1688
    %v2078 = vunpack.c.h.b16 %v1688
    %v2079 = vunpack.c.l.b16 %v1689
    %v2080 = vunpack.c.h.b16 %v1689
    %v2081 = vunpack.c.l.b16 %v1690
    %v2082 = vunpack.c.h.b16 %v1690
    %v2083 = vpack.c.b16 %v1835, %v1827
    %v2084 = vpack.c.b16 %v1836, %v1828
    %v2085 = vpack.c.b16 %v1837, %v1829
    %v2086 = vpack.c.b16 %v1838, %v1830
    %v2087 = vpack.c.b16 %v1839, %v1831
    %v2088 = vpack.c.b16 %v1840, %v1832
    %v2089 = vpack.c.b16 %v1841, %v1833
    %v2090 = vpack.c.b16 %v1842, %v1834
    %v2091 = vpack.c.b16 %v1851, %v1843
    %v2092 = vpack.c.b16 %v1852, %v1844
    %v2093 = vpack.c.b16 %v1853, %v1845
    %v2094 = vpack.c.b16 %v1854, %v1846
    %v2095 = vpack.c.b16 %v1855, %v1847
    %v2096 = vpack.c.b16 %v1856, %v1848
    %v2097 = vpack.c.b16 %v1857, %v1849
    %v2098 = vpack.c.b16 %v1858, %v1850
    %v2099 = vpack.c.b16 %v1867, %v1859
    %v2100 = vpack.c.b16 %v1868, %v1860
    %v2101 = vpack.c.b16 %v1869, %v1861
    %v2102 = vpack.c.b16 %v1870, %v1862
    %v2103 = vpack.c.b16 %v1871, %v1863
    %v2104 = vpack.c.b16 %v1872, %v1864
    %v2105 = vpack.c.b16 %v1873, %v1865
    %v2106 = vpack.c.b16 %v1874, %v1866
    %v2107 = vpack.c.b16 %v1883, %v1875
    %v2108 = vpack.c.b16 %v1884, %v1876
    %v2109 = vpack.c.b16 %v1885, %v1877
    %v2110 = vpack.c.b16 %v1886, %v1878
    %v2111 = vpack.c.b16 %v1887, %v1879
    %v2112 = vpack.c.b16 %v1888, %v1880
    %v2113 = vpack.c.b16 %v1889, %v1881
    %v2114 = vpack.c.b16 %v1890, %v1882
    %v2115 = vpack.c.b16 %v1899, %v1891
    %v2116 = vpack.c.b16 %v1900, %v1892
    %v2117 = vpack.c.b16 %v1901, %v1893
    %v2118 = vpack.c.b16 %v1902, %v1894
    %v2119 = vpack.c.b16 %v1903, %v1895
    %v2120 = vpack.c.b16 %v1904, %v1896
    %v2121 = vpack.c.b16 %v1905, %v1897
    %v2122 = vpack.c.b16 %v1906, %v1898
    %v2123 = vpack.c.b16 %v1915, %v1907
    %v2124 = vpack.c.b16 %v1916, %v1908
    %v2125 = vpack.c.b16 %v1917, %v1909
    %v2126 = vpack.c.b16 %v1918, %v1910
    %v2127 = vpack.c.b16 %v1919, %v1911
    %v2128 = vpack.c.b16 %v1920, %v1912
    %v2129 = vpack.c.b16 %v1921, %v1913
    %v2130 = vpack.c.b16 %v1922, %v1914
    %v2131 = vpack.c.b16 %v1931, %v1923
    %v2132 = vpack.c.b16 %v1932, %v1924
    %v2133 = vpack.c.b16 %v1933, %v1925
    %v2134 = vpack.c.b16 %v1934, %v1926
    %v2135 = vpack.c.b16 %v1935, %v1927
    %v2136 = vpack.c.b16 %v1936, %v1928
    %v2137 = vpack.c.b16 %v1937, %v1929
    %v2138 = vpack.c.b16 %v1938, %v1930
    %v2139 = vpack.c.b16 %v1947, %v1939
    %v2140 = vpack.c.b16 %v1948, %v1940
    %v2141 = vpack.c.b16 %v1949, %v1941
    %v2142 = vpack.c.b16 %v1950, %v1942
    %v2143 = vpack.c.b16 %v1951, %v1943
    %v2144 = vpack.c.b16 %v1952, %v1944
    %v2145 = vpack.c.b16 %v1953, %v1945
    %v2146 = vpack.c.b16 %v1954, %v1946
    %v2147 = vpack.c.b16 %v1963, %v1955
    %v2148 = vpack.c.b16 %v1964, %v1956
    %v2149 = vpack.c.b16 %v1965, %v1957
    %v2150 = vpack.c.b16 %v1966, %v1958
    %v2151 = vpack.c.b16 %v1967, %v1959
    %v2152 = vpack.c.b16 %v1968, %v1960
    %v2153 = vpack.c.b16 %v1969, %v1961
    %v2154 = vpack.c.b16 %v1970, %v1962
    %v2155 = vpack.c.b16 %v1979, %v1971
    %v2156 = vpack.c.b16 %v1980, %v1972
    %v2157 = vpack.c.b16 %v1981, %v1973
    %v2158 = vpack.c.b16 %v1982, %v1974
    %v2159 = vpack.c.b16 %v1983, %v1975
    %v2160 = vpack.c.b16 %v1984, %v1976
    %v2161 = vpack.c.b16 %v1985, %v1977
    %v2162 = vpack.c.b16 %v1986, %v1978
    %v2163 = vpack.c.b16 %v1995, %v1987
    %v2164 = vpack.c.b16 %v1996, %v1988
    %v2165 = vpack.c.b16 %v1997, %v1989
    %v2166 = vpack.c.b16 %v1998, %v1990
    %v2167 = vpack.c.b16 %v1999, %v1991
    %v2168 = vpack.c.b16 %v2000, %v1992
    %v2169 = vpack.c.b16 %v2001, %v1993
    %v2170 = vpack.c.b16 %v2002, %v1994
    %v2171 = vpack.c.b16 %v2011, %v2003
    %v2172 = vpack.c.b16 %v2012, %v2004
    %v2173 = vpack.c.b16 %v2013, %v2005
    %v2174 = vpack.c.b16 %v2014, %v2006
    %v2175 = vpack.c.b16 %v2015, %v2007
    %v2176 = vpack.c.b16 %v2016, %v2008
    %v2177 = vpack.c.b16 %v2017, %v2009
    %v2178 = vpack.c.b16 %v2018, %v2010
    %v2179 = vpack.c.b16 %v2027, %v2019
    %v2180 = vpack.c.b16 %v2028, %v2020
    %v2181 = vpack.c.b16 %v2029, %v2021
    %v2182 = vpack.c.b16 %v2030, %v2022
    %v2183 = vpack.c.b16 %v2031, %v2023
    %v2184 = vpack.c.b16 %v2032, %v2024
    %v2185 = vpack.c.b16 %v2033, %v2025
    %v2186 = vpack.c.b16 %v2034, %v2026
    %v2187 = vpack.c.b16 %v2043, %v2035
    %v2188 = vpack.c.b16 %v2044, %v2036
    %v2189 = vpack.c.b16 %v2045, %v2037
    %v2190 = vpack.c.b16 %v2046, %v2038
    %v2191 = vpack.c.b16 %v2047, %v2039
    %v2192 = vpack.c.b16 %v2048, %v2040
    %v2193 = vpack.c.b16 %v2049, %v2041
    %v2194 = vpack.c.b16 %v2050, %v2042
    %v2195 = vpack.c.b16 %v2059, %v2051
    %v2196 = vpack.c.b16 %v2060, %v2052
    %v2197 = vpack.c.b16 %v2061, %v2053
    %v2198 = vpack.c.b16 %v2062, %v2054
    %v2199 = vpack.c.b16 %v2063, %v2055
    %v2200 = vpack.c.b16 %v2064, %v2056
    %v2201 = vpack.c.b16 %v2065, %v2057
    %v2202 = vpack.c.b16 %v2066, %v2058
    %v2203 = vpack.c.b16 %v2075, %v2067
    %v2204 = vpack.c.b16 %v2076, %v2068
    %v2205 = vpack.c.b16 %v2077, %v2069
    %v2206 = vpack.c.b16 %v2078, %v2070
    %v2207 = vpack.c.b16 %v2079, %v2071
    %v2208 = vpack.c.b16 %v2080, %v2072
    %v2209 = vpack.c.b16 %v2081, %v2073
    %v2210 = vpack.c.b16 %v2082, %v2074
    %2339 = vmatprep.subr.bf16.mxu0 %v2084
    %2340 = vmatpush1.bf16.msra.mxu0 %v2083
    %2341 = vmatprep.subr.bf16.mxu0 %v2092
    %2342 = vmatpush1.bf16.msra.mxu0 %v2091
    %2343 = vmatprep.subr.bf16.mxu0 %v2100
    %2344 = vmatpush1.bf16.msra.mxu0 %v2099
    %2345 = vmatprep.subr.bf16.mxu0 %v2108
    %2346 = vmatpush1.bf16.msra.mxu0 %v2107
    %2347 = vmatprep.subr.bf16.mxu0 %v2116
    %2348 = vmatpush1.bf16.msra.mxu0 %v2115
    %2349 = vmatprep.subr.bf16.mxu0 %v2124
    %2350 = vmatpush1.bf16.msra.mxu0 %v2123
    %2351 = vmatprep.subr.bf16.mxu0 %v2132
    %2352 = vmatpush1.bf16.msra.mxu0 %v2131
    %2353 = vmatprep.subr.bf16.mxu0 %v2140
    %2354 = vmatpush1.bf16.msra.mxu0 %v2139
    %2355 = vmatprep.subr.bf16.mxu0 %v2148
    %2356 = vmatpush1.bf16.msra.mxu0 %v2147
    %2357 = vmatprep.subr.bf16.mxu0 %v2156
    %2358 = vmatpush1.bf16.msra.mxu0 %v2155
    %2359 = vmatprep.subr.bf16.mxu0 %v2164
    %2360 = vmatpush1.bf16.msra.mxu0 %v2163
    %2361 = vmatprep.subr.bf16.mxu0 %v2172
    %2362 = vmatpush1.bf16.msra.mxu0 %v2171
    %2363 = vmatprep.subr.bf16.mxu0 %v2180
    %2364 = vmatpush1.bf16.msra.mxu0 %v2179
    %2365 = vmatprep.subr.bf16.mxu0 %v2188
    %2366 = vmatpush1.bf16.msra.mxu0 %v2187
    %2367 = vmatprep.subr.bf16.mxu0 %v2196
    %2368 = vmatpush1.bf16.msra.mxu0 %v2195
    %2369 = vmatprep.subr.bf16.mxu0 %v2204
    %2370 = vmatpush1.bf16.msra.mxu0 %v2203
    %2371 = vmatprep.mubr.bf16.mxu0 0
    %2372 = vmatmul.mubr.bf16.gmra.mrb[0].mxu0 0
    %v2373 = vpop.f32.mrb[0].mxu0
    %v2374 = vadd.f32 0.0, %v2373
    %v2375 = vpop.f32.mrb[0].mxu0
    %v2376 = vadd.f32 0.0, %v2375
    %v2377 = vpop.f32.mrb[0].mxu0
    %v2378 = vpop.f32.mrb[0].mxu0
    %2379 = vdwg.mxu0
    %2380 = vmatprep.subr.bf16.mxu0 %v2086
    %2381 = vmatpush1.bf16.msra.mxu0 %v2085
    %2382 = vmatprep.subr.bf16.mxu0 %v2094
    %2383 = vmatpush1.bf16.msra.mxu0 %v2093
    %2384 = vmatprep.subr.bf16.mxu0 %v2102
    %2385 = vmatpush1.bf16.msra.mxu0 %v2101
    %2386 = vmatprep.subr.bf16.mxu0 %v2110
    %2387 = vmatpush1.bf16.msra.mxu0 %v2109
    %2388 = vmatprep.subr.bf16.mxu0 %v2118
    %2389 = vmatpush1.bf16.msra.mxu0 %v2117
    %2390 = vmatprep.subr.bf16.mxu0 %v2126
    %2391 = vmatpush1.bf16.msra.mxu0 %v2125
    %2392 = vmatprep.subr.bf16.mxu0 %v2134
    %2393 = vmatpush1.bf16.msra.mxu0 %v2133
    %2394 = vmatprep.subr.bf16.mxu0 %v2142
    %2395 = vmatpush1.bf16.msra.mxu0 %v2141
    %2396 = vmatprep.subr.bf16.mxu0 %v2150
    %2397 = vmatpush1.bf16.msra.mxu0 %v2149
    %2398 = vmatprep.subr.bf16.mxu0 %v2158
    %2399 = vmatpush1.bf16.msra.mxu0 %v2157
    %2400 = vmatprep.subr.bf16.mxu0 %v2166
    %2401 = vmatpush1.bf16.msra.mxu0 %v2165
    %2402 = vmatprep.subr.bf16.mxu0 %v2174
    %2403 = vmatpush1.bf16.msra.mxu0 %v2173
    %2404 = vmatprep.subr.bf16.mxu0 %v2182
    %2405 = vmatpush1.bf16.msra.mxu0 %v2181
    %2406 = vmatprep.subr.bf16.mxu0 %v2190
    %2407 = vmatpush1.bf16.msra.mxu0 %v2189
    %2408 = vmatprep.subr.bf16.mxu0 %v2198
    %2409 = vmatpush1.bf16.msra.mxu0 %v2197
    %2410 = vmatprep.subr.bf16.mxu0 %v2206
    %2411 = vmatpush1.bf16.msra.mxu0 %v2205
    %2412 = vmatprep.mubr.bf16.mxu0 0
    %2413 = vmatmul.mubr.bf16.gmra.mrb[0].mxu0 0
    %v2414 = vpop.f32.mrb[0].mxu0
    %v2415 = vadd.f32 0.0, %v2414
    %v2416 = vpop.f32.mrb[0].mxu0
    %v2417 = vadd.f32 0.0, %v2416
    %v2418 = vpop.f32.mrb[0].mxu0
    %v2419 = vpop.f32.mrb[0].mxu0
    %2420 = vdwg.mxu0
    %2421 = vmatprep.subr.bf16.mxu0 %v2088
    %2422 = vmatpush1.bf16.msra.mxu0 %v2087
    %2423 = vmatprep.subr.bf16.mxu0 %v2096
    %2424 = vmatpush1.bf16.msra.mxu0 %v2095
    %2425 = vmatprep.subr.bf16.mxu0 %v2104
    %2426 = vmatpush1.bf16.msra.mxu0 %v2103
    %2427 = vmatprep.subr.bf16.mxu0 %v2112
    %2428 = vmatpush1.bf16.msra.mxu0 %v2111
    %2429 = vmatprep.subr.bf16.mxu0 %v2120
    %2430 = vmatpush1.bf16.msra.mxu0 %v2119
    %2431 = vmatprep.subr.bf16.mxu0 %v2128
    %2432 = vmatpush1.bf16.msra.mxu0 %v2127
    %2433 = vmatprep.subr.bf16.mxu0 %v2136
    %2434 = vmatpush1.bf16.msra.mxu0 %v2135
    %2435 = vmatprep.subr.bf16.mxu0 %v2144
    %2436 = vmatpush1.bf16.msra.mxu0 %v2143
    %2437 = vmatprep.subr.bf16.mxu0 %v2152
    %2438 = vmatpush1.bf16.msra.mxu0 %v2151
    %2439 = vmatprep.subr.bf16.mxu0 %v2160
    %2440 = vmatpush1.bf16.msra.mxu0 %v2159
    %2441 = vmatprep.subr.bf16.mxu0 %v2168
    %2442 = vmatpush1.bf16.msra.mxu0 %v2167
    %2443 = vmatprep.subr.bf16.mxu0 %v2176
    %2444 = vmatpush1.bf16.msra.mxu0 %v2175
    %2445 = vmatprep.subr.bf16.mxu0 %v2184
    %2446 = vmatpush1.bf16.msra.mxu0 %v2183
    %2447 = vmatprep.subr.bf16.mxu0 %v2192
    %2448 = vmatpush1.bf16.msra.mxu0 %v2191
    %2449 = vmatprep.subr.bf16.mxu0 %v2200
    %2450 = vmatpush1.bf16.msra.mxu0 %v2199
    %2451 = vmatprep.subr.bf16.mxu0 %v2208
    %2452 = vmatpush1.bf16.msra.mxu0 %v2207
    %2453 = vmatprep.mubr.bf16.mxu0 0
    %2454 = vmatmul.mubr.bf16.gmra.mrb[0].mxu0 0
    %v2455 = vpop.f32.mrb[0].mxu0
    %v2456 = vadd.f32 0.0, %v2455
    %v2457 = vpop.f32.mrb[0].mxu0
    %v2458 = vadd.f32 0.0, %v2457
    %v2459 = vpop.f32.mrb[0].mxu0
    %v2460 = vpop.f32.mrb[0].mxu0
    %2461 = vdwg.mxu0
    %2462 = vmatprep.subr.bf16.mxu0 %v2090
    %2463 = vmatpush1.bf16.msra.mxu0 %v2089
    %2464 = vmatprep.subr.bf16.mxu0 %v2098
    %2465 = vmatpush1.bf16.msra.mxu0 %v2097
    %2466 = vmatprep.subr.bf16.mxu0 %v2106
    %2467 = vmatpush1.bf16.msra.mxu0 %v2105
    %2468 = vmatprep.subr.bf16.mxu0 %v2114
    %2469 = vmatpush1.bf16.msra.mxu0 %v2113
    %2470 = vmatprep.subr.bf16.mxu0 %v2122
    %2471 = vmatpush1.bf16.msra.mxu0 %v2121
    %2472 = vmatprep.subr.bf16.mxu0 %v2130
    %2473 = vmatpush1.bf16.msra.mxu0 %v2129
    %2474 = vmatprep.subr.bf16.mxu0 %v2138
    %2475 = vmatpush1.bf16.msra.mxu0 %v2137
    %2476 = vmatprep.subr.bf16.mxu0 %v2146
    %2477 = vmatpush1.bf16.msra.mxu0 %v2145
    %2478 = vmatprep.subr.bf16.mxu0 %v2154
    %2479 = vmatpush1.bf16.msra.mxu0 %v2153
    %2480 = vmatprep.subr.bf16.mxu0 %v2162
    %2481 = vmatpush1.bf16.msra.mxu0 %v2161
    %2482 = vmatprep.subr.bf16.mxu0 %v2170
    %2483 = vmatpush1.bf16.msra.mxu0 %v2169
    %2484 = vmatprep.subr.bf16.mxu0 %v2178
    %2485 = vmatpush1.bf16.msra.mxu0 %v2177
    %2486 = vmatprep.subr.bf16.mxu0 %v2186
    %2487 = vmatpush1.bf16.msra.mxu0 %v2185
    %2488 = vmatprep.subr.bf16.mxu0 %v2194
    %2489 = vmatpush1.bf16.msra.mxu0 %v2193
    %2490 = vmatprep.subr.bf16.mxu0 %v2202
    %2491 = vmatpush1.bf16.msra.mxu0 %v2201
    %2492 = vmatprep.subr.bf16.mxu0 %v2210
    %2493 = vmatpush1.bf16.msra.mxu0 %v2209
    %2494 = vmatprep.mubr.bf16.mxu0 0
    %2495 = vmatmul.mubr.bf16.gmra.mrb[0].mxu0 0
    %v2496 = vpop.f32.mrb[0].mxu0
    %v2497 = vadd.f32 0.0, %v2496
    %v2498 = vpop.f32.mrb[0].mxu0
    %v2499 = vadd.f32 0.0, %v2498
    %v2500 = vpop.f32.mrb[0].mxu0
    %v2501 = vpop.f32.mrb[0].mxu0
    %2502 = vdwg.mxu0
    %v2503 = vadd.f32 %v1691, %v2374
    %v2504 = vadd.f32 %v1692, %v2376
    %v2505 = vadd.f32 %v1693, %v2415
    %v2506 = vadd.f32 %v1694, %v2417
    %v2507 = vadd.f32 %v1695, %v2456
    %v2508 = vadd.f32 %v1696, %v2458
    %v2509 = vadd.f32 %v1697, %v2497
    %v2510 = vadd.f32 %v1698, %v2499
    %v2511 = vxor.u32 %v2503, 2147483648
    %v2512 = vxor.u32 %v2504, 2147483648
    %v2513 = vmul.f32 %v2511, 1.442695
    %v2514 = vpow.pop %v2513
    %v2515 = vmul.f32 %v2512, 1.442695
    %v2516 = vpow.pop %v2515
    %v2517 = vadd.f32 %v2514, 1.0
    %v2518 = vadd.f32 %v2516, 1.0
    %v2519 = vrcp.pop %v2517
    %v2520 = vmul.f32 1.0, %v2519
    %v2521 = vrcp.pop %v2518
    %v2522 = vmul.f32 1.0, %v2521
    %v2523 = vxor.u32 %v2505, 2147483648
    %v2524 = vxor.u32 %v2506, 2147483648
    %v2525 = vmul.f32 %v2523, 1.442695
    %v2526 = vpow.pop %v2525
    %v2527 = vmul.f32 %v2524, 1.442695
    %v2528 = vpow.pop %v2527
    %v2529 = vadd.f32 %v2526, 1.0
    %v2530 = vadd.f32 %v2528, 1.0
    %v2531 = vrcp.pop %v2529
    %v2532 = vmul.f32 1.0, %v2531
    %v2533 = vrcp.pop %v2530
    %v2534 = vmul.f32 1.0, %v2533
    %v2535 = vtanh.pop %v2507
    %v2536 = vtanh.pop %v2508
    %v2537 = vxor.u32 %v2509, 2147483648
    %v2538 = vxor.u32 %v2510, 2147483648
    %v2539 = vmul.f32 %v2537, 1.442695
    %v2540 = vpow.pop %v2539
    %v2541 = vmul.f32 %v2538, 1.442695
    %v2542 = vpow.pop %v2541
    %v2543 = vadd.f32 %v2540, 1.0
    %v2544 = vadd.f32 %v2542, 1.0
    %v2545 = vrcp.pop %v2543
    %v2546 = vmul.f32 1.0, %v2545
    %v2547 = vrcp.pop %v2544
    %v2548 = vmul.f32 1.0, %v2547
    %v2549 = vmul.f32 %v2532, 0.0
    %v2550 = vmul.f32 %v2534, 0.0
    %v2551 = vmul.f32 %v2520, %v2535
    %v2552 = vmul.f32 %v2522, %v2536
    %v2553 = vadd.f32 %v2549, %v2551
    %v2554 = vadd.f32 %v2550, %v2552
    %v2555 = vtanh.pop %v2553
    %v2556 = vtanh.pop %v2554
    %v2557 = vmul.f32 %v2546, %v2555
    %v2558 = vmul.f32 %v2548, %v2556
    %v2559 = vsel %vm1520, %v2557, 0.0
    %v2560 = vsel %vm1520, %v2558, 0.0
    %v2561 = vsel %vm1520, %v2553, 0.0
    %v2562 = vsel %vm1520, %v2554, 0.0
    %s2563 = scalar_lea.vmem [#allocation2], 64
    %v2564 = vld [vmem:[%s2563] sm:$0xff]
    %v2565 = vld [vmem:[%s2563 + $0x8] sm:$0xff]
    %v2566 = vld [vmem:[%s2563 + $0x10] sm:$0xff]
    %v2567 = vld [vmem:[%s2563 + $0x18] sm:$0xff]
    %v2568 = vld [vmem:[%s2563 + $0x20] sm:$0xff]
    %v2569 = vld [vmem:[%s2563 + $0x28] sm:$0xff]
    %v2570 = vld [vmem:[%s2563 + $0x30] sm:$0xff]
    %v2571 = vld [vmem:[%s2563 + $0x38] sm:$0xff]
    %v2572 = vpack.c.bf16 %v2559, %v2559
    %v2573 = vpack.c.bf16 %v2560, %v2560
    %2574 = vmatprep.subr.bf16.mxu0 %v2084
    %2575 = vmatpush1.bf16.msra.mxu0 %v2083
    %2576 = vmatprep.subr.bf16.mxu0 %v2092
    %2577 = vmatpush1.bf16.msra.mxu0 %v2091
    %2578 = vmatprep.subr.bf16.mxu0 %v2100
    %2579 = vmatpush1.bf16.msra.mxu0 %v2099
    %2580 = vmatprep.subr.bf16.mxu0 %v2108
    %2581 = vmatpush1.bf16.msra.mxu0 %v2107
    %2582 = vmatprep.subr.bf16.mxu0 %v2116
    %2583 = vmatpush1.bf16.msra.mxu0 %v2115
    %2584 = vmatprep.subr.bf16.mxu0 %v2124
    %2585 = vmatpush1.bf16.msra.mxu0 %v2123
    %2586 = vmatprep.subr.bf16.mxu0 %v2132
    %2587 = vmatpush1.bf16.msra.mxu0 %v2131
    %2588 = vmatprep.subr.bf16.mxu0 %v2140
    %2589 = vmatpush1.bf16.msra.mxu0 %v2139
    %2590 = vmatprep.subr.bf16.mxu0 %v2148
    %2591 = vmatpush1.bf16.msra.mxu0 %v2147
    %2592 = vmatprep.subr.bf16.mxu0 %v2156
    %2593 = vmatpush1.bf16.msra.mxu0 %v2155
    %2594 = vmatprep.subr.bf16.mxu0 %v2164
    %2595 = vmatpush1.bf16.msra.mxu0 %v2163
    %2596 = vmatprep.subr.bf16.mxu0 %v2172
    %2597 = vmatpush1.bf16.msra.mxu0 %v2171
    %2598 = vmatprep.subr.bf16.mxu0 %v2180
    %2599 = vmatpush1.bf16.msra.mxu0 %v2179
    %2600 = vmatprep.subr.bf16.mxu0 %v2188
    %2601 = vmatpush1.bf16.msra.mxu0 %v2187
    %2602 = vmatprep.subr.bf16.mxu0 %v2196
    %2603 = vmatpush1.bf16.msra.mxu0 %v2195
    %2604 = vmatprep.subr.bf16.mxu0 %v2204
    %2605 = vmatpush1.bf16.msra.mxu0 %v2203
    %2606 = vmatprep.mubr.bf16.mxu0 %v2573
    %2607 = vmatmul.mubr.bf16.gmra.mrb[0].mxu0 %v2572
    %v2608 = vpop.f32.mrb[0].mxu0
    %v2609 = vadd.f32 0.0, %v2608
    %v2610 = vpop.f32.mrb[0].mxu0
    %v2611 = vadd.f32 0.0, %v2610
    %v2612 = vpop.f32.mrb[0].mxu0
    %v2613 = vpop.f32.mrb[0].mxu0
    %2614 = vdwg.mxu0
    %2615 = vmatprep.subr.bf16.mxu0 %v2086
    %2616 = vmatpush1.bf16.msra.mxu0 %v2085
    %2617 = vmatprep.subr.bf16.mxu0 %v2094
    %2618 = vmatpush1.bf16.msra.mxu0 %v2093
    %2619 = vmatprep.subr.bf16.mxu0 %v2102
    %2620 = vmatpush1.bf16.msra.mxu0 %v2101
    %2621 = vmatprep.subr.bf16.mxu0 %v2110
    %2622 = vmatpush1.bf16.msra.mxu0 %v2109
    %2623 = vmatprep.subr.bf16.mxu0 %v2118
    %2624 = vmatpush1.bf16.msra.mxu0 %v2117
    %2625 = vmatprep.subr.bf16.mxu0 %v2126
    %2626 = vmatpush1.bf16.msra.mxu0 %v2125
    %2627 = vmatprep.subr.bf16.mxu0 %v2134
    %2628 = vmatpush1.bf16.msra.mxu0 %v2133
    %2629 = vmatprep.subr.bf16.mxu0 %v2142
    %2630 = vmatpush1.bf16.msra.mxu0 %v2141
    %2631 = vmatprep.subr.bf16.mxu0 %v2150
    %2632 = vmatpush1.bf16.msra.mxu0 %v2149
    %2633 = vmatprep.subr.bf16.mxu0 %v2158
    %2634 = vmatpush1.bf16.msra.mxu0 %v2157
    %2635 = vmatprep.subr.bf16.mxu0 %v2166
    %2636 = vmatpush1.bf16.msra.mxu0 %v2165
    %2637 = vmatprep.subr.bf16.mxu0 %v2174
    %2638 = vmatpush1.bf16.msra.mxu0 %v2173
    %2639 = vmatprep.subr.bf16.mxu0 %v2182
    %2640 = vmatpush1.bf16.msra.mxu0 %v2181
    %2641 = vmatprep.subr.bf16.mxu0 %v2190
    %2642 = vmatpush1.bf16.msra.mxu0 %v2189
    %2643 = vmatprep.subr.bf16.mxu0 %v2198
    %2644 = vmatpush1.bf16.msra.mxu0 %v2197
    %2645 = vmatprep.subr.bf16.mxu0 %v2206
    %2646 = vmatpush1.bf16.msra.mxu0 %v2205
    %2647 = vmatprep.mubr.bf16.mxu0 %v2573
    %2648 = vmatmul.mubr.bf16.gmra.mrb[0].mxu0 %v2572
    %v2649 = vpop.f32.mrb[0].mxu0
    %v2650 = vadd.f32 0.0, %v2649
    %v2651 = vpop.f32.mrb[0].mxu0
    %v2652 = vadd.f32 0.0, %v2651
    %v2653 = vpop.f32.mrb[0].mxu0
    %v2654 = vpop.f32.mrb[0].mxu0
    %2655 = vdwg.mxu0
    %2656 = vmatprep.subr.bf16.mxu0 %v2088
    %2657 = vmatpush1.bf16.msra.mxu0 %v2087
    %2658 = vmatprep.subr.bf16.mxu0 %v2096
    %2659 = vmatpush1.bf16.msra.mxu0 %v2095
    %2660 = vmatprep.subr.bf16.mxu0 %v2104
    %2661 = vmatpush1.bf16.msra.mxu0 %v2103
    %2662 = vmatprep.subr.bf16.mxu0 %v2112
    %2663 = vmatpush1.bf16.msra.mxu0 %v2111
    %2664 = vmatprep.subr.bf16.mxu0 %v2120
    %2665 = vmatpush1.bf16.msra.mxu0 %v2119
    %2666 = vmatprep.subr.bf16.mxu0 %v2128
    %2667 = vmatpush1.bf16.msra.mxu0 %v2127
    %2668 = vmatprep.subr.bf16.mxu0 %v2136
    %2669 = vmatpush1.bf16.msra.mxu0 %v2135
    %2670 = vmatprep.subr.bf16.mxu0 %v2144
    %2671 = vmatpush1.bf16.msra.mxu0 %v2143
    %2672 = vmatprep.subr.bf16.mxu0 %v2152
    %2673 = vmatpush1.bf16.msra.mxu0 %v2151
    %2674 = vmatprep.subr.bf16.mxu0 %v2160
    %2675 = vmatpush1.bf16.msra.mxu0 %v2159
    %2676 = vmatprep.subr.bf16.mxu0 %v2168
    %2677 = vmatpush1.bf16.msra.mxu0 %v2167
    %2678 = vmatprep.subr.bf16.mxu0 %v2176
    %2679 = vmatpush1.bf16.msra.mxu0 %v2175
    %2680 = vmatprep.subr.bf16.mxu0 %v2184
    %2681 = vmatpush1.bf16.msra.mxu0 %v2183
    %2682 = vmatprep.subr.bf16.mxu0 %v2192
    %2683 = vmatpush1.bf16.msra.mxu0 %v2191
    %2684 = vmatprep.subr.bf16.mxu0 %v2200
    %2685 = vmatpush1.bf16.msra.mxu0 %v2199
    %2686 = vmatprep.subr.bf16.mxu0 %v2208
    %2687 = vmatpush1.bf16.msra.mxu0 %v2207
    %2688 = vmatprep.mubr.bf16.mxu0 %v2573
    %2689 = vmatmul.mubr.bf16.gmra.mrb[0].mxu0 %v2572
    %v2690 = vpop.f32.mrb[0].mxu0
    %v2691 = vadd.f32 0.0, %v2690
    %v2692 = vpop.f32.mrb[0].mxu0
    %v2693 = vadd.f32 0.0, %v2692
    %v2694 = vpop.f32.mrb[0].mxu0
    %v2695 = vpop.f32.mrb[0].mxu0
    %2696 = vdwg.mxu0
    %2697 = vmatprep.subr.bf16.mxu0 %v2090
    %2698 = vmatpush1.bf16.msra.mxu0 %v2089
    %2699 = vmatprep.subr.bf16.mxu0 %v2098
    %2700 = vmatpush1.bf16.msra.mxu0 %v2097
    %2701 = vmatprep.subr.bf16.mxu0 %v2106
    %2702 = vmatpush1.bf16.msra.mxu0 %v2105
    %2703 = vmatprep.subr.bf16.mxu0 %v2114
    %2704 = vmatpush1.bf16.msra.mxu0 %v2113
    %2705 = vmatprep.subr.bf16.mxu0 %v2122
    %2706 = vmatpush1.bf16.msra.mxu0 %v2121
    %2707 = vmatprep.subr.bf16.mxu0 %v2130
    %2708 = vmatpush1.bf16.msra.mxu0 %v2129
    %2709 = vmatprep.subr.bf16.mxu0 %v2138
    %2710 = vmatpush1.bf16.msra.mxu0 %v2137
    %2711 = vmatprep.subr.bf16.mxu0 %v2146
    %2712 = vmatpush1.bf16.msra.mxu0 %v2145
    %2713 = vmatprep.subr.bf16.mxu0 %v2154
    %2714 = vmatpush1.bf16.msra.mxu0 %v2153
    %2715 = vmatprep.subr.bf16.mxu0 %v2162
    %2716 = vmatpush1.bf16.msra.mxu0 %v2161
    %2717 = vmatprep.subr.bf16.mxu0 %v2170
    %2718 = vmatpush1.bf16.msra.mxu0 %v2169
    %2719 = vmatprep.subr.bf16.mxu0 %v2178
    %2720 = vmatpush1.bf16.msra.mxu0 %v2177
    %2721 = vmatprep.subr.bf16.mxu0 %v2186
    %2722 = vmatpush1.bf16.msra.mxu0 %v2185
    %2723 = vmatprep.subr.bf16.mxu0 %v2194
    %2724 = vmatpush1.bf16.msra.mxu0 %v2193
    %2725 = vmatprep.subr.bf16.mxu0 %v2202
    %2726 = vmatpush1.bf16.msra.mxu0 %v2201
    %2727 = vmatprep.subr.bf16.mxu0 %v2210
    %2728 = vmatpush1.bf16.msra.mxu0 %v2209
    %2729 = vmatprep.mubr.bf16.mxu0 %v2573
    %2730 = vmatmul.mubr.bf16.gmra.mrb[0].mxu0 %v2572
    %v2731 = vpop.f32.mrb[0].mxu0
    %v2732 = vadd.f32 0.0, %v2731
    %v2733 = vpop.f32.mrb[0].mxu0
    %v2734 = vadd.f32 0.0, %v2733
    %v2735 = vpop.f32.mrb[0].mxu0
    %v2736 = vpop.f32.mrb[0].mxu0
    %2737 = vdwg.mxu0
    %v2738 = vadd.f32 %v2564, %v2609
    %v2739 = vadd.f32 %v2565, %v2611
    %v2740 = vadd.f32 %v2566, %v2650
    %v2741 = vadd.f32 %v2567, %v2652
    %v2742 = vadd.f32 %v2568, %v2691
    %v2743 = vadd.f32 %v2569, %v2693
    %v2744 = vadd.f32 %v2570, %v2732
    %v2745 = vadd.f32 %v2571, %v2734
    %v2746 = vxor.u32 %v2738, 2147483648
    %v2747 = vxor.u32 %v2739, 2147483648
    %v2748 = vmul.f32 %v2746, 1.442695
    %v2749 = vpow.pop %v2748
    %v2750 = vmul.f32 %v2747, 1.442695
    %v2751 = vpow.pop %v2750
    %v2752 = vadd.f32 %v2749, 1.0
    %v2753 = vadd.f32 %v2751, 1.0
    %v2754 = vrcp.pop %v2752
    %v2755 = vmul.f32 1.0, %v2754
    %v2756 = vrcp.pop %v2753
    %v2757 = vmul.f32 1.0, %v2756
    %v2758 = vxor.u32 %v2740, 2147483648
    %v2759 = vxor.u32 %v2741, 2147483648
    %v2760 = vmul.f32 %v2758, 1.442695
    %v2761 = vpow.pop %v2760
    %v2762 = vmul.f32 %v2759, 1.442695
    %v2763 = vpow.pop %v2762
    %v2764 = vadd.f32 %v2761, 1.0
    %v2765 = vadd.f32 %v2763, 1.0
    %v2766 = vrcp.pop %v2764
    %v2767 = vmul.f32 1.0, %v2766
    %v2768 = vrcp.pop %v2765
    %v2769 = vmul.f32 1.0, %v2768
    %v2770 = vtanh.pop %v2742
    %v2771 = vtanh.pop %v2743
    %v2772 = vxor.u32 %v2744, 2147483648
    %v2773 = vxor.u32 %v2745, 2147483648
    %v2774 = vmul.f32 %v2772, 1.442695
    %v2775 = vpow.pop %v2774
    %v2776 = vmul.f32 %v2773, 1.442695
    %v2777 = vpow.pop %v2776
    %v2778 = vadd.f32 %v2775, 1.0
    %v2779 = vadd.f32 %v2777, 1.0
    %v2780 = vrcp.pop %v2778
    %v2781 = vmul.f32 1.0, %v2780
    %v2782 = vrcp.pop %v2779
    %v2783 = vmul.f32 1.0, %v2782
    %v2784 = vmul.f32 %v2767, %v2561
    %v2785 = vmul.f32 %v2769, %v2562
    %v2786 = vmul.f32 %v2755, %v2770
    %v2787 = vmul.f32 %v2757, %v2771
    %v2788 = vadd.f32 %v2784, %v2786
    %v2789 = vadd.f32 %v2785, %v2787
    %v2790 = vtanh.pop %v2788
    %v2791 = vtanh.pop %v2789
    %v2792 = vmul.f32 %v2781, %v2790
    %v2793 = vmul.f32 %v2783, %v2791
    %v2794 = vsel %vm1526, %v2792, %v2559
    %v2795 = vsel %vm1526, %v2793, %v2560
    %v2796 = vsel %vm1526, %v2788, %v2561
    %v2797 = vsel %vm1526, %v2789, %v2562
    %s2798 = scalar_lea.vmem [#allocation2], 128
    %v2799 = vld [vmem:[%s2798] sm:$0xff]
    %v2800 = vld [vmem:[%s2798 + $0x8] sm:$0xff]
    %v2801 = vld [vmem:[%s2798 + $0x10] sm:$0xff]
    %v2802 = vld [vmem:[%s2798 + $0x18] sm:$0xff]
    %v2803 = vld [vmem:[%s2798 + $0x20] sm:$0xff]
    %v2804 = vld [vmem:[%s2798 + $0x28] sm:$0xff]
    %v2805 = vld [vmem:[%s2798 + $0x30] sm:$0xff]
    %v2806 = vld [vmem:[%s2798 + $0x38] sm:$0xff]
    %v2807 = vpack.c.bf16 %v2794, %v2794
    %v2808 = vpack.c.bf16 %v2795, %v2795
    %2809 = vmatprep.subr.bf16.mxu0 %v2084
    %2810 = vmatpush1.bf16.msra.mxu0 %v2083
    %2811 = vmatprep.subr.bf16.mxu0 %v2092
    %2812 = vmatpush1.bf16.msra.mxu0 %v2091
    %2813 = vmatprep.subr.bf16.mxu0 %v2100
    %2814 = vmatpush1.bf16.msra.mxu0 %v2099
    %2815 = vmatprep.subr.bf16.mxu0 %v2108
    %2816 = vmatpush1.bf16.msra.mxu0 %v2107
    %2817 = vmatprep.subr.bf16.mxu0 %v2116
    %2818 = vmatpush1.bf16.msra.mxu0 %v2115
    %2819 = vmatprep.subr.bf16.mxu0 %v2124
    %2820 = vmatpush1.bf16.msra.mxu0 %v2123
    %2821 = vmatprep.subr.bf16.mxu0 %v2132
    %2822 = vmatpush1.bf16.msra.mxu0 %v2131
    %2823 = vmatprep.subr.bf16.mxu0 %v2140
    %2824 = vmatpush1.bf16.msra.mxu0 %v2139
    %2825 = vmatprep.subr.bf16.mxu0 %v2148
    %2826 = vmatpush1.bf16.msra.mxu0 %v2147
    %2827 = vmatprep.subr.bf16.mxu0 %v2156
    %2828 = vmatpush1.bf16.msra.mxu0 %v2155
    %2829 = vmatprep.subr.bf16.mxu0 %v2164
    %2830 = vmatpush1.bf16.msra.mxu0 %v2163
    %2831 = vmatprep.subr.bf16.mxu0 %v2172
    %2832 = vmatpush1.bf16.msra.mxu0 %v2171
    %2833 = vmatprep.subr.bf16.mxu0 %v2180
    %2834 = vmatpush1.bf16.msra.mxu0 %v2179
    %2835 = vmatprep.subr.bf16.mxu0 %v2188
    %2836 = vmatpush1.bf16.msra.mxu0 %v2187
    %2837 = vmatprep.subr.bf16.mxu0 %v2196
    %2838 = vmatpush1.bf16.msra.mxu0 %v2195
    %2839 = vmatprep.subr.bf16.mxu0 %v2204
    %2840 = vmatpush1.bf16.msra.mxu0 %v2203
    %2841 = vmatprep.mubr.bf16.mxu0 %v2808
    %2842 = vmatmul.mubr.bf16.gmra.mrb[0].mxu0 %v2807
    %v2843 = vpop.f32.mrb[0].mxu0
    %v2844 = vadd.f32 0.0, %v2843
    %v2845 = vpop.f32.mrb[0].mxu0
    %v2846 = vadd.f32 0.0, %v2845
    %v2847 = vpop.f32.mrb[0].mxu0
    %v2848 = vpop.f32.mrb[0].mxu0
    %2849 = vdwg.mxu0
    %2850 = vmatprep.subr.bf16.mxu0 %v2086
    %2851 = vmatpush1.bf16.msra.mxu0 %v2085
    %2852 = vmatprep.subr.bf16.mxu0 %v2094
    %2853 = vmatpush1.bf16.msra.mxu0 %v2093
    %2854 = vmatprep.subr.bf16.mxu0 %v2102
    %2855 = vmatpush1.bf16.msra.mxu0 %v2101
    %2856 = vmatprep.subr.bf16.mxu0 %v2110
    %2857 = vmatpush1.bf16.msra.mxu0 %v2109
    %2858 = vmatprep.subr.bf16.mxu0 %v2118
    %2859 = vmatpush1.bf16.msra.mxu0 %v2117
    %2860 = vmatprep.subr.bf16.mxu0 %v2126
    %2861 = vmatpush1.bf16.msra.mxu0 %v2125
    %2862 = vmatprep.subr.bf16.mxu0 %v2134
    %2863 = vmatpush1.bf16.msra.mxu0 %v2133
    %2864 = vmatprep.subr.bf16.mxu0 %v2142
    %2865 = vmatpush1.bf16.msra.mxu0 %v2141
    %2866 = vmatprep.subr.bf16.mxu0 %v2150
    %2867 = vmatpush1.bf16.msra.mxu0 %v2149
    %2868 = vmatprep.subr.bf16.mxu0 %v2158
    %2869 = vmatpush1.bf16.msra.mxu0 %v2157
    %2870 = vmatprep.subr.bf16.mxu0 %v2166
    %2871 = vmatpush1.bf16.msra.mxu0 %v2165
    %2872 = vmatprep.subr.bf16.mxu0 %v2174
    %2873 = vmatpush1.bf16.msra.mxu0 %v2173
    %2874 = vmatprep.subr.bf16.mxu0 %v2182
    %2875 = vmatpush1.bf16.msra.mxu0 %v2181
    %2876 = vmatprep.subr.bf16.mxu0 %v2190
    %2877 = vmatpush1.bf16.msra.mxu0 %v2189
    %2878 = vmatprep.subr.bf16.mxu0 %v2198
    %2879 = vmatpush1.bf16.msra.mxu0 %v2197
    %2880 = vmatprep.subr.bf16.mxu0 %v2206
    %2881 = vmatpush1.bf16.msra.mxu0 %v2205
    %2882 = vmatprep.mubr.bf16.mxu0 %v2808
    %2883 = vmatmul.mubr.bf16.gmra.mrb[0].mxu0 %v2807
    %v2884 = vpop.f32.mrb[0].mxu0
    %v2885 = vadd.f32 0.0, %v2884
    %v2886 = vpop.f32.mrb[0].mxu0
    %v2887 = vadd.f32 0.0, %v2886
    %v2888 = vpop.f32.mrb[0].mxu0
    %v2889 = vpop.f32.mrb[0].mxu0
    %2890 = vdwg.mxu0
    %2891 = vmatprep.subr.bf16.mxu0 %v2088
    %2892 = vmatpush1.bf16.msra.mxu0 %v2087
    %2893 = vmatprep.subr.bf16.mxu0 %v2096
    %2894 = vmatpush1.bf16.msra.mxu0 %v2095
    %2895 = vmatprep.subr.bf16.mxu0 %v2104
    %2896 = vmatpush1.bf16.msra.mxu0 %v2103
    %2897 = vmatprep.subr.bf16.mxu0 %v2112
    %2898 = vmatpush1.bf16.msra.mxu0 %v2111
    %2899 = vmatprep.subr.bf16.mxu0 %v2120
    %2900 = vmatpush1.bf16.msra.mxu0 %v2119
    %2901 = vmatprep.subr.bf16.mxu0 %v2128
    %2902 = vmatpush1.bf16.msra.mxu0 %v2127
    %2903 = vmatprep.subr.bf16.mxu0 %v2136
    %2904 = vmatpush1.bf16.msra.mxu0 %v2135
    %2905 = vmatprep.subr.bf16.mxu0 %v2144
    %2906 = vmatpush1.bf16.msra.mxu0 %v2143
    %2907 = vmatprep.subr.bf16.mxu0 %v2152
    %2908 = vmatpush1.bf16.msra.mxu0 %v2151
    %2909 = vmatprep.subr.bf16.mxu0 %v2160
    %2910 = vmatpush1.bf16.msra.mxu0 %v2159
    %2911 = vmatprep.subr.bf16.mxu0 %v2168
    %2912 = vmatpush1.bf16.msra.mxu0 %v2167
    %2913 = vmatprep.subr.bf16.mxu0 %v2176
    %2914 = vmatpush1.bf16.msra.mxu0 %v2175
    %2915 = vmatprep.subr.bf16.mxu0 %v2184
    %2916 = vmatpush1.bf16.msra.mxu0 %v2183
    %2917 = vmatprep.subr.bf16.mxu0 %v2192
    %2918 = vmatpush1.bf16.msra.mxu0 %v2191
    %2919 = vmatprep.subr.bf16.mxu0 %v2200
    %2920 = vmatpush1.bf16.msra.mxu0 %v2199
    %2921 = vmatprep.subr.bf16.mxu0 %v2208
    %2922 = vmatpush1.bf16.msra.mxu0 %v2207
    %2923 = vmatprep.mubr.bf16.mxu0 %v2808
    %2924 = vmatmul.mubr.bf16.gmra.mrb[0].mxu0 %v2807
    %v2925 = vpop.f32.mrb[0].mxu0
    %v2926 = vadd.f32 0.0, %v2925
    %v2927 = vpop.f32.mrb[0].mxu0
    %v2928 = vadd.f32 0.0, %v2927
    %v2929 = vpop.f32.mrb[0].mxu0
    %v2930 = vpop.f32.mrb[0].mxu0
    %2931 = vdwg.mxu0
    %2932 = vmatprep.subr.bf16.mxu0 %v2090
    %2933 = vmatpush1.bf16.msra.mxu0 %v2089
    %2934 = vmatprep.subr.bf16.mxu0 %v2098
    %2935 = vmatpush1.bf16.msra.mxu0 %v2097
    %2936 = vmatprep.subr.bf16.mxu0 %v2106
    %2937 = vmatpush1.bf16.msra.mxu0 %v2105
    %2938 = vmatprep.subr.bf16.mxu0 %v2114
    %2939 = vmatpush1.bf16.msra.mxu0 %v2113
    %2940 = vmatprep.subr.bf16.mxu0 %v2122
    %2941 = vmatpush1.bf16.msra.mxu0 %v2121
    %2942 = vmatprep.subr.bf16.mxu0 %v2130
    %2943 = vmatpush1.bf16.msra.mxu0 %v2129
    %2944 = vmatprep.subr.bf16.mxu0 %v2138
    %2945 = vmatpush1.bf16.msra.mxu0 %v2137
    %2946 = vmatprep.subr.bf16.mxu0 %v2146
    %2947 = vmatpush1.bf16.msra.mxu0 %v2145
    %2948 = vmatprep.subr.bf16.mxu0 %v2154
    %2949 = vmatpush1.bf16.msra.mxu0 %v2153
    %2950 = vmatprep.subr.bf16.mxu0 %v2162
    %2951 = vmatpush1.bf16.msra.mxu0 %v2161
    %2952 = vmatprep.subr.bf16.mxu0 %v2170
    %2953 = vmatpush1.bf16.msra.mxu0 %v2169
    %2954 = vmatprep.subr.bf16.mxu0 %v2178
    %2955 = vmatpush1.bf16.msra.mxu0 %v2177
    %2956 = vmatprep.subr.bf16.mxu0 %v2186
    %2957 = vmatpush1.bf16.msra.mxu0 %v2185
    %2958 = vmatprep.subr.bf16.mxu0 %v2194
    %2959 = vmatpush1.bf16.msra.mxu0 %v2193
    %2960 = vmatprep.subr.bf16.mxu0 %v2202
    %2961 = vmatpush1.bf16.msra.mxu0 %v2201
    %2962 = vmatprep.subr.bf16.mxu0 %v2210
    %2963 = vmatpush1.bf16.msra.mxu0 %v2209
    %2964 = vmatprep.mubr.bf16.mxu0 %v2808
    %2965 = vmatmul.mubr.bf16.gmra.mrb[0].mxu0 %v2807
    %v2966 = vpop.f32.mrb[0].mxu0
    %v2967 = vadd.f32 0.0, %v2966
    %v2968 = vpop.f32.mrb[0].mxu0
    %v2969 = vadd.f32 0.0, %v2968
    %v2970 = vpop.f32.mrb[0].mxu0
    %v2971 = vpop.f32.mrb[0].mxu0
    %2972 = vdwg.mxu0
    %v2973 = vadd.f32 %v2799, %v2844
    %v2974 = vadd.f32 %v2800, %v2846
    %v2975 = vadd.f32 %v2801, %v2885
    %v2976 = vadd.f32 %v2802, %v2887
    %v2977 = vadd.f32 %v2803, %v2926
    %v2978 = vadd.f32 %v2804, %v2928
    %v2979 = vadd.f32 %v2805, %v2967
    %v2980 = vadd.f32 %v2806, %v2969
    %v2981 = vxor.u32 %v2973, 2147483648
    %v2982 = vxor.u32 %v2974, 2147483648
    %v2983 = vmul.f32 %v2981, 1.442695
    %v2984 = vpow.pop %v2983
    %v2985 = vmul.f32 %v2982, 1.442695
    %v2986 = vpow.pop %v2985
    %v2987 = vadd.f32 %v2984, 1.0
    %v2988 = vadd.f32 %v2986, 1.0
    %v2989 = vrcp.pop %v2987
    %v2990 = vmul.f32 1.0, %v2989
    %v2991 = vrcp.pop %v2988
    %v2992 = vmul.f32 1.0, %v2991
    %v2993 = vxor.u32 %v2975, 2147483648
    %v2994 = vxor.u32 %v2976, 2147483648
    %v2995 = vmul.f32 %v2993, 1.442695
    %v2996 = vpow.pop %v2995
    %v2997 = vmul.f32 %v2994, 1.442695
    %v2998 = vpow.pop %v2997
    %v2999 = vadd.f32 %v2996, 1.0
    %v3000 = vadd.f32 %v2998, 1.0
    %v3001 = vrcp.pop %v2999
    %v3002 = vmul.f32 1.0, %v3001
    %v3003 = vrcp.pop %v3000
    %v3004 = vmul.f32 1.0, %v3003
    %v3005 = vtanh.pop %v2977
    %v3006 = vtanh.pop %v2978
    %v3007 = vxor.u32 %v2979, 2147483648
    %v3008 = vxor.u32 %v2980, 2147483648
    %v3009 = vmul.f32 %v3007, 1.442695
    %v3010 = vpow.pop %v3009
    %v3011 = vmul.f32 %v3008, 1.442695
    %v3012 = vpow.pop %v3011
    %v3013 = vadd.f32 %v3010, 1.0
    %v3014 = vadd.f32 %v3012, 1.0
    %v3015 = vrcp.pop %v3013
    %v3016 = vmul.f32 1.0, %v3015
    %v3017 = vrcp.pop %v3014
    %v3018 = vmul.f32 1.0, %v3017
    %v3019 = vmul.f32 %v3002, %v2796
    %v3020 = vmul.f32 %v3004, %v2797
    %v3021 = vmul.f32 %v2990, %v3005
    %v3022 = vmul.f32 %v2992, %v3006
    %v3023 = vadd.f32 %v3019, %v3021
    %v3024 = vadd.f32 %v3020, %v3022
    %v3025 = vtanh.pop %v3023
    %v3026 = vtanh.pop %v3024
    %v3027 = vmul.f32 %v3016, %v3025
    %v3028 = vmul.f32 %v3018, %v3026
    %v3029 = vsel %vm1532, %v3027, %v2794
    %v3030 = vsel %vm1532, %v3028, %v2795
    %v3031 = vsel %vm1532, %v3023, %v2796
    %v3032 = vsel %vm1532, %v3024, %v2797
    %s3033 = scalar_lea.vmem [#allocation2], 192
    %v3034 = vld [vmem:[%s3033] sm:$0xff]
    %v3035 = vld [vmem:[%s3033 + $0x8] sm:$0xff]
    %v3036 = vld [vmem:[%s3033 + $0x10] sm:$0xff]
    %v3037 = vld [vmem:[%s3033 + $0x18] sm:$0xff]
    %v3038 = vld [vmem:[%s3033 + $0x20] sm:$0xff]
    %v3039 = vld [vmem:[%s3033 + $0x28] sm:$0xff]
    %v3040 = vld [vmem:[%s3033 + $0x30] sm:$0xff]
    %v3041 = vld [vmem:[%s3033 + $0x38] sm:$0xff]
    %v3042 = vpack.c.bf16 %v3029, %v3029
    %v3043 = vpack.c.bf16 %v3030, %v3030
    %3044 = vmatprep.subr.bf16.mxu0 %v2084
    %3045 = vmatpush1.bf16.msra.mxu0 %v2083
    %3046 = vmatprep.subr.bf16.mxu0 %v2092
    %3047 = vmatpush1.bf16.msra.mxu0 %v2091
    %3048 = vmatprep.subr.bf16.mxu0 %v2100
    %3049 = vmatpush1.bf16.msra.mxu0 %v2099
    %3050 = vmatprep.subr.bf16.mxu0 %v2108
    %3051 = vmatpush1.bf16.msra.mxu0 %v2107
    %3052 = vmatprep.subr.bf16.mxu0 %v2116
    %3053 = vmatpush1.bf16.msra.mxu0 %v2115
    %3054 = vmatprep.subr.bf16.mxu0 %v2124
    %3055 = vmatpush1.bf16.msra.mxu0 %v2123
    %3056 = vmatprep.subr.bf16.mxu0 %v2132
    %3057 = vmatpush1.bf16.msra.mxu0 %v2131
    %3058 = vmatprep.subr.bf16.mxu0 %v2140
    %3059 = vmatpush1.bf16.msra.mxu0 %v2139
    %3060 = vmatprep.subr.bf16.mxu0 %v2148
    %3061 = vmatpush1.bf16.msra.mxu0 %v2147
    %3062 = vmatprep.subr.bf16.mxu0 %v2156
    %3063 = vmatpush1.bf16.msra.mxu0 %v2155
    %3064 = vmatprep.subr.bf16.mxu0 %v2164
    %3065 = vmatpush1.bf16.msra.mxu0 %v2163
    %3066 = vmatprep.subr.bf16.mxu0 %v2172
    %3067 = vmatpush1.bf16.msra.mxu0 %v2171
    %3068 = vmatprep.subr.bf16.mxu0 %v2180
    %3069 = vmatpush1.bf16.msra.mxu0 %v2179
    %3070 = vmatprep.subr.bf16.mxu0 %v2188
    %3071 = vmatpush1.bf16.msra.mxu0 %v2187
    %3072 = vmatprep.subr.bf16.mxu0 %v2196
    %3073 = vmatpush1.bf16.msra.mxu0 %v2195
    %3074 = vmatprep.subr.bf16.mxu0 %v2204
    %3075 = vmatpush1.bf16.msra.mxu0 %v2203
    %3076 = vmatprep.mubr.bf16.mxu0 %v3043
    %3077 = vmatmul.mubr.bf16.gmra.mrb[0].mxu0 %v3042
    %v3078 = vpop.f32.mrb[0].mxu0
    %v3079 = vadd.f32 0.0, %v3078
    %v3080 = vpop.f32.mrb[0].mxu0
    %v3081 = vadd.f32 0.0, %v3080
    %v3082 = vpop.f32.mrb[0].mxu0
    %v3083 = vpop.f32.mrb[0].mxu0
    %3084 = vdwg.mxu0
    %3085 = vmatprep.subr.bf16.mxu0 %v2086
    %3086 = vmatpush1.bf16.msra.mxu0 %v2085
    %3087 = vmatprep.subr.bf16.mxu0 %v2094
    %3088 = vmatpush1.bf16.msra.mxu0 %v2093
    %3089 = vmatprep.subr.bf16.mxu0 %v2102
    %3090 = vmatpush1.bf16.msra.mxu0 %v2101
    %3091 = vmatprep.subr.bf16.mxu0 %v2110
    %3092 = vmatpush1.bf16.msra.mxu0 %v2109
    %3093 = vmatprep.subr.bf16.mxu0 %v2118
    %3094 = vmatpush1.bf16.msra.mxu0 %v2117
    %3095 = vmatprep.subr.bf16.mxu0 %v2126
    %3096 = vmatpush1.bf16.msra.mxu0 %v2125
    %3097 = vmatprep.subr.bf16.mxu0 %v2134
    %3098 = vmatpush1.bf16.msra.mxu0 %v2133
    %3099 = vmatprep.subr.bf16.mxu0 %v2142
    %3100 = vmatpush1.bf16.msra.mxu0 %v2141
    %3101 = vmatprep.subr.bf16.mxu0 %v2150
    %3102 = vmatpush1.bf16.msra.mxu0 %v2149
    %3103 = vmatprep.subr.bf16.mxu0 %v2158
    %3104 = vmatpush1.bf16.msra.mxu0 %v2157
    %3105 = vmatprep.subr.bf16.mxu0 %v2166
    %3106 = vmatpush1.bf16.msra.mxu0 %v2165
    %3107 = vmatprep.subr.bf16.mxu0 %v2174
    %3108 = vmatpush1.bf16.msra.mxu0 %v2173
    %3109 = vmatprep.subr.bf16.mxu0 %v2182
    %3110 = vmatpush1.bf16.msra.mxu0 %v2181
    %3111 = vmatprep.subr.bf16.mxu0 %v2190
    %3112 = vmatpush1.bf16.msra.mxu0 %v2189
    %3113 = vmatprep.subr.bf16.mxu0 %v2198
    %3114 = vmatpush1.bf16.msra.mxu0 %v2197
    %3115 = vmatprep.subr.bf16.mxu0 %v2206
    %3116 = vmatpush1.bf16.msra.mxu0 %v2205
    %3117 = vmatprep.mubr.bf16.mxu0 %v3043
    %3118 = vmatmul.mubr.bf16.gmra.mrb[0].mxu0 %v3042
    %v3119 = vpop.f32.mrb[0].mxu0
    %v3120 = vadd.f32 0.0, %v3119
    %v3121 = vpop.f32.mrb[0].mxu0
    %v3122 = vadd.f32 0.0, %v3121
    %v3123 = vpop.f32.mrb[0].mxu0
    %v3124 = vpop.f32.mrb[0].mxu0
    %3125 = vdwg.mxu0
    %3126 = vmatprep.subr.bf16.mxu0 %v2088
    %3127 = vmatpush1.bf16.msra.mxu0 %v2087
    %3128 = vmatprep.subr.bf16.mxu0 %v2096
    %3129 = vmatpush1.bf16.msra.mxu0 %v2095
    %3130 = vmatprep.subr.bf16.mxu0 %v2104
    %3131 = vmatpush1.bf16.msra.mxu0 %v2103
    %3132 = vmatprep.subr.bf16.mxu0 %v2112
    %3133 = vmatpush1.bf16.msra.mxu0 %v2111
    %3134 = vmatprep.subr.bf16.mxu0 %v2120
    %3135 = vmatpush1.bf16.msra.mxu0 %v2119
    %3136 = vmatprep.subr.bf16.mxu0 %v2128
    %3137 = vmatpush1.bf16.msra.mxu0 %v2127
    %3138 = vmatprep.subr.bf16.mxu0 %v2136
    %3139 = vmatpush1.bf16.msra.mxu0 %v2135
    %3140 = vmatprep.subr.bf16.mxu0 %v2144
    %3141 = vmatpush1.bf16.msra.mxu0 %v2143
    %3142 = vmatprep.subr.bf16.mxu0 %v2152
    %3143 = vmatpush1.bf16.msra.mxu0 %v2151
    %3144 = vmatprep.subr.bf16.mxu0 %v2160
    %3145 = vmatpush1.bf16.msra.mxu0 %v2159
    %3146 = vmatprep.subr.bf16.mxu0 %v2168
    %3147 = vmatpush1.bf16.msra.mxu0 %v2167
    %3148 = vmatprep.subr.bf16.mxu0 %v2176
    %3149 = vmatpush1.bf16.msra.mxu0 %v2175
    %3150 = vmatprep.subr.bf16.mxu0 %v2184
    %3151 = vmatpush1.bf16.msra.mxu0 %v2183
    %3152 = vmatprep.subr.bf16.mxu0 %v2192
    %3153 = vmatpush1.bf16.msra.mxu0 %v2191
    %3154 = vmatprep.subr.bf16.mxu0 %v2200
    %3155 = vmatpush1.bf16.msra.mxu0 %v2199
    %3156 = vmatprep.subr.bf16.mxu0 %v2208
    %3157 = vmatpush1.bf16.msra.mxu0 %v2207
    %3158 = vmatprep.mubr.bf16.mxu0 %v3043
    %3159 = vmatmul.mubr.bf16.gmra.mrb[0].mxu0 %v3042
    %v3160 = vpop.f32.mrb[0].mxu0
    %v3161 = vadd.f32 0.0, %v3160
    %v3162 = vpop.f32.mrb[0].mxu0
    %v3163 = vadd.f32 0.0, %v3162
    %v3164 = vpop.f32.mrb[0].mxu0
    %v3165 = vpop.f32.mrb[0].mxu0
    %3166 = vdwg.mxu0
    %3167 = vmatprep.subr.bf16.mxu0 %v2090
    %3168 = vmatpush1.bf16.msra.mxu0 %v2089
    %3169 = vmatprep.subr.bf16.mxu0 %v2098
    %3170 = vmatpush1.bf16.msra.mxu0 %v2097
    %3171 = vmatprep.subr.bf16.mxu0 %v2106
    %3172 = vmatpush1.bf16.msra.mxu0 %v2105
    %3173 = vmatprep.subr.bf16.mxu0 %v2114
    %3174 = vmatpush1.bf16.msra.mxu0 %v2113
    %3175 = vmatprep.subr.bf16.mxu0 %v2122
    %3176 = vmatpush1.bf16.msra.mxu0 %v2121
    %3177 = vmatprep.subr.bf16.mxu0 %v2130
    %3178 = vmatpush1.bf16.msra.mxu0 %v2129
    %3179 = vmatprep.subr.bf16.mxu0 %v2138
    %3180 = vmatpush1.bf16.msra.mxu0 %v2137
    %3181 = vmatprep.subr.bf16.mxu0 %v2146
    %3182 = vmatpush1.bf16.msra.mxu0 %v2145
    %3183 = vmatprep.subr.bf16.mxu0 %v2154
    %3184 = vmatpush1.bf16.msra.mxu0 %v2153
    %3185 = vmatprep.subr.bf16.mxu0 %v2162
    %3186 = vmatpush1.bf16.msra.mxu0 %v2161
    %3187 = vmatprep.subr.bf16.mxu0 %v2170
    %3188 = vmatpush1.bf16.msra.mxu0 %v2169
    %3189 = vmatprep.subr.bf16.mxu0 %v2178
    %3190 = vmatpush1.bf16.msra.mxu0 %v2177
    %3191 = vmatprep.subr.bf16.mxu0 %v2186
    %3192 = vmatpush1.bf16.msra.mxu0 %v2185
    %3193 = vmatprep.subr.bf16.mxu0 %v2194
    %3194 = vmatpush1.bf16.msra.mxu0 %v2193
    %3195 = vmatprep.subr.bf16.mxu0 %v2202
    %3196 = vmatpush1.bf16.msra.mxu0 %v2201
    %3197 = vmatprep.subr.bf16.mxu0 %v2210
    %3198 = vmatpush1.bf16.msra.mxu0 %v2209
    %3199 = vmatprep.mubr.bf16.mxu0 %v3043
    %3200 = vmatmul.mubr.bf16.gmra.mrb[0].mxu0 %v3042
    %v3201 = vpop.f32.mrb[0].mxu0
    %v3202 = vadd.f32 0.0, %v3201
    %v3203 = vpop.f32.mrb[0].mxu0
    %v3204 = vadd.f32 0.0, %v3203
    %v3205 = vpop.f32.mrb[0].mxu0
    %v3206 = vpop.f32.mrb[0].mxu0
    %3207 = vdwg.mxu0
    %v3208 = vadd.f32 %v3034, %v3079
    %v3209 = vadd.f32 %v3035, %v3081
    %v3210 = vadd.f32 %v3036, %v3120
    %v3211 = vadd.f32 %v3037, %v3122
    %v3212 = vadd.f32 %v3038, %v3161
    %v3213 = vadd.f32 %v3039, %v3163
    %v3214 = vadd.f32 %v3040, %v3202
    %v3215 = vadd.f32 %v3041, %v3204
    %v3216 = vxor.u32 %v3208, 2147483648
    %v3217 = vxor.u32 %v3209, 2147483648
    %v3218 = vmul.f32 %v3216, 1.442695
    %v3219 = vpow.pop %v3218
    %v3220 = vmul.f32 %v3217, 1.442695
    %v3221 = vpow.pop %v3220
    %v3222 = vadd.f32 %v3219, 1.0
    %v3223 = vadd.f32 %v3221, 1.0
    %v3224 = vrcp.pop %v3222
    %v3225 = vmul.f32 1.0, %v3224
    %v3226 = vrcp.pop %v3223
    %v3227 = vmul.f32 1.0, %v3226
    %v3228 = vxor.u32 %v3210, 2147483648
    %v3229 = vxor.u32 %v3211, 2147483648
    %v3230 = vmul.f32 %v3228, 1.442695
    %v3231 = vpow.pop %v3230
    %v3232 = vmul.f32 %v3229, 1.442695
    %v3233 = vpow.pop %v3232
    %v3234 = vadd.f32 %v3231, 1.0
    %v3235 = vadd.f32 %v3233, 1.0
    %v3236 = vrcp.pop %v3234
    %v3237 = vmul.f32 1.0, %v3236
    %v3238 = vrcp.pop %v3235
    %v3239 = vmul.f32 1.0, %v3238
    %v3240 = vtanh.pop %v3212
    %v3241 = vtanh.pop %v3213
    %v3242 = vxor.u32 %v3214, 2147483648
    %v3243 = vxor.u32 %v3215, 2147483648
    %v3244 = vmul.f32 %v3242, 1.442695
    %v3245 = vpow.pop %v3244
    %v3246 = vmul.f32 %v3243, 1.442695
    %v3247 = vpow.pop %v3246
    %v3248 = vadd.f32 %v3245, 1.0
    %v3249 = vadd.f32 %v3247, 1.0
    %v3250 = vrcp.pop %v3248
    %v3251 = vmul.f32 1.0, %v3250
    %v3252 = vrcp.pop %v3249
    %v3253 = vmul.f32 1.0, %v3252
    %v3254 = vmul.f32 %v3237, %v3031
    %v3255 = vmul.f32 %v3239, %v3032
    %v3256 = vmul.f32 %v3225, %v3240
    %v3257 = vmul.f32 %v3227, %v3241
    %v3258 = vadd.f32 %v3254, %v3256
    %v3259 = vadd.f32 %v3255, %v3257
    %v3260 = vtanh.pop %v3258
    %v3261 = vtanh.pop %v3259
    %v3262 = vmul.f32 %v3251, %v3260
    %v3263 = vmul.f32 %v3253, %v3261
    %v3264 = vsel %vm1538, %v3262, %v3029
    %v3265 = vsel %vm1538, %v3263, %v3030
    %v3266 = vsel %vm1538, %v3258, %v3031
    %v3267 = vsel %vm1538, %v3259, %v3032
    %s3268 = scalar_lea.vmem [#allocation2], 256
    %v3269 = vld [vmem:[%s3268] sm:$0xff]
    %v3270 = vld [vmem:[%s3268 + $0x8] sm:$0xff]
    %v3271 = vld [vmem:[%s3268 + $0x10] sm:$0xff]
    %v3272 = vld [vmem:[%s3268 + $0x18] sm:$0xff]
    %v3273 = vld [vmem:[%s3268 + $0x20] sm:$0xff]
    %v3274 = vld [vmem:[%s3268 + $0x28] sm:$0xff]
    %v3275 = vld [vmem:[%s3268 + $0x30] sm:$0xff]
    %v3276 = vld [vmem:[%s3268 + $0x38] sm:$0xff]
    %v3277 = vpack.c.bf16 %v3264, %v3264
    %v3278 = vpack.c.bf16 %v3265, %v3265
    %3279 = vmatprep.subr.bf16.mxu0 %v2084
    %3280 = vmatpush1.bf16.msra.mxu0 %v2083
    %3281 = vmatprep.subr.bf16.mxu0 %v2092
    %3282 = vmatpush1.bf16.msra.mxu0 %v2091
    %3283 = vmatprep.subr.bf16.mxu0 %v2100
    %3284 = vmatpush1.bf16.msra.mxu0 %v2099
    %3285 = vmatprep.subr.bf16.mxu0 %v2108
    %3286 = vmatpush1.bf16.msra.mxu0 %v2107
    %3287 = vmatprep.subr.bf16.mxu0 %v2116
    %3288 = vmatpush1.bf16.msra.mxu0 %v2115
    %3289 = vmatprep.subr.bf16.mxu0 %v2124
    %3290 = vmatpush1.bf16.msra.mxu0 %v2123
    %3291 = vmatprep.subr.bf16.mxu0 %v2132
    %3292 = vmatpush1.bf16.msra.mxu0 %v2131
    %3293 = vmatprep.subr.bf16.mxu0 %v2140
    %3294 = vmatpush1.bf16.msra.mxu0 %v2139
    %3295 = vmatprep.subr.bf16.mxu0 %v2148
    %3296 = vmatpush1.bf16.msra.mxu0 %v2147
    %3297 = vmatprep.subr.bf16.mxu0 %v2156
    %3298 = vmatpush1.bf16.msra.mxu0 %v2155
    %3299 = vmatprep.subr.bf16.mxu0 %v2164
    %3300 = vmatpush1.bf16.msra.mxu0 %v2163
    %3301 = vmatprep.subr.bf16.mxu0 %v2172
    %3302 = vmatpush1.bf16.msra.mxu0 %v2171
    %3303 = vmatprep.subr.bf16.mxu0 %v2180
    %3304 = vmatpush1.bf16.msra.mxu0 %v2179
    %3305 = vmatprep.subr.bf16.mxu0 %v2188
    %3306 = vmatpush1.bf16.msra.mxu0 %v2187
    %3307 = vmatprep.subr.bf16.mxu0 %v2196
    %3308 = vmatpush1.bf16.msra.mxu0 %v2195
    %3309 = vmatprep.subr.bf16.mxu0 %v2204
    %3310 = vmatpush1.bf16.msra.mxu0 %v2203
    %3311 = vmatprep.mubr.bf16.mxu0 %v3278
    %3312 = vmatmul.mubr.bf16.gmra.mrb[0].mxu0 %v3277
    %v3313 = vpop.f32.mrb[0].mxu0
    %v3314 = vadd.f32 0.0, %v3313
    %v3315 = vpop.f32.mrb[0].mxu0
    %v3316 = vadd.f32 0.0, %v3315
    %v3317 = vpop.f32.mrb[0].mxu0
    %v3318 = vpop.f32.mrb[0].mxu0
    %3319 = vdwg.mxu0
    %3320 = vmatprep.subr.bf16.mxu0 %v2086
    %3321 = vmatpush1.bf16.msra.mxu0 %v2085
    %3322 = vmatprep.subr.bf16.mxu0 %v2094
    %3323 = vmatpush1.bf16.msra.mxu0 %v2093
    %3324 = vmatprep.subr.bf16.mxu0 %v2102
    %3325 = vmatpush1.bf16.msra.mxu0 %v2101
    %3326 = vmatprep.subr.bf16.mxu0 %v2110
    %3327 = vmatpush1.bf16.msra.mxu0 %v2109
    %3328 = vmatprep.subr.bf16.mxu0 %v2118
    %3329 = vmatpush1.bf16.msra.mxu0 %v2117
    %3330 = vmatprep.subr.bf16.mxu0 %v2126
    %3331 = vmatpush1.bf16.msra.mxu0 %v2125
    %3332 = vmatprep.subr.bf16.mxu0 %v2134
    %3333 = vmatpush1.bf16.msra.mxu0 %v2133
    %3334 = vmatprep.subr.bf16.mxu0 %v2142
    %3335 = vmatpush1.bf16.msra.mxu0 %v2141
    %3336 = vmatprep.subr.bf16.mxu0 %v2150
    %3337 = vmatpush1.bf16.msra.mxu0 %v2149
    %3338 = vmatprep.subr.bf16.mxu0 %v2158
    %3339 = vmatpush1.bf16.msra.mxu0 %v2157
    %3340 = vmatprep.subr.bf16.mxu0 %v2166
    %3341 = vmatpush1.bf16.msra.mxu0 %v2165
    %3342 = vmatprep.subr.bf16.mxu0 %v2174
    %3343 = vmatpush1.bf16.msra.mxu0 %v2173
    %3344 = vmatprep.subr.bf16.mxu0 %v2182
    %3345 = vmatpush1.bf16.msra.mxu0 %v2181
    %3346 = vmatprep.subr.bf16.mxu0 %v2190
    %3347 = vmatpush1.bf16.msra.mxu0 %v2189
    %3348 = vmatprep.subr.bf16.mxu0 %v2198
    %3349 = vmatpush1.bf16.msra.mxu0 %v2197
    %3350 = vmatprep.subr.bf16.mxu0 %v2206
    %3351 = vmatpush1.bf16.msra.mxu0 %v2205
    %3352 = vmatprep.mubr.bf16.mxu0 %v3278
    %3353 = vmatmul.mubr.bf16.gmra.mrb[0].mxu0 %v3277
    %v3354 = vpop.f32.mrb[0].mxu0
    %v3355 = vadd.f32 0.0, %v3354
    %v3356 = vpop.f32.mrb[0].mxu0
    %v3357 = vadd.f32 0.0, %v3356
    %v3358 = vpop.f32.mrb[0].mxu0
    %v3359 = vpop.f32.mrb[0].mxu0
    %3360 = vdwg.mxu0
    %3361 = vmatprep.subr.bf16.mxu0 %v2088
    %3362 = vmatpush1.bf16.msra.mxu0 %v2087
    %3363 = vmatprep.subr.bf16.mxu0 %v2096
    %3364 = vmatpush1.bf16.msra.mxu0 %v2095
    %3365 = vmatprep.subr.bf16.mxu0 %v2104
    %3366 = vmatpush1.bf16.msra.mxu0 %v2103
    %3367 = vmatprep.subr.bf16.mxu0 %v2112
    %3368 = vmatpush1.bf16.msra.mxu0 %v2111
    %3369 = vmatprep.subr.bf16.mxu0 %v2120
    %3370 = vmatpush1.bf16.msra.mxu0 %v2119
    %3371 = vmatprep.subr.bf16.mxu0 %v2128
    %3372 = vmatpush1.bf16.msra.mxu0 %v2127
    %3373 = vmatprep.subr.bf16.mxu0 %v2136
    %3374 = vmatpush1.bf16.msra.mxu0 %v2135
    %3375 = vmatprep.subr.bf16.mxu0 %v2144
    %3376 = vmatpush1.bf16.msra.mxu0 %v2143
    %3377 = vmatprep.subr.bf16.mxu0 %v2152
    %3378 = vmatpush1.bf16.msra.mxu0 %v2151
    %3379 = vmatprep.subr.bf16.mxu0 %v2160
    %3380 = vmatpush1.bf16.msra.mxu0 %v2159
    %3381 = vmatprep.subr.bf16.mxu0 %v2168
    %3382 = vmatpush1.bf16.msra.mxu0 %v2167
    %3383 = vmatprep.subr.bf16.mxu0 %v2176
    %3384 = vmatpush1.bf16.msra.mxu0 %v2175
    %3385 = vmatprep.subr.bf16.mxu0 %v2184
    %3386 = vmatpush1.bf16.msra.mxu0 %v2183
    %3387 = vmatprep.subr.bf16.mxu0 %v2192
    %3388 = vmatpush1.bf16.msra.mxu0 %v2191
    %3389 = vmatprep.subr.bf16.mxu0 %v2200
    %3390 = vmatpush1.bf16.msra.mxu0 %v2199
    %3391 = vmatprep.subr.bf16.mxu0 %v2208
    %3392 = vmatpush1.bf16.msra.mxu0 %v2207
    %3393 = vmatprep.mubr.bf16.mxu0 %v3278
    %3394 = vmatmul.mubr.bf16.gmra.mrb[0].mxu0 %v3277
    %v3395 = vpop.f32.mrb[0].mxu0
    %v3396 = vadd.f32 0.0, %v3395
    %v3397 = vpop.f32.mrb[0].mxu0
    %v3398 = vadd.f32 0.0, %v3397
    %v3399 = vpop.f32.mrb[0].mxu0
    %v3400 = vpop.f32.mrb[0].mxu0
    %3401 = vdwg.mxu0
    %3402 = vmatprep.subr.bf16.mxu0 %v2090
    %3403 = vmatpush1.bf16.msra.mxu0 %v2089
    %3404 = vmatprep.subr.bf16.mxu0 %v2098
    %3405 = vmatpush1.bf16.msra.mxu0 %v2097
    %3406 = vmatprep.subr.bf16.mxu0 %v2106
    %3407 = vmatpush1.bf16.msra.mxu0 %v2105
    %3408 = vmatprep.subr.bf16.mxu0 %v2114
    %3409 = vmatpush1.bf16.msra.mxu0 %v2113
    %3410 = vmatprep.subr.bf16.mxu0 %v2122
    %3411 = vmatpush1.bf16.msra.mxu0 %v2121
    %3412 = vmatprep.subr.bf16.mxu0 %v2130
    %3413 = vmatpush1.bf16.msra.mxu0 %v2129
    %3414 = vmatprep.subr.bf16.mxu0 %v2138
    %3415 = vmatpush1.bf16.msra.mxu0 %v2137
    %3416 = vmatprep.subr.bf16.mxu0 %v2146
    %3417 = vmatpush1.bf16.msra.mxu0 %v2145
    %3418 = vmatprep.subr.bf16.mxu0 %v2154
    %3419 = vmatpush1.bf16.msra.mxu0 %v2153
    %3420 = vmatprep.subr.bf16.mxu0 %v2162
    %3421 = vmatpush1.bf16.msra.mxu0 %v2161
    %3422 = vmatprep.subr.bf16.mxu0 %v2170
    %3423 = vmatpush1.bf16.msra.mxu0 %v2169
    %3424 = vmatprep.subr.bf16.mxu0 %v2178
    %3425 = vmatpush1.bf16.msra.mxu0 %v2177
    %3426 = vmatprep.subr.bf16.mxu0 %v2186
    %3427 = vmatpush1.bf16.msra.mxu0 %v2185
    %3428 = vmatprep.subr.bf16.mxu0 %v2194
    %3429 = vmatpush1.bf16.msra.mxu0 %v2193
    %3430 = vmatprep.subr.bf16.mxu0 %v2202
    %3431 = vmatpush1.bf16.msra.mxu0 %v2201
    %3432 = vmatprep.subr.bf16.mxu0 %v2210
    %3433 = vmatpush1.bf16.msra.mxu0 %v2209
    %3434 = vmatprep.mubr.bf16.mxu0 %v3278
    %3435 = vmatmul.mubr.bf16.gmra.mrb[0].mxu0 %v3277
    %v3436 = vpop.f32.mrb[0].mxu0
    %v3437 = vadd.f32 0.0, %v3436
    %v3438 = vpop.f32.mrb[0].mxu0
    %v3439 = vadd.f32 0.0, %v3438
    %v3440 = vpop.f32.mrb[0].mxu0
    %v3441 = vpop.f32.mrb[0].mxu0
    %3442 = vdwg.mxu0
    %v3443 = vadd.f32 %v3269, %v3314
    %v3444 = vadd.f32 %v3270, %v3316
    %v3445 = vadd.f32 %v3271, %v3355
    %v3446 = vadd.f32 %v3272, %v3357
    %v3447 = vadd.f32 %v3273, %v3396
    %v3448 = vadd.f32 %v3274, %v3398
    %v3449 = vadd.f32 %v3275, %v3437
    %v3450 = vadd.f32 %v3276, %v3439
    %v3451 = vxor.u32 %v3443, 2147483648
    %v3452 = vxor.u32 %v3444, 2147483648
    %v3453 = vmul.f32 %v3451, 1.442695
    %v3454 = vpow.pop %v3453
    %v3455 = vmul.f32 %v3452, 1.442695
    %v3456 = vpow.pop %v3455
    %v3457 = vadd.f32 %v3454, 1.0
    %v3458 = vadd.f32 %v3456, 1.0
    %v3459 = vrcp.pop %v3457
    %v3460 = vmul.f32 1.0, %v3459
    %v3461 = vrcp.pop %v3458
    %v3462 = vmul.f32 1.0, %v3461
    %v3463 = vxor.u32 %v3445, 2147483648
    %v3464 = vxor.u32 %v3446, 2147483648
    %v3465 = vmul.f32 %v3463, 1.442695
    %v3466 = vpow.pop %v3465
    %v3467 = vmul.f32 %v3464, 1.442695
    %v3468 = vpow.pop %v3467
    %v3469 = vadd.f32 %v3466, 1.0
    %v3470 = vadd.f32 %v3468, 1.0
    %v3471 = vrcp.pop %v3469
    %v3472 = vmul.f32 1.0, %v3471
    %v3473 = vrcp.pop %v3470
    %v3474 = vmul.f32 1.0, %v3473
    %v3475 = vtanh.pop %v3447
    %v3476 = vtanh.pop %v3448
    %v3477 = vxor.u32 %v3449, 2147483648
    %v3478 = vxor.u32 %v3450, 2147483648
    %v3479 = vmul.f32 %v3477, 1.442695
    %v3480 = vpow.pop %v3479
    %v3481 = vmul.f32 %v3478, 1.442695
    %v3482 = vpow.pop %v3481
    %v3483 = vadd.f32 %v3480, 1.0
    %v3484 = vadd.f32 %v3482, 1.0
    %v3485 = vrcp.pop %v3483
    %v3486 = vmul.f32 1.0, %v3485
    %v3487 = vrcp.pop %v3484
    %v3488 = vmul.f32 1.0, %v3487
    %v3489 = vmul.f32 %v3472, %v3266
    %v3490 = vmul.f32 %v3474, %v3267
    %v3491 = vmul.f32 %v3460, %v3475
    %v3492 = vmul.f32 %v3462, %v3476
    %v3493 = vadd.f32 %v3489, %v3491
    %v3494 = vadd.f32 %v3490, %v3492
    %v3495 = vtanh.pop %v3493
    %v3496 = vtanh.pop %v3494
    %v3497 = vmul.f32 %v3486, %v3495
    %v3498 = vmul.f32 %v3488, %v3496
    %v3499 = vsel %vm1544, %v3497, %v3264
    %v3500 = vsel %vm1544, %v3498, %v3265
    %v3501 = vsel %vm1544, %v3493, %v3266
    %v3502 = vsel %vm1544, %v3494, %v3267
    %s3503 = scalar_lea.vmem [#allocation2], 320
    %v3504 = vld [vmem:[%s3503] sm:$0xff]
    %v3505 = vld [vmem:[%s3503 + $0x8] sm:$0xff]
    %v3506 = vld [vmem:[%s3503 + $0x10] sm:$0xff]
    %v3507 = vld [vmem:[%s3503 + $0x18] sm:$0xff]
    %v3508 = vld [vmem:[%s3503 + $0x20] sm:$0xff]
    %v3509 = vld [vmem:[%s3503 + $0x28] sm:$0xff]
    %v3510 = vld [vmem:[%s3503 + $0x30] sm:$0xff]
    %v3511 = vld [vmem:[%s3503 + $0x38] sm:$0xff]
    %v3512 = vpack.c.bf16 %v3499, %v3499
    %v3513 = vpack.c.bf16 %v3500, %v3500
    %3514 = vmatprep.subr.bf16.mxu0 %v2084
    %3515 = vmatpush1.bf16.msra.mxu0 %v2083
    %3516 = vmatprep.subr.bf16.mxu0 %v2092
    %3517 = vmatpush1.bf16.msra.mxu0 %v2091
    %3518 = vmatprep.subr.bf16.mxu0 %v2100
    %3519 = vmatpush1.bf16.msra.mxu0 %v2099
    %3520 = vmatprep.subr.bf16.mxu0 %v2108
    %3521 = vmatpush1.bf16.msra.mxu0 %v2107
    %3522 = vmatprep.subr.bf16.mxu0 %v2116
    %3523 = vmatpush1.bf16.msra.mxu0 %v2115
    %3524 = vmatprep.subr.bf16.mxu0 %v2124
    %3525 = vmatpush1.bf16.msra.mxu0 %v2123
    %3526 = vmatprep.subr.bf16.mxu0 %v2132
    %3527 = vmatpush1.bf16.msra.mxu0 %v2131
    %3528 = vmatprep.subr.bf16.mxu0 %v2140
    %3529 = vmatpush1.bf16.msra.mxu0 %v2139
    %3530 = vmatprep.subr.bf16.mxu0 %v2148
    %3531 = vmatpush1.bf16.msra.mxu0 %v2147
    %3532 = vmatprep.subr.bf16.mxu0 %v2156
    %3533 = vmatpush1.bf16.msra.mxu0 %v2155
    %3534 = vmatprep.subr.bf16.mxu0 %v2164
    %3535 = vmatpush1.bf16.msra.mxu0 %v2163
    %3536 = vmatprep.subr.bf16.mxu0 %v2172
    %3537 = vmatpush1.bf16.msra.mxu0 %v2171
    %3538 = vmatprep.subr.bf16.mxu0 %v2180
    %3539 = vmatpush1.bf16.msra.mxu0 %v2179
    %3540 = vmatprep.subr.bf16.mxu0 %v2188
    %3541 = vmatpush1.bf16.msra.mxu0 %v2187
    %3542 = vmatprep.subr.bf16.mxu0 %v2196
    %3543 = vmatpush1.bf16.msra.mxu0 %v2195
    %3544 = vmatprep.subr.bf16.mxu0 %v2204
    %3545 = vmatpush1.bf16.msra.mxu0 %v2203
    %3546 = vmatprep.mubr.bf16.mxu0 %v3513
    %3547 = vmatmul.mubr.bf16.gmra.mrb[0].mxu0 %v3512
    %v3548 = vpop.f32.mrb[0].mxu0
    %v3549 = vadd.f32 0.0, %v3548
    %v3550 = vpop.f32.mrb[0].mxu0
    %v3551 = vadd.f32 0.0, %v3550
    %v3552 = vpop.f32.mrb[0].mxu0
    %v3553 = vpop.f32.mrb[0].mxu0
    %3554 = vdwg.mxu0
    %3555 = vmatprep.subr.bf16.mxu0 %v2086
    %3556 = vmatpush1.bf16.msra.mxu0 %v2085
    %3557 = vmatprep.subr.bf16.mxu0 %v2094
    %3558 = vmatpush1.bf16.msra.mxu0 %v2093
    %3559 = vmatprep.subr.bf16.mxu0 %v2102
    %3560 = vmatpush1.bf16.msra.mxu0 %v2101
    %3561 = vmatprep.subr.bf16.mxu0 %v2110
    %3562 = vmatpush1.bf16.msra.mxu0 %v2109
    %3563 = vmatprep.subr.bf16.mxu0 %v2118
    %3564 = vmatpush1.bf16.msra.mxu0 %v2117
    %3565 = vmatprep.subr.bf16.mxu0 %v2126
    %3566 = vmatpush1.bf16.msra.mxu0 %v2125
    %3567 = vmatprep.subr.bf16.mxu0 %v2134
    %3568 = vmatpush1.bf16.msra.mxu0 %v2133
    %3569 = vmatprep.subr.bf16.mxu0 %v2142
    %3570 = vmatpush1.bf16.msra.mxu0 %v2141
    %3571 = vmatprep.subr.bf16.mxu0 %v2150
    %3572 = vmatpush1.bf16.msra.mxu0 %v2149
    %3573 = vmatprep.subr.bf16.mxu0 %v2158
    %3574 = vmatpush1.bf16.msra.mxu0 %v2157
    %3575 = vmatprep.subr.bf16.mxu0 %v2166
    %3576 = vmatpush1.bf16.msra.mxu0 %v2165
    %3577 = vmatprep.subr.bf16.mxu0 %v2174
    %3578 = vmatpush1.bf16.msra.mxu0 %v2173
    %3579 = vmatprep.subr.bf16.mxu0 %v2182
    %3580 = vmatpush1.bf16.msra.mxu0 %v2181
    %3581 = vmatprep.subr.bf16.mxu0 %v2190
    %3582 = vmatpush1.bf16.msra.mxu0 %v2189
    %3583 = vmatprep.subr.bf16.mxu0 %v2198
    %3584 = vmatpush1.bf16.msra.mxu0 %v2197
    %3585 = vmatprep.subr.bf16.mxu0 %v2206
    %3586 = vmatpush1.bf16.msra.mxu0 %v2205
    %3587 = vmatprep.mubr.bf16.mxu0 %v3513
    %3588 = vmatmul.mubr.bf16.gmra.mrb[0].mxu0 %v3512
    %v3589 = vpop.f32.mrb[0].mxu0
    %v3590 = vadd.f32 0.0, %v3589
    %v3591 = vpop.f32.mrb[0].mxu0
    %v3592 = vadd.f32 0.0, %v3591
    %v3593 = vpop.f32.mrb[0].mxu0
    %v3594 = vpop.f32.mrb[0].mxu0
    %3595 = vdwg.mxu0
    %3596 = vmatprep.subr.bf16.mxu0 %v2088
    %3597 = vmatpush1.bf16.msra.mxu0 %v2087
    %3598 = vmatprep.subr.bf16.mxu0 %v2096
    %3599 = vmatpush1.bf16.msra.mxu0 %v2095
    %3600 = vmatprep.subr.bf16.mxu0 %v2104
    %3601 = vmatpush1.bf16.msra.mxu0 %v2103
    %3602 = vmatprep.subr.bf16.mxu0 %v2112
    %3603 = vmatpush1.bf16.msra.mxu0 %v2111
    %3604 = vmatprep.subr.bf16.mxu0 %v2120
    %3605 = vmatpush1.bf16.msra.mxu0 %v2119
    %3606 = vmatprep.subr.bf16.mxu0 %v2128
    %3607 = vmatpush1.bf16.msra.mxu0 %v2127
    %3608 = vmatprep.subr.bf16.mxu0 %v2136
    %3609 = vmatpush1.bf16.msra.mxu0 %v2135
    %3610 = vmatprep.subr.bf16.mxu0 %v2144
    %3611 = vmatpush1.bf16.msra.mxu0 %v2143
    %3612 = vmatprep.subr.bf16.mxu0 %v2152
    %3613 = vmatpush1.bf16.msra.mxu0 %v2151
    %3614 = vmatprep.subr.bf16.mxu0 %v2160
    %3615 = vmatpush1.bf16.msra.mxu0 %v2159
    %3616 = vmatprep.subr.bf16.mxu0 %v2168
    %3617 = vmatpush1.bf16.msra.mxu0 %v2167
    %3618 = vmatprep.subr.bf16.mxu0 %v2176
    %3619 = vmatpush1.bf16.msra.mxu0 %v2175
    %3620 = vmatprep.subr.bf16.mxu0 %v2184
    %3621 = vmatpush1.bf16.msra.mxu0 %v2183
    %3622 = vmatprep.subr.bf16.mxu0 %v2192
    %3623 = vmatpush1.bf16.msra.mxu0 %v2191
    %3624 = vmatprep.subr.bf16.mxu0 %v2200
    %3625 = vmatpush1.bf16.msra.mxu0 %v2199
    %3626 = vmatprep.subr.bf16.mxu0 %v2208
    %3627 = vmatpush1.bf16.msra.mxu0 %v2207
    %3628 = vmatprep.mubr.bf16.mxu0 %v3513
    %3629 = vmatmul.mubr.bf16.gmra.mrb[0].mxu0 %v3512
    %v3630 = vpop.f32.mrb[0].mxu0
    %v3631 = vadd.f32 0.0, %v3630
    %v3632 = vpop.f32.mrb[0].mxu0
    %v3633 = vadd.f32 0.0, %v3632
    %v3634 = vpop.f32.mrb[0].mxu0
    %v3635 = vpop.f32.mrb[0].mxu0
    %3636 = vdwg.mxu0
    %3637 = vmatprep.subr.bf16.mxu0 %v2090
    %3638 = vmatpush1.bf16.msra.mxu0 %v2089
    %3639 = vmatprep.subr.bf16.mxu0 %v2098
    %3640 = vmatpush1.bf16.msra.mxu0 %v2097
    %3641 = vmatprep.subr.bf16.mxu0 %v2106
    %3642 = vmatpush1.bf16.msra.mxu0 %v2105
    %3643 = vmatprep.subr.bf16.mxu0 %v2114
    %3644 = vmatpush1.bf16.msra.mxu0 %v2113
    %3645 = vmatprep.subr.bf16.mxu0 %v2122
    %3646 = vmatpush1.bf16.msra.mxu0 %v2121
    %3647 = vmatprep.subr.bf16.mxu0 %v2130
    %3648 = vmatpush1.bf16.msra.mxu0 %v2129
    %3649 = vmatprep.subr.bf16.mxu0 %v2138
    %3650 = vmatpush1.bf16.msra.mxu0 %v2137
    %3651 = vmatprep.subr.bf16.mxu0 %v2146
    %3652 = vmatpush1.bf16.msra.mxu0 %v2145
    %3653 = vmatprep.subr.bf16.mxu0 %v2154
    %3654 = vmatpush1.bf16.msra.mxu0 %v2153
    %3655 = vmatprep.subr.bf16.mxu0 %v2162
    %3656 = vmatpush1.bf16.msra.mxu0 %v2161
    %3657 = vmatprep.subr.bf16.mxu0 %v2170
    %3658 = vmatpush1.bf16.msra.mxu0 %v2169
    %3659 = vmatprep.subr.bf16.mxu0 %v2178
    %3660 = vmatpush1.bf16.msra.mxu0 %v2177
    %3661 = vmatprep.subr.bf16.mxu0 %v2186
    %3662 = vmatpush1.bf16.msra.mxu0 %v2185
    %3663 = vmatprep.subr.bf16.mxu0 %v2194
    %3664 = vmatpush1.bf16.msra.mxu0 %v2193
    %3665 = vmatprep.subr.bf16.mxu0 %v2202
    %3666 = vmatpush1.bf16.msra.mxu0 %v2201
    %3667 = vmatprep.subr.bf16.mxu0 %v2210
    %3668 = vmatpush1.bf16.msra.mxu0 %v2209
    %3669 = vmatprep.mubr.bf16.mxu0 %v3513
    %3670 = vmatmul.mubr.bf16.gmra.mrb[0].mxu0 %v3512
    %v3671 = vpop.f32.mrb[0].mxu0
    %v3672 = vadd.f32 0.0, %v3671
    %v3673 = vpop.f32.mrb[0].mxu0
    %v3674 = vadd.f32 0.0, %v3673
    %v3675 = vpop.f32.mrb[0].mxu0
    %v3676 = vpop.f32.mrb[0].mxu0
    %3677 = vdwg.mxu0
    %v3678 = vadd.f32 %v3504, %v3549
    %v3679 = vadd.f32 %v3505, %v3551
    %v3680 = vadd.f32 %v3506, %v3590
    %v3681 = vadd.f32 %v3507, %v3592
    %v3682 = vadd.f32 %v3508, %v3631
    %v3683 = vadd.f32 %v3509, %v3633
    %v3684 = vadd.f32 %v3510, %v3672
    %v3685 = vadd.f32 %v3511, %v3674
    %v3686 = vxor.u32 %v3678, 2147483648
    %v3687 = vxor.u32 %v3679, 2147483648
    %v3688 = vmul.f32 %v3686, 1.442695
    %v3689 = vpow.pop %v3688
    %v3690 = vmul.f32 %v3687, 1.442695
    %v3691 = vpow.pop %v3690
    %v3692 = vadd.f32 %v3689, 1.0
    %v3693 = vadd.f32 %v3691, 1.0
    %v3694 = vrcp.pop %v3692
    %v3695 = vmul.f32 1.0, %v3694
    %v3696 = vrcp.pop %v3693
    %v3697 = vmul.f32 1.0, %v3696
    %v3698 = vxor.u32 %v3680, 2147483648
    %v3699 = vxor.u32 %v3681, 2147483648
    %v3700 = vmul.f32 %v3698, 1.442695
    %v3701 = vpow.pop %v3700
    %v3702 = vmul.f32 %v3699, 1.442695
    %v3703 = vpow.pop %v3702
    %v3704 = vadd.f32 %v3701, 1.0
    %v3705 = vadd.f32 %v3703, 1.0
    %v3706 = vrcp.pop %v3704
    %v3707 = vmul.f32 1.0, %v3706
    %v3708 = vrcp.pop %v3705
    %v3709 = vmul.f32 1.0, %v3708
    %v3710 = vtanh.pop %v3682
    %v3711 = vtanh.pop %v3683
    %v3712 = vxor.u32 %v3684, 2147483648
    %v3713 = vxor.u32 %v3685, 2147483648
    %v3714 = vmul.f32 %v3712, 1.442695
    %v3715 = vpow.pop %v3714
    %v3716 = vmul.f32 %v3713, 1.442695
    %v3717 = vpow.pop %v3716
    %v3718 = vadd.f32 %v3715, 1.0
    %v3719 = vadd.f32 %v3717, 1.0
    %v3720 = vrcp.pop %v3718
    %v3721 = vmul.f32 1.0, %v3720
    %v3722 = vrcp.pop %v3719
    %v3723 = vmul.f32 1.0, %v3722
    %v3724 = vmul.f32 %v3707, %v3501
    %v3725 = vmul.f32 %v3709, %v3502
    %v3726 = vmul.f32 %v3695, %v3710
    %v3727 = vmul.f32 %v3697, %v3711
    %v3728 = vadd.f32 %v3724, %v3726
    %v3729 = vadd.f32 %v3725, %v3727
    %v3730 = vtanh.pop %v3728
    %v3731 = vtanh.pop %v3729
    %v3732 = vmul.f32 %v3721, %v3730
    %v3733 = vmul.f32 %v3723, %v3731
    %v3734 = vsel %vm1550, %v3732, %v3499
    %v3735 = vsel %vm1550, %v3733, %v3500
    %v3736 = vsel %vm1550, %v3728, %v3501
    %v3737 = vsel %vm1550, %v3729, %v3502
    %s3738 = scalar_lea.vmem [#allocation2], 384
    %v3739 = vld [vmem:[%s3738] sm:$0xff]
    %v3740 = vld [vmem:[%s3738 + $0x8] sm:$0xff]
    %v3741 = vld [vmem:[%s3738 + $0x10] sm:$0xff]
    %v3742 = vld [vmem:[%s3738 + $0x18] sm:$0xff]
    %v3743 = vld [vmem:[%s3738 + $0x20] sm:$0xff]
    %v3744 = vld [vmem:[%s3738 + $0x28] sm:$0xff]
    %v3745 = vld [vmem:[%s3738 + $0x30] sm:$0xff]
    %v3746 = vld [vmem:[%s3738 + $0x38] sm:$0xff]
    %v3747 = vpack.c.bf16 %v3734, %v3734
    %v3748 = vpack.c.bf16 %v3735, %v3735
    %3749 = vmatprep.subr.bf16.mxu0 %v2084
    %3750 = vmatpush1.bf16.msra.mxu0 %v2083
    %3751 = vmatprep.subr.bf16.mxu0 %v2092
    %3752 = vmatpush1.bf16.msra.mxu0 %v2091
    %3753 = vmatprep.subr.bf16.mxu0 %v2100
    %3754 = vmatpush1.bf16.msra.mxu0 %v2099
    %3755 = vmatprep.subr.bf16.mxu0 %v2108
    %3756 = vmatpush1.bf16.msra.mxu0 %v2107
    %3757 = vmatprep.subr.bf16.mxu0 %v2116
    %3758 = vmatpush1.bf16.msra.mxu0 %v2115
    %3759 = vmatprep.subr.bf16.mxu0 %v2124
    %3760 = vmatpush1.bf16.msra.mxu0 %v2123
    %3761 = vmatprep.subr.bf16.mxu0 %v2132
    %3762 = vmatpush1.bf16.msra.mxu0 %v2131
    %3763 = vmatprep.subr.bf16.mxu0 %v2140
    %3764 = vmatpush1.bf16.msra.mxu0 %v2139
    %3765 = vmatprep.subr.bf16.mxu0 %v2148
    %3766 = vmatpush1.bf16.msra.mxu0 %v2147
    %3767 = vmatprep.subr.bf16.mxu0 %v2156
    %3768 = vmatpush1.bf16.msra.mxu0 %v2155
    %3769 = vmatprep.subr.bf16.mxu0 %v2164
    %3770 = vmatpush1.bf16.msra.mxu0 %v2163
    %3771 = vmatprep.subr.bf16.mxu0 %v2172
    %3772 = vmatpush1.bf16.msra.mxu0 %v2171
    %3773 = vmatprep.subr.bf16.mxu0 %v2180
    %3774 = vmatpush1.bf16.msra.mxu0 %v2179
    %3775 = vmatprep.subr.bf16.mxu0 %v2188
    %3776 = vmatpush1.bf16.msra.mxu0 %v2187
    %3777 = vmatprep.subr.bf16.mxu0 %v2196
    %3778 = vmatpush1.bf16.msra.mxu0 %v2195
    %3779 = vmatprep.subr.bf16.mxu0 %v2204
    %3780 = vmatpush1.bf16.msra.mxu0 %v2203
    %3781 = vmatprep.mubr.bf16.mxu0 %v3748
    %3782 = vmatmul.mubr.bf16.gmra.mrb[0].mxu0 %v3747
    %v3783 = vpop.f32.mrb[0].mxu0
    %v3784 = vadd.f32 0.0, %v3783
    %v3785 = vpop.f32.mrb[0].mxu0
    %v3786 = vadd.f32 0.0, %v3785
    %v3787 = vpop.f32.mrb[0].mxu0
    %v3788 = vpop.f32.mrb[0].mxu0
    %3789 = vdwg.mxu0
    %3790 = vmatprep.subr.bf16.mxu0 %v2086
    %3791 = vmatpush1.bf16.msra.mxu0 %v2085
    %3792 = vmatprep.subr.bf16.mxu0 %v2094
    %3793 = vmatpush1.bf16.msra.mxu0 %v2093
    %3794 = vmatprep.subr.bf16.mxu0 %v2102
    %3795 = vmatpush1.bf16.msra.mxu0 %v2101
    %3796 = vmatprep.subr.bf16.mxu0 %v2110
    %3797 = vmatpush1.bf16.msra.mxu0 %v2109
    %3798 = vmatprep.subr.bf16.mxu0 %v2118
    %3799 = vmatpush1.bf16.msra.mxu0 %v2117
    %3800 = vmatprep.subr.bf16.mxu0 %v2126
    %3801 = vmatpush1.bf16.msra.mxu0 %v2125
    %3802 = vmatprep.subr.bf16.mxu0 %v2134
    %3803 = vmatpush1.bf16.msra.mxu0 %v2133
    %3804 = vmatprep.subr.bf16.mxu0 %v2142
    %3805 = vmatpush1.bf16.msra.mxu0 %v2141
    %3806 = vmatprep.subr.bf16.mxu0 %v2150
    %3807 = vmatpush1.bf16.msra.mxu0 %v2149
    %3808 = vmatprep.subr.bf16.mxu0 %v2158
    %3809 = vmatpush1.bf16.msra.mxu0 %v2157
    %3810 = vmatprep.subr.bf16.mxu0 %v2166
    %3811 = vmatpush1.bf16.msra.mxu0 %v2165
    %3812 = vmatprep.subr.bf16.mxu0 %v2174
    %3813 = vmatpush1.bf16.msra.mxu0 %v2173
    %3814 = vmatprep.subr.bf16.mxu0 %v2182
    %3815 = vmatpush1.bf16.msra.mxu0 %v2181
    %3816 = vmatprep.subr.bf16.mxu0 %v2190
    %3817 = vmatpush1.bf16.msra.mxu0 %v2189
    %3818 = vmatprep.subr.bf16.mxu0 %v2198
    %3819 = vmatpush1.bf16.msra.mxu0 %v2197
    %3820 = vmatprep.subr.bf16.mxu0 %v2206
    %3821 = vmatpush1.bf16.msra.mxu0 %v2205
    %3822 = vmatprep.mubr.bf16.mxu0 %v3748
    %3823 = vmatmul.mubr.bf16.gmra.mrb[0].mxu0 %v3747
    %v3824 = vpop.f32.mrb[0].mxu0
    %v3825 = vadd.f32 0.0, %v3824
    %v3826 = vpop.f32.mrb[0].mxu0
    %v3827 = vadd.f32 0.0, %v3826
    %v3828 = vpop.f32.mrb[0].mxu0
    %v3829 = vpop.f32.mrb[0].mxu0
    %3830 = vdwg.mxu0
    %3831 = vmatprep.subr.bf16.mxu0 %v2088
    %3832 = vmatpush1.bf16.msra.mxu0 %v2087
    %3833 = vmatprep.subr.bf16.mxu0 %v2096
    %3834 = vmatpush1.bf16.msra.mxu0 %v2095
    %3835 = vmatprep.subr.bf16.mxu0 %v2104
    %3836 = vmatpush1.bf16.msra.mxu0 %v2103
    %3837 = vmatprep.subr.bf16.mxu0 %v2112
    %3838 = vmatpush1.bf16.msra.mxu0 %v2111
    %3839 = vmatprep.subr.bf16.mxu0 %v2120
    %3840 = vmatpush1.bf16.msra.mxu0 %v2119
    %3841 = vmatprep.subr.bf16.mxu0 %v2128
    %3842 = vmatpush1.bf16.msra.mxu0 %v2127
    %3843 = vmatprep.subr.bf16.mxu0 %v2136
    %3844 = vmatpush1.bf16.msra.mxu0 %v2135
    %3845 = vmatprep.subr.bf16.mxu0 %v2144
    %3846 = vmatpush1.bf16.msra.mxu0 %v2143
    %3847 = vmatprep.subr.bf16.mxu0 %v2152
    %3848 = vmatpush1.bf16.msra.mxu0 %v2151
    %3849 = vmatprep.subr.bf16.mxu0 %v2160
    %3850 = vmatpush1.bf16.msra.mxu0 %v2159
    %3851 = vmatprep.subr.bf16.mxu0 %v2168
    %3852 = vmatpush1.bf16.msra.mxu0 %v2167
    %3853 = vmatprep.subr.bf16.mxu0 %v2176
    %3854 = vmatpush1.bf16.msra.mxu0 %v2175
    %3855 = vmatprep.subr.bf16.mxu0 %v2184
    %3856 = vmatpush1.bf16.msra.mxu0 %v2183
    %3857 = vmatprep.subr.bf16.mxu0 %v2192
    %3858 = vmatpush1.bf16.msra.mxu0 %v2191
    %3859 = vmatprep.subr.bf16.mxu0 %v2200
    %3860 = vmatpush1.bf16.msra.mxu0 %v2199
    %3861 = vmatprep.subr.bf16.mxu0 %v2208
    %3862 = vmatpush1.bf16.msra.mxu0 %v2207
    %3863 = vmatprep.mubr.bf16.mxu0 %v3748
    %3864 = vmatmul.mubr.bf16.gmra.mrb[0].mxu0 %v3747
    %v3865 = vpop.f32.mrb[0].mxu0
    %v3866 = vadd.f32 0.0, %v3865
    %v3867 = vpop.f32.mrb[0].mxu0
    %v3868 = vadd.f32 0.0, %v3867
    %v3869 = vpop.f32.mrb[0].mxu0
    %v3870 = vpop.f32.mrb[0].mxu0
    %3871 = vdwg.mxu0
    %3872 = vmatprep.subr.bf16.mxu0 %v2090
    %3873 = vmatpush1.bf16.msra.mxu0 %v2089
    %3874 = vmatprep.subr.bf16.mxu0 %v2098
    %3875 = vmatpush1.bf16.msra.mxu0 %v2097
    %3876 = vmatprep.subr.bf16.mxu0 %v2106
    %3877 = vmatpush1.bf16.msra.mxu0 %v2105
    %3878 = vmatprep.subr.bf16.mxu0 %v2114
    %3879 = vmatpush1.bf16.msra.mxu0 %v2113
    %3880 = vmatprep.subr.bf16.mxu0 %v2122
    %3881 = vmatpush1.bf16.msra.mxu0 %v2121
    %3882 = vmatprep.subr.bf16.mxu0 %v2130
    %3883 = vmatpush1.bf16.msra.mxu0 %v2129
    %3884 = vmatprep.subr.bf16.mxu0 %v2138
    %3885 = vmatpush1.bf16.msra.mxu0 %v2137
    %3886 = vmatprep.subr.bf16.mxu0 %v2146
    %3887 = vmatpush1.bf16.msra.mxu0 %v2145
    %3888 = vmatprep.subr.bf16.mxu0 %v2154
    %3889 = vmatpush1.bf16.msra.mxu0 %v2153
    %3890 = vmatprep.subr.bf16.mxu0 %v2162
    %3891 = vmatpush1.bf16.msra.mxu0 %v2161
    %3892 = vmatprep.subr.bf16.mxu0 %v2170
    %3893 = vmatpush1.bf16.msra.mxu0 %v2169
    %3894 = vmatprep.subr.bf16.mxu0 %v2178
    %3895 = vmatpush1.bf16.msra.mxu0 %v2177
    %3896 = vmatprep.subr.bf16.mxu0 %v2186
    %3897 = vmatpush1.bf16.msra.mxu0 %v2185
    %3898 = vmatprep.subr.bf16.mxu0 %v2194
    %3899 = vmatpush1.bf16.msra.mxu0 %v2193
    %3900 = vmatprep.subr.bf16.mxu0 %v2202
    %3901 = vmatpush1.bf16.msra.mxu0 %v2201
    %3902 = vmatprep.subr.bf16.mxu0 %v2210
    %3903 = vmatpush1.bf16.msra.mxu0 %v2209
    %3904 = vmatprep.mubr.bf16.mxu0 %v3748
    %3905 = vmatmul.mubr.bf16.gmra.mrb[0].mxu0 %v3747
    %v3906 = vpop.f32.mrb[0].mxu0
    %v3907 = vadd.f32 0.0, %v3906
    %v3908 = vpop.f32.mrb[0].mxu0
    %v3909 = vadd.f32 0.0, %v3908
    %v3910 = vpop.f32.mrb[0].mxu0
    %v3911 = vpop.f32.mrb[0].mxu0
    %3912 = vdwg.mxu0
    %v3913 = vadd.f32 %v3739, %v3784
    %v3914 = vadd.f32 %v3740, %v3786
    %v3915 = vadd.f32 %v3741, %v3825
    %v3916 = vadd.f32 %v3742, %v3827
    %v3917 = vadd.f32 %v3743, %v3866
    %v3918 = vadd.f32 %v3744, %v3868
    %v3919 = vadd.f32 %v3745, %v3907
    %v3920 = vadd.f32 %v3746, %v3909
    %v3921 = vxor.u32 %v3913, 2147483648
    %v3922 = vxor.u32 %v3914, 2147483648
    %v3923 = vmul.f32 %v3921, 1.442695
    %v3924 = vpow.pop %v3923
    %v3925 = vmul.f32 %v3922, 1.442695
    %v3926 = vpow.pop %v3925
    %v3927 = vadd.f32 %v3924, 1.0
    %v3928 = vadd.f32 %v3926, 1.0
    %v3929 = vrcp.pop %v3927
    %v3930 = vmul.f32 1.0, %v3929
    %v3931 = vrcp.pop %v3928
    %v3932 = vmul.f32 1.0, %v3931
    %v3933 = vxor.u32 %v3915, 2147483648
    %v3934 = vxor.u32 %v3916, 2147483648
    %v3935 = vmul.f32 %v3933, 1.442695
    %v3936 = vpow.pop %v3935
    %v3937 = vmul.f32 %v3934, 1.442695
    %v3938 = vpow.pop %v3937
    %v3939 = vadd.f32 %v3936, 1.0
    %v3940 = vadd.f32 %v3938, 1.0
    %v3941 = vrcp.pop %v3939
    %v3942 = vmul.f32 1.0, %v3941
    %v3943 = vrcp.pop %v3940
    %v3944 = vmul.f32 1.0, %v3943
    %v3945 = vtanh.pop %v3917
    %v3946 = vtanh.pop %v3918
    %v3947 = vxor.u32 %v3919, 2147483648
    %v3948 = vxor.u32 %v3920, 2147483648
    %v3949 = vmul.f32 %v3947, 1.442695
    %v3950 = vpow.pop %v3949
    %v3951 = vmul.f32 %v3948, 1.442695
    %v3952 = vpow.pop %v3951
    %v3953 = vadd.f32 %v3950, 1.0
    %v3954 = vadd.f32 %v3952, 1.0
    %v3955 = vrcp.pop %v3953
    %v3956 = vmul.f32 1.0, %v3955
    %v3957 = vrcp.pop %v3954
    %v3958 = vmul.f32 1.0, %v3957
    %v3959 = vmul.f32 %v3942, %v3736
    %v3960 = vmul.f32 %v3944, %v3737
    %v3961 = vmul.f32 %v3930, %v3945
    %v3962 = vmul.f32 %v3932, %v3946
    %v3963 = vadd.f32 %v3959, %v3961
    %v3964 = vadd.f32 %v3960, %v3962
    %v3965 = vtanh.pop %v3963
    %v3966 = vtanh.pop %v3964
    %v3967 = vmul.f32 %v3956, %v3965
    %v3968 = vmul.f32 %v3958, %v3966
    %v3969 = vsel %vm1556, %v3967, %v3734
    %v3970 = vsel %vm1556, %v3968, %v3735
    %v3971 = vsel %vm1556, %v3963, %v3736
    %v3972 = vsel %vm1556, %v3964, %v3737
    %s3973 = scalar_lea.vmem [#allocation2], 448
    %v3974 = vld [vmem:[%s3973] sm:$0xff]
    %v3975 = vld [vmem:[%s3973 + $0x8] sm:$0xff]
    %v3976 = vld [vmem:[%s3973 + $0x10] sm:$0xff]
    %v3977 = vld [vmem:[%s3973 + $0x18] sm:$0xff]
    %v3978 = vld [vmem:[%s3973 + $0x20] sm:$0xff]
    %v3979 = vld [vmem:[%s3973 + $0x28] sm:$0xff]
    %v3980 = vld [vmem:[%s3973 + $0x30] sm:$0xff]
    %v3981 = vld [vmem:[%s3973 + $0x38] sm:$0xff]
    %v3982 = vpack.c.bf16 %v3969, %v3969
    %v3983 = vpack.c.bf16 %v3970, %v3970
    %3984 = vmatprep.subr.bf16.mxu0 %v2084
    %3985 = vmatpush1.bf16.msra.mxu0 %v2083
    %3986 = vmatprep.subr.bf16.mxu0 %v2092
    %3987 = vmatpush1.bf16.msra.mxu0 %v2091
    %3988 = vmatprep.subr.bf16.mxu0 %v2100
    %3989 = vmatpush1.bf16.msra.mxu0 %v2099
    %3990 = vmatprep.subr.bf16.mxu0 %v2108
    %3991 = vmatpush1.bf16.msra.mxu0 %v2107
    %3992 = vmatprep.subr.bf16.mxu0 %v2116
    %3993 = vmatpush1.bf16.msra.mxu0 %v2115
    %3994 = vmatprep.subr.bf16.mxu0 %v2124
    %3995 = vmatpush1.bf16.msra.mxu0 %v2123
    %3996 = vmatprep.subr.bf16.mxu0 %v2132
    %3997 = vmatpush1.bf16.msra.mxu0 %v2131
    %3998 = vmatprep.subr.bf16.mxu0 %v2140
    %3999 = vmatpush1.bf16.msra.mxu0 %v2139
    %4000 = vmatprep.subr.bf16.mxu0 %v2148
    %4001 = vmatpush1.bf16.msra.mxu0 %v2147
    %4002 = vmatprep.subr.bf16.mxu0 %v2156
    %4003 = vmatpush1.bf16.msra.mxu0 %v2155
    %4004 = vmatprep.subr.bf16.mxu0 %v2164
    %4005 = vmatpush1.bf16.msra.mxu0 %v2163
    %4006 = vmatprep.subr.bf16.mxu0 %v2172
    %4007 = vmatpush1.bf16.msra.mxu0 %v2171
    %4008 = vmatprep.subr.bf16.mxu0 %v2180
    %4009 = vmatpush1.bf16.msra.mxu0 %v2179
    %4010 = vmatprep.subr.bf16.mxu0 %v2188
    %4011 = vmatpush1.bf16.msra.mxu0 %v2187
    %4012 = vmatprep.subr.bf16.mxu0 %v2196
    %4013 = vmatpush1.bf16.msra.mxu0 %v2195
    %4014 = vmatprep.subr.bf16.mxu0 %v2204
    %4015 = vmatpush1.bf16.msra.mxu0 %v2203
    %4016 = vmatprep.mubr.bf16.mxu0 %v3983
    %4017 = vmatmul.mubr.bf16.gmra.mrb[0].mxu0 %v3982
    %v4018 = vpop.f32.mrb[0].mxu0
    %v4019 = vadd.f32 0.0, %v4018
    %v4020 = vpop.f32.mrb[0].mxu0
    %v4021 = vadd.f32 0.0, %v4020
    %v4022 = vpop.f32.mrb[0].mxu0
    %v4023 = vpop.f32.mrb[0].mxu0
    %4024 = vdwg.mxu0
    %4025 = vmatprep.subr.bf16.mxu0 %v2086
    %4026 = vmatpush1.bf16.msra.mxu0 %v2085
    %4027 = vmatprep.subr.bf16.mxu0 %v2094
    %4028 = vmatpush1.bf16.msra.mxu0 %v2093
    %4029 = vmatprep.subr.bf16.mxu0 %v2102
    %4030 = vmatpush1.bf16.msra.mxu0 %v2101
    %4031 = vmatprep.subr.bf16.mxu0 %v2110
    %4032 = vmatpush1.bf16.msra.mxu0 %v2109
    %4033 = vmatprep.subr.bf16.mxu0 %v2118
    %4034 = vmatpush1.bf16.msra.mxu0 %v2117
    %4035 = vmatprep.subr.bf16.mxu0 %v2126
    %4036 = vmatpush1.bf16.msra.mxu0 %v2125
    %4037 = vmatprep.subr.bf16.mxu0 %v2134
    %4038 = vmatpush1.bf16.msra.mxu0 %v2133
    %4039 = vmatprep.subr.bf16.mxu0 %v2142
    %4040 = vmatpush1.bf16.msra.mxu0 %v2141
    %4041 = vmatprep.subr.bf16.mxu0 %v2150
    %4042 = vmatpush1.bf16.msra.mxu0 %v2149
    %4043 = vmatprep.subr.bf16.mxu0 %v2158
    %4044 = vmatpush1.bf16.msra.mxu0 %v2157
    %4045 = vmatprep.subr.bf16.mxu0 %v2166
    %4046 = vmatpush1.bf16.msra.mxu0 %v2165
    %4047 = vmatprep.subr.bf16.mxu0 %v2174
    %4048 = vmatpush1.bf16.msra.mxu0 %v2173
    %4049 = vmatprep.subr.bf16.mxu0 %v2182
    %4050 = vmatpush1.bf16.msra.mxu0 %v2181
    %4051 = vmatprep.subr.bf16.mxu0 %v2190
    %4052 = vmatpush1.bf16.msra.mxu0 %v2189
    %4053 = vmatprep.subr.bf16.mxu0 %v2198
    %4054 = vmatpush1.bf16.msra.mxu0 %v2197
    %4055 = vmatprep.subr.bf16.mxu0 %v2206
    %4056 = vmatpush1.bf16.msra.mxu0 %v2205
    %4057 = vmatprep.mubr.bf16.mxu0 %v3983
    %4058 = vmatmul.mubr.bf16.gmra.mrb[0].mxu0 %v3982
    %v4059 = vpop.f32.mrb[0].mxu0
    %v4060 = vadd.f32 0.0, %v4059
    %v4061 = vpop.f32.mrb[0].mxu0
    %v4062 = vadd.f32 0.0, %v4061
    %v4063 = vpop.f32.mrb[0].mxu0
    %v4064 = vpop.f32.mrb[0].mxu0
    %4065 = vdwg.mxu0
    %4066 = vmatprep.subr.bf16.mxu0 %v2088
    %4067 = vmatpush1.bf16.msra.mxu0 %v2087
    %4068 = vmatprep.subr.bf16.mxu0 %v2096
    %4069 = vmatpush1.bf16.msra.mxu0 %v2095
    %4070 = vmatprep.subr.bf16.mxu0 %v2104
    %4071 = vmatpush1.bf16.msra.mxu0 %v2103
    %4072 = vmatprep.subr.bf16.mxu0 %v2112
    %4073 = vmatpush1.bf16.msra.mxu0 %v2111
    %4074 = vmatprep.subr.bf16.mxu0 %v2120
    %4075 = vmatpush1.bf16.msra.mxu0 %v2119
    %4076 = vmatprep.subr.bf16.mxu0 %v2128
    %4077 = vmatpush1.bf16.msra.mxu0 %v2127
    %4078 = vmatprep.subr.bf16.mxu0 %v2136
    %4079 = vmatpush1.bf16.msra.mxu0 %v2135
    %4080 = vmatprep.subr.bf16.mxu0 %v2144
    %4081 = vmatpush1.bf16.msra.mxu0 %v2143
    %4082 = vmatprep.subr.bf16.mxu0 %v2152
    %4083 = vmatpush1.bf16.msra.mxu0 %v2151
    %4084 = vmatprep.subr.bf16.mxu0 %v2160
    %4085 = vmatpush1.bf16.msra.mxu0 %v2159
    %4086 = vmatprep.subr.bf16.mxu0 %v2168
    %4087 = vmatpush1.bf16.msra.mxu0 %v2167
    %4088 = vmatprep.subr.bf16.mxu0 %v2176
    %4089 = vmatpush1.bf16.msra.mxu0 %v2175
    %4090 = vmatprep.subr.bf16.mxu0 %v2184
    %4091 = vmatpush1.bf16.msra.mxu0 %v2183
    %4092 = vmatprep.subr.bf16.mxu0 %v2192
    %4093 = vmatpush1.bf16.msra.mxu0 %v2191
    %4094 = vmatprep.subr.bf16.mxu0 %v2200
    %4095 = vmatpush1.bf16.msra.mxu0 %v2199
    %4096 = vmatprep.subr.bf16.mxu0 %v2208
    %4097 = vmatpush1.bf16.msra.mxu0 %v2207
    %4098 = vmatprep.mubr.bf16.mxu0 %v3983
    %4099 = vmatmul.mubr.bf16.gmra.mrb[0].mxu0 %v3982
    %v4100 = vpop.f32.mrb[0].mxu0
    %v4101 = vadd.f32 0.0, %v4100
    %v4102 = vpop.f32.mrb[0].mxu0
    %v4103 = vadd.f32 0.0, %v4102
    %v4104 = vpop.f32.mrb[0].mxu0
    %v4105 = vpop.f32.mrb[0].mxu0
    %4106 = vdwg.mxu0
    %4107 = vmatprep.subr.bf16.mxu0 %v2090
    %4108 = vmatpush1.bf16.msra.mxu0 %v2089
    %4109 = vmatprep.subr.bf16.mxu0 %v2098
    %4110 = vmatpush1.bf16.msra.mxu0 %v2097
    %4111 = vmatprep.subr.bf16.mxu0 %v2106
    %4112 = vmatpush1.bf16.msra.mxu0 %v2105
    %4113 = vmatprep.subr.bf16.mxu0 %v2114
    %4114 = vmatpush1.bf16.msra.mxu0 %v2113
    %4115 = vmatprep.subr.bf16.mxu0 %v2122
    %4116 = vmatpush1.bf16.msra.mxu0 %v2121
    %4117 = vmatprep.subr.bf16.mxu0 %v2130
    %4118 = vmatpush1.bf16.msra.mxu0 %v2129
    %4119 = vmatprep.subr.bf16.mxu0 %v2138
    %4120 = vmatpush1.bf16.msra.mxu0 %v2137
    %4121 = vmatprep.subr.bf16.mxu0 %v2146
    %4122 = vmatpush1.bf16.msra.mxu0 %v2145
    %4123 = vmatprep.subr.bf16.mxu0 %v2154
    %4124 = vmatpush1.bf16.msra.mxu0 %v2153
    %4125 = vmatprep.subr.bf16.mxu0 %v2162
    %4126 = vmatpush1.bf16.msra.mxu0 %v2161
    %4127 = vmatprep.subr.bf16.mxu0 %v2170
    %4128 = vmatpush1.bf16.msra.mxu0 %v2169
    %4129 = vmatprep.subr.bf16.mxu0 %v2178
    %4130 = vmatpush1.bf16.msra.mxu0 %v2177
    %4131 = vmatprep.subr.bf16.mxu0 %v2186
    %4132 = vmatpush1.bf16.msra.mxu0 %v2185
    %4133 = vmatprep.subr.bf16.mxu0 %v2194
    %4134 = vmatpush1.bf16.msra.mxu0 %v2193
    %4135 = vmatprep.subr.bf16.mxu0 %v2202
    %4136 = vmatpush1.bf16.msra.mxu0 %v2201
    %4137 = vmatprep.subr.bf16.mxu0 %v2210
    %4138 = vmatpush1.bf16.msra.mxu0 %v2209
    %4139 = vmatprep.mubr.bf16.mxu0 %v3983
    %4140 = vmatmul.mubr.bf16.gmra.mrb[0].mxu0 %v3982
    %v4141 = vpop.f32.mrb[0].mxu0
    %v4142 = vadd.f32 0.0, %v4141
    %v4143 = vpop.f32.mrb[0].mxu0
    %v4144 = vadd.f32 0.0, %v4143
    %v4145 = vpop.f32.mrb[0].mxu0
    %v4146 = vpop.f32.mrb[0].mxu0
    %4147 = vdwg.mxu0
    %v4148 = vadd.f32 %v3974, %v4019
    %v4149 = vadd.f32 %v3975, %v4021
    %v4150 = vadd.f32 %v3976, %v4060
    %v4151 = vadd.f32 %v3977, %v4062
    %v4152 = vadd.f32 %v3978, %v4101
    %v4153 = vadd.f32 %v3979, %v4103
    %v4154 = vadd.f32 %v3980, %v4142
    %v4155 = vadd.f32 %v3981, %v4144
    %v4156 = vxor.u32 %v4148, 2147483648
    %v4157 = vxor.u32 %v4149, 2147483648
    %v4158 = vmul.f32 %v4156, 1.442695
    %v4159 = vpow.pop %v4158
    %v4160 = vmul.f32 %v4157, 1.442695
    %v4161 = vpow.pop %v4160
    %v4162 = vadd.f32 %v4159, 1.0
    %v4163 = vadd.f32 %v4161, 1.0
    %v4164 = vrcp.pop %v4162
    %v4165 = vmul.f32 1.0, %v4164
    %v4166 = vrcp.pop %v4163
    %v4167 = vmul.f32 1.0, %v4166
    %v4168 = vxor.u32 %v4150, 2147483648
    %v4169 = vxor.u32 %v4151, 2147483648
    %v4170 = vmul.f32 %v4168, 1.442695
    %v4171 = vpow.pop %v4170
    %v4172 = vmul.f32 %v4169, 1.442695
    %v4173 = vpow.pop %v4172
    %v4174 = vadd.f32 %v4171, 1.0
    %v4175 = vadd.f32 %v4173, 1.0
    %v4176 = vrcp.pop %v4174
    %v4177 = vmul.f32 1.0, %v4176
    %v4178 = vrcp.pop %v4175
    %v4179 = vmul.f32 1.0, %v4178
    %v4180 = vtanh.pop %v4152
    %v4181 = vtanh.pop %v4153
    %v4182 = vxor.u32 %v4154, 2147483648
    %v4183 = vxor.u32 %v4155, 2147483648
    %v4184 = vmul.f32 %v4182, 1.442695
    %v4185 = vpow.pop %v4184
    %v4186 = vmul.f32 %v4183, 1.442695
    %v4187 = vpow.pop %v4186
    %v4188 = vadd.f32 %v4185, 1.0
    %v4189 = vadd.f32 %v4187, 1.0
    %v4190 = vrcp.pop %v4188
    %v4191 = vmul.f32 1.0, %v4190
    %v4192 = vrcp.pop %v4189
    %v4193 = vmul.f32 1.0, %v4192
    %v4194 = vmul.f32 %v4177, %v3971
    %v4195 = vmul.f32 %v4179, %v3972
    %v4196 = vmul.f32 %v4165, %v4180
    %v4197 = vmul.f32 %v4167, %v4181
    %v4198 = vadd.f32 %v4194, %v4196
    %v4199 = vadd.f32 %v4195, %v4197
    %v4200 = vtanh.pop %v4198
    %v4201 = vtanh.pop %v4199
    %v4202 = vmul.f32 %v4191, %v4200
    %v4203 = vmul.f32 %v4193, %v4201
    %v4204 = vsel %vm1562, %v4202, %v3969
    %v4205 = vsel %vm1562, %v4203, %v3970
    %v4206 = vpack.c.bf16 %v4204, %v4204
    %v4207 = vpack.c.bf16 %v4205, %v4205
    %v4208 = vld [vmem:[%s5] sm:$0xf]
    %v4209 = vld [vmem:[%s5 + $0x4] sm:$0xf]
    %v4210 = vld [vmem:[%s5 + $0x8] sm:$0xf]
    %v4211 = vld [vmem:[%s5 + $0xc] sm:$0xf]
    %v4212 = vld [vmem:[%s5 + $0x10] sm:$0xf]
    %v4213 = vld [vmem:[%s5 + $0x14] sm:$0xf]
    %v4214 = vld [vmem:[%s5 + $0x18] sm:$0xf]
    %v4215 = vld [vmem:[%s5 + $0x1c] sm:$0xf]
    %v4216 = vld [vmem:[%s5 + $0x20] sm:$0xf]
    %v4217 = vld [vmem:[%s5 + $0x24] sm:$0xf]
    %v4218 = vld [vmem:[%s5 + $0x28] sm:$0xf]
    %v4219 = vld [vmem:[%s5 + $0x2c] sm:$0xf]
    %v4220 = vld [vmem:[%s5 + $0x30] sm:$0xf]
    %v4221 = vld [vmem:[%s5 + $0x34] sm:$0xf]
    %v4222 = vld [vmem:[%s5 + $0x38] sm:$0xf]
    %v4223 = vld [vmem:[%s5 + $0x3c] sm:$0xf]
    %v4224 = vld [vmem:[%s5 + $0x40] sm:$0xf]
    %v4225 = vld [vmem:[%s5 + $0x44] sm:$0xf]
    %v4226 = vld [vmem:[%s5 + $0x48] sm:$0xf]
    %v4227 = vld [vmem:[%s5 + $0x4c] sm:$0xf]
    %v4228 = vld [vmem:[%s5 + $0x50] sm:$0xf]
    %v4229 = vld [vmem:[%s5 + $0x54] sm:$0xf]
    %v4230 = vld [vmem:[%s5 + $0x58] sm:$0xf]
    %v4231 = vld [vmem:[%s5 + $0x5c] sm:$0xf]
    %v4232 = vld [vmem:[%s5 + $0x60] sm:$0xf]
    %v4233 = vld [vmem:[%s5 + $0x64] sm:$0xf]
    %v4234 = vld [vmem:[%s5 + $0x68] sm:$0xf]
    %v4235 = vld [vmem:[%s5 + $0x6c] sm:$0xf]
    %v4236 = vld [vmem:[%s5 + $0x70] sm:$0xf]
    %v4237 = vld [vmem:[%s5 + $0x74] sm:$0xf]
    %v4238 = vld [vmem:[%s5 + $0x78] sm:$0xf]
    %v4239 = vld [vmem:[%s5 + $0x7c] sm:$0xf]
    %v4240 = vld [vmem:[%s6] sm:$0x1]
    %v4242 = vlaneseq
    %v4243 = vshrl.u32 %v4242, 7
    %v4244 = vsub.s32 0, %v4243
    %v4245 = vrot.slane %v4240, %v4244
    %v4279 = vunpack.c.l.b16 %v4208
    %v4280 = vunpack.c.l.b16 %v4209
    %v4281 = vunpack.c.l.b16 %v4210
    %v4282 = vunpack.c.l.b16 %v4211
    %v4283 = vunpack.c.l.b16 %v4212
    %v4284 = vunpack.c.l.b16 %v4213
    %v4285 = vunpack.c.l.b16 %v4214
    %v4286 = vunpack.c.l.b16 %v4215
    %v4287 = vunpack.c.l.b16 %v4216
    %v4288 = vunpack.c.l.b16 %v4217
    %v4289 = vunpack.c.l.b16 %v4218
    %v4290 = vunpack.c.l.b16 %v4219
    %v4291 = vunpack.c.l.b16 %v4220
    %v4292 = vunpack.c.l.b16 %v4221
    %v4293 = vunpack.c.l.b16 %v4222
    %v4294 = vunpack.c.l.b16 %v4223
    %v4295 = vunpack.c.l.b16 %v4224
    %v4296 = vunpack.c.l.b16 %v4225
    %v4297 = vunpack.c.l.b16 %v4226
    %v4298 = vunpack.c.l.b16 %v4227
    %v4299 = vunpack.c.l.b16 %v4228
    %v4300 = vunpack.c.l.b16 %v4229
    %v4301 = vunpack.c.l.b16 %v4230
    %v4302 = vunpack.c.l.b16 %v4231
    %v4303 = vunpack.c.l.b16 %v4232
    %v4304 = vunpack.c.l.b16 %v4233
    %v4305 = vunpack.c.l.b16 %v4234
    %v4306 = vunpack.c.l.b16 %v4235
    %v4307 = vunpack.c.l.b16 %v4236
    %v4308 = vunpack.c.l.b16 %v4237
    %v4309 = vunpack.c.l.b16 %v4238
    %v4310 = vunpack.c.l.b16 %v4239
    %v4311 = vpack.c.b16 %v4280, %v4279
    %v4312 = vpack.c.b16 %v4282, %v4281
    %v4313 = vpack.c.b16 %v4284, %v4283
    %v4314 = vpack.c.b16 %v4286, %v4285
    %v4315 = vpack.c.b16 %v4288, %v4287
    %v4316 = vpack.c.b16 %v4290, %v4289
    %v4317 = vpack.c.b16 %v4292, %v4291
    %v4318 = vpack.c.b16 %v4294, %v4293
    %v4319 = vpack.c.b16 %v4296, %v4295
    %v4320 = vpack.c.b16 %v4298, %v4297
    %v4321 = vpack.c.b16 %v4300, %v4299
    %v4322 = vpack.c.b16 %v4302, %v4301
    %v4323 = vpack.c.b16 %v4304, %v4303
    %v4324 = vpack.c.b16 %v4306, %v4305
    %v4325 = vpack.c.b16 %v4308, %v4307
    %v4326 = vpack.c.b16 %v4310, %v4309
    %4343 = vmatprep.subr.bf16.mxu0 0
    %4344 = vmatpush1.bf16.msra.mxu0 %v4311
    %4345 = vmatprep.subr.bf16.mxu0 0
    %4346 = vmatpush1.bf16.msra.mxu0 %v4312
    %4347 = vmatprep.subr.bf16.mxu0 0
    %4348 = vmatpush1.bf16.msra.mxu0 %v4313
    %4349 = vmatprep.subr.bf16.mxu0 0
    %4350 = vmatpush1.bf16.msra.mxu0 %v4314
    %4351 = vmatprep.subr.bf16.mxu0 0
    %4352 = vmatpush1.bf16.msra.mxu0 %v4315
    %4353 = vmatprep.subr.bf16.mxu0 0
    %4354 = vmatpush1.bf16.msra.mxu0 %v4316
    %4355 = vmatprep.subr.bf16.mxu0 0
    %4356 = vmatpush1.bf16.msra.mxu0 %v4317
    %4357 = vmatprep.subr.bf16.mxu0 0
    %4358 = vmatpush1.bf16.msra.mxu0 %v4318
    %4359 = vmatprep.subr.bf16.mxu0 0
    %4360 = vmatpush1.bf16.msra.mxu0 %v4319
    %4361 = vmatprep.subr.bf16.mxu0 0
    %4362 = vmatpush1.bf16.msra.mxu0 %v4320
    %4363 = vmatprep.subr.bf16.mxu0 0
    %4364 = vmatpush1.bf16.msra.mxu0 %v4321
    %4365 = vmatprep.subr.bf16.mxu0 0
    %4366 = vmatpush1.bf16.msra.mxu0 %v4322
    %4367 = vmatprep.subr.bf16.mxu0 0
    %4368 = vmatpush1.bf16.msra.mxu0 %v4323
    %4369 = vmatprep.subr.bf16.mxu0 0
    %4370 = vmatpush1.bf16.msra.mxu0 %v4324
    %4371 = vmatprep.subr.bf16.mxu0 0
    %4372 = vmatpush1.bf16.msra.mxu0 %v4325
    %4373 = vmatprep.subr.bf16.mxu0 0
    %4374 = vmatpush1.bf16.msra.mxu0 %v4326
    %4375 = vmatprep.mubr.bf16.mxu0 %v4207
    %4376 = vmatmul.mubr.bf16.gmra.mrb[0].mxu0 %v4206
    %v4377 = vpop.f32.mrb[0].mxu0
    %v4378 = vadd.f32 %v4245, %v4377
    %v4379 = vpop.f32.mrb[0].mxu0
    %v4380 = vpop.f32.mrb[0].mxu0
    %v4381 = vpop.f32.mrb[0].mxu0
    %4382 = vdwg.mxu0
    %v4383 = vmax.f32 %v4378, 0.0
    %v4384 = vpack.c.bf16 %v4383, %v4383
    %v4385 = vld [vmem:[%s7] sm:$0xf]
    %v4386 = vld [vmem:[%s7 + $0x4] sm:$0xf]
    %v4387 = vld [vmem:[%s7 + $0x8] sm:$0xf]
    %v4388 = vld [vmem:[%s7 + $0xc] sm:$0xf]
    %v4389 = vld [vmem:[%s7 + $0x10] sm:$0xf]
    %v4390 = vld [vmem:[%s7 + $0x14] sm:$0xf]
    %v4391 = vld [vmem:[%s7 + $0x18] sm:$0xf]
    %v4392 = vld [vmem:[%s7 + $0x1c] sm:$0xf]
    %v4393 = vld [vmem:[%s7 + $0x20] sm:$0xf]
    %v4394 = vld [vmem:[%s7 + $0x24] sm:$0xf]
    %v4395 = vld [vmem:[%s7 + $0x28] sm:$0xf]
    %v4396 = vld [vmem:[%s7 + $0x2c] sm:$0xf]
    %v4397 = vld [vmem:[%s7 + $0x30] sm:$0xf]
    %v4398 = vld [vmem:[%s7 + $0x34] sm:$0xf]
    %v4399 = vld [vmem:[%s7 + $0x38] sm:$0xf]
    %v4400 = vld [vmem:[%s7 + $0x3c] sm:$0xf]
    %v4401 = vld [vmem:[%s8] sm:$0x1]
    %v4403 = vlaneseq
    %v4404 = vshrl.u32 %v4403, 7
    %v4405 = vsub.s32 0, %v4404
    %v4406 = vrot.slane %v4401, %v4405
    %v4424 = vunpack.c.l.b16 %v4385
    %v4425 = vunpack.c.l.b16 %v4386
    %v4426 = vunpack.c.l.b16 %v4387
    %v4427 = vunpack.c.l.b16 %v4388
    %v4428 = vunpack.c.l.b16 %v4389
    %v4429 = vunpack.c.l.b16 %v4390
    %v4430 = vunpack.c.l.b16 %v4391
    %v4431 = vunpack.c.l.b16 %v4392
    %v4432 = vunpack.c.l.b16 %v4393
    %v4433 = vunpack.c.l.b16 %v4394
    %v4434 = vunpack.c.l.b16 %v4395
    %v4435 = vunpack.c.l.b16 %v4396
    %v4436 = vunpack.c.l.b16 %v4397
    %v4437 = vunpack.c.l.b16 %v4398
    %v4438 = vunpack.c.l.b16 %v4399
    %v4439 = vunpack.c.l.b16 %v4400
    %v4440 = vpack.c.b16 %v4425, %v4424
    %v4441 = vpack.c.b16 %v4427, %v4426
    %v4442 = vpack.c.b16 %v4429, %v4428
    %v4443 = vpack.c.b16 %v4431, %v4430
    %v4444 = vpack.c.b16 %v4433, %v4432
    %v4445 = vpack.c.b16 %v4435, %v4434
    %v4446 = vpack.c.b16 %v4437, %v4436
    %v4447 = vpack.c.b16 %v4439, %v4438
    %4456 = vmatprep.subr.bf16.mxu0 0
    %4457 = vmatpush1.bf16.msra.mxu0 %v4440
    %4458 = vmatprep.subr.bf16.mxu0 0
    %4459 = vmatpush1.bf16.msra.mxu0 %v4441
    %4460 = vmatprep.subr.bf16.mxu0 0
    %4461 = vmatpush1.bf16.msra.mxu0 %v4442
    %4462 = vmatprep.subr.bf16.mxu0 0
    %4463 = vmatpush1.bf16.msra.mxu0 %v4443
    %4464 = vmatprep.subr.bf16.mxu0 0
    %4465 = vmatpush1.bf16.msra.mxu0 %v4444
    %4466 = vmatprep.subr.bf16.mxu0 0
    %4467 = vmatpush1.bf16.msra.mxu0 %v4445
    %4468 = vmatprep.subr.bf16.mxu0 0
    %4469 = vmatpush1.bf16.msra.mxu0 %v4446
    %4470 = vmatprep.subr.bf16.mxu0 0
    %4471 = vmatpush1.bf16.msra.mxu0 %v4447
    %4472 = vmatprep.subr.bf16.mxu0 0
    %4473 = vmatpush1.bf16.msra.mxu0 0
    %4474 = vmatprep.subr.bf16.mxu0 0
    %4475 = vmatpush1.bf16.msra.mxu0 0
    %4476 = vmatprep.subr.bf16.mxu0 0
    %4477 = vmatpush1.bf16.msra.mxu0 0
    %4478 = vmatprep.subr.bf16.mxu0 0
    %4479 = vmatpush1.bf16.msra.mxu0 0
    %4480 = vmatprep.subr.bf16.mxu0 0
    %4481 = vmatpush1.bf16.msra.mxu0 0
    %4482 = vmatprep.subr.bf16.mxu0 0
    %4483 = vmatpush1.bf16.msra.mxu0 0
    %4484 = vmatprep.subr.bf16.mxu0 0
    %4485 = vmatpush1.bf16.msra.mxu0 0
    %4486 = vmatprep.subr.bf16.mxu0 0
    %4487 = vmatpush1.bf16.msra.mxu0 0
    %4488 = vmatprep.mubr.bf16.mxu0 0
    %4489 = vmatmul.mubr.bf16.gmra.mrb[0].mxu0 %v4384
    %v4490 = vpop.f32.mrb[0].mxu0
    %v4491 = vadd.f32 %v4406, %v4490
    %v4492 = vpop.f32.mrb[0].mxu0
    %v4493 = vpop.f32.mrb[0].mxu0
    %v4494 = vpop.f32.mrb[0].mxu0
    %4495 = vdwg.mxu0
    %4496 = vst [vmem:[%s9] sm:$0xff] %v4491
    // Predicated region
    $region46: #{policy_forward.1} parent=1 // pred_check
      _
    $region47: #{policy_forward.1} parent=1 // pred_check_branch
      %4498 = sbr.rel (0) target = $region49
    $region48: #{policy_forward.1} parent=1 // pred_region
      _
    $region49: #{policy_forward.1} parent=1 // pred_fallthru
      _
    // Predicated region
    $region50: #{policy_forward.1} parent=1 // pred_check
      _
    $region51: #{policy_forward.1} parent=1 // pred_check_branch
      %4500 = sbr.rel (0) target = $region53
    $region52: #{policy_forward.1} parent=1 // pred_region
      _
    $region53: #{policy_forward.1} parent=1 // pred_fallthru
      _
    %4501 = vsyncpa [#allocation4], 1
    %4502 = vsyncpa [#allocation6], 1

</llo_original>
